<compile_context>
chip_gen: v7x
topology: tpu7x:2x2x1
jax: 0.10.0
libtpu: 0.0.40
codegen_flags: <defaults>
</compile_context>

<pallas_src>
import jax
import jax.numpy as jnp
from jax import lax
from jax.experimental import pallas as pl
from jax.experimental.pallas import tpu as pltpu


# ----------------------------------------------------------------------------
# Fused Pallas kernel: 3-layer LSTM + fc heads, one invocation.
# ----------------------------------------------------------------------------
def _make_lstmime_kernel(T, B, H, n_layers, E, L):
    """Builds the fused kernel with all sizes baked in statically."""

    def kernel(x_ref, *rest):
        # inputs: 3 refs per LSTM layer (w_ih, w_hh, b), then w1, b1, w23, b23
        lstm_refs = rest[:3 * n_layers]
        w1_ref, fb1_ref, w23_ref, b23_ref = rest[3 * n_layers:3 * n_layers + 4]
        # outputs
        cls_ref, reg_ref = rest[3 * n_layers + 4:3 * n_layers + 6]
        # scratch: (T*B, H) layer-output sequence carrier (stays in VMEM)
        hseq_sc = rest[-1]

        h_last = None
        for l in range(n_layers):
            wih_ref = lstm_refs[3 * l + 0]
            whh_ref = lstm_refs[3 * l + 1]
            b_ref = lstm_refs[3 * l + 2]

            # ---- hoisted input projection for the whole sequence ----------
            # (read is a value snapshot, so later scratch writes are safe)
            layer_in = x_ref[...] if l == 0 else hseq_sc[...]     # (T*B, Din)
            gates_x = (
                jnp.dot(layer_in, wih_ref[...],
                        preferred_element_type=jnp.float32)
                + b_ref[...]
            )                                                      # (T*B, 4H)

            whh = whh_ref[...]                                     # (H, 4H)
            h = jnp.zeros((B, H), jnp.float32)
            c = jnp.zeros((B, H), jnp.float32)
            last_layer = (l == n_layers - 1)

            # ---- serial recurrence: only h @ W_hh on the critical path ----
            for t in range(T):
                g = gates_x[t * B:(t + 1) * B, :] + jnp.dot(
                    h, whh, preferred_element_type=jnp.float32)    # (B, 4H)
                # PyTorch gate order [i, f, g, o]
                i_g = jax.nn.sigmoid(g[:, 0 * H:1 * H])
                f_g = jax.nn.sigmoid(g[:, 1 * H:2 * H])
                g_g = jnp.tanh(g[:, 2 * H:3 * H])
                o_g = jax.nn.sigmoid(g[:, 3 * H:4 * H])
                c = f_g * c + i_g * g_g
                h = o_g * jnp.tanh(c)
                if not last_layer:
                    # hand-off to the next layer stays in VMEM scratch
                    hseq_sc[t * B:(t + 1) * B, :] = h
            h_last = h                                             # (B, H)

        # ---- fc heads on the last hidden state (fused fc2+fc3 matmul) -----
        z = jnp.dot(h_last, w1_ref[...],
                    preferred_element_type=jnp.float32) + fb1_ref[...]
        out = jnp.dot(z, w23_ref[...],
                      preferred_element_type=jnp.float32) + b23_ref[...]
        cls_ref[...] = out[:, :E]
        reg_ref[...] = out[:, E:E + L]

    return kernel


def lstmime_pallas(params, x_btd):
    """x_btd: (batch, seq, input_size).  Returns ((B, E, 1), (B, out_len))."""
    B, T, Din = x_btd.shape
    H = params["lstm"][0]["w_hh"].shape[0]
    E = params["w2"].shape[1]
    L = params["w3"].shape[1]
    n_layers = len(params["lstm"])

    # time-major, flattened: row index = t*B + b  (no reshapes inside kernel)
    x2d = jnp.transpose(x_btd, (1, 0, 2)).reshape(T * B, Din).astype(jnp.float32)

    # fuse fc2/fc3 into one weight / bias
    w23 = jnp.concatenate([params["w2"], params["w3"]], axis=1)   # (H, E+L)
    b23 = jnp.concatenate([params["b2"], params["b3"]], axis=1)   # (1, E+L)

    lstm_args = []
    for layer in params["lstm"]:
        lstm_args += [layer["w_ih"], layer["w_hh"], layer["b"]]

    kernel = _make_lstmime_kernel(T, B, H, n_layers, E, L)

    cls_out, reg_out = pl.pallas_call(
        kernel,
        out_shape=(
            jax.ShapeDtypeStruct((B, E), jnp.float32),
            jax.ShapeDtypeStruct((B, L), jnp.float32),
        ),
        scratch_shapes=[
            pltpu.VMEM((T * B, H), jnp.float32),   # layer-output sequence
        ],
    )(x2d, *lstm_args, params["w1"], params["b1"], w23, b23)

    return cls_out[..., None], reg_out


lstmime_forward = jax.jit(lstmime_pallas)


# ----------------------------------------------------------------------------
# Parameter construction (mirrors nn.LSTM / nn.Linear shapes, U(-k, k) init).
# Weights stored transposed: (in_dim, out_dim).
# ----------------------------------------------------------------------------
def init_params(key, input_size, num_experts, out_len, d_model, layers):
    params = {"lstm": []}
    k = 1.0 / jnp.sqrt(d_model)

    def unif(key, shape):
        return jax.random.uniform(key, shape, jnp.float32, -k, k)

    for l in range(layers):
        din = input_size if l == 0 else d_model
        key, k1, k2, k3, k4 = jax.random.split(key, 5)
        w_ih = unif(k1, (din, 4 * d_model))
        w_hh = unif(k2, (d_model, 4 * d_model))
        b_ih = unif(k3, (4 * d_model,))
        b_hh = unif(k4, (4 * d_model,))
        params["lstm"].append(
            dict(w_ih=w_ih, w_hh=w_hh, b=(b_ih + b_hh).reshape(1, 4 * d_model)))

    def linear(key, din, dout):
        kk = 1.0 / jnp.sqrt(din)
        key, k1, k2 = jax.random.split(key, 3)
        w = jax.random.uniform(k1, (din, dout), jnp.float32, -kk, kk)
        b = jax.random.uniform(k2, (1, dout), jnp.float32, -kk, kk)
        return key, w, b

    key, params["w1"], params["b1"] = linear(key, d_model, d_model)
    key, params["w2"], params["b2"] = linear(key, d_model, num_experts)
    key, params["w3"], params["b3"] = linear(key, d_model, out_len)
    return params


# ----------------------------------------------------------------------------
# Pure-JAX reference (lax.scan LSTM) for the correctness check.
# ----------------------------------------------------------------------------
def lstmime_reference(params, x_btd):
    x = jnp.transpose(x_btd, (1, 0, 2)).astype(jnp.float32)
    B = x.shape[1]
    for layer in params["lstm"]:
        H = layer["w_hh"].shape[0]

        def step(carry, x_t, layer=layer, H=H):
            h, c = carry
            gates = x_t @ layer["w_ih"] + h @ layer["w_hh"] + layer["b"]
            i = jax.nn.sigmoid(gates[:, 0 * H:1 * H])
            f = jax.nn.sigmoid(gates[:, 1 * H:2 * H])
            g = jnp.tanh(gates[:, 2 * H:3 * H])
            o = jax.nn.sigmoid(gates[:, 3 * H:4 * H])
            c = f * c + i * g
            h = o * jnp.tanh(c)
            return (h, c), h

        init = (jnp.zeros((B, H), jnp.float32), jnp.zeros((B, H), jnp.float32))
        _, x = lax.scan(step, init, x)
    h_last = x[-1]
    z = h_last @ params["w1"] + params["b1"]
    cls_out = z @ params["w2"] + params["b2"]
    reg_out = z @ params["w3"] + params["b3"]
    return cls_out[..., None], reg_out


if __name__ == "__main__":
    # Small shapes consistent with the module's forward.
    batch, seq, input_size = 2, 8, 4
    d_model, layers = 32, 3
    num_experts, out_len = 3, 6

    key = jax.random.PRNGKey(0)
    key, pkey, xkey = jax.random.split(key, 3)
    params = init_params(pkey, input_size, num_experts, out_len, d_model, layers)
    x = jax.random.normal(xkey, (batch, seq, input_size), jnp.float32)

    cls_out, reg_out = lstmime_forward(params, x)
    jax.block_until_ready((cls_out, reg_out))

    ref_cls, ref_reg = lstmime_reference(params, x)
    assert cls_out.shape == (batch, num_experts, 1)
    assert reg_out.shape == (batch, out_len)
    assert jnp.allclose(cls_out, ref_cls, atol=1e-4), "cls mismatch"
    assert jnp.allclose(reg_out, ref_reg, atol=1e-4), "reg mismatch"

    # TODO(synk): nn.Dropout(p=0.0) is the identity in forward and is omitted.
    print("KERNEL_OK")
</pallas_src>

<mosaic_0001>
module attributes {stable_mosaic.version = 11 : i64} {
  func.func @kernel(%arg0: memref<16x4xf32, #tpu.memory_space<vmem>>, %arg1: memref<4x128xf32, #tpu.memory_space<vmem>>, %arg2: memref<32x128xf32, #tpu.memory_space<vmem>>, %arg3: memref<1x128xf32, #tpu.memory_space<vmem>>, %arg4: memref<32x128xf32, #tpu.memory_space<vmem>>, %arg5: memref<32x128xf32, #tpu.memory_space<vmem>>, %arg6: memref<1x128xf32, #tpu.memory_space<vmem>>, %arg7: memref<32x128xf32, #tpu.memory_space<vmem>>, %arg8: memref<32x128xf32, #tpu.memory_space<vmem>>, %arg9: memref<1x128xf32, #tpu.memory_space<vmem>>, %arg10: memref<32x32xf32, #tpu.memory_space<vmem>>, %arg11: memref<1x32xf32, #tpu.memory_space<vmem>>, %arg12: memref<32x9xf32, #tpu.memory_space<vmem>>, %arg13: memref<1x9xf32, #tpu.memory_space<vmem>>, %arg14: memref<2x3xf32, #tpu.memory_space<vmem>>, %arg15: memref<2x6xf32, #tpu.memory_space<vmem>>, %arg16: memref<16x32xf32, #tpu.memory_space<vmem>>) attributes {dimension_semantics = [], scalar_prefetch = 0 : i64, scratch_operands = 1 : i64, tpu.core_type = #tpu.core_type<tc>} {
    %c0 = arith.constant 0 : index
    %c0_0 = arith.constant 0 : index
    %0 = vector.load %arg0[%c0, %c0_0] : memref<16x4xf32, #tpu.memory_space<vmem>>, vector<16x4xf32>
    %c0_1 = arith.constant 0 : index
    %c0_2 = arith.constant 0 : index
    %1 = vector.load %arg1[%c0_1, %c0_2] : memref<4x128xf32, #tpu.memory_space<vmem>>, vector<4x128xf32>
    %cst = arith.constant dense<0.000000e+00> : vector<16x128xf32>
    %2 = tpu.matmul %0, %1, %cst {dimension_numbers = #tpu.dot_dimension_numbers<[1], [0], [0], [1], [0, 0, 1, 1], [], []>} : vector<16x4xf32>, vector<4x128xf32>, vector<16x128xf32> -> vector<16x128xf32>
    %c0_3 = arith.constant 0 : index
    %c0_4 = arith.constant 0 : index
    %3 = vector.load %arg3[%c0_3, %c0_4] : memref<1x128xf32, #tpu.memory_space<vmem>>, vector<1x128xf32>
    %4 = vector.broadcast %3 : vector<1x128xf32> to vector<16x128xf32>
    %5 = arith.addf %2, %4 : vector<16x128xf32>
    %c0_5 = arith.constant 0 : index
    %c0_6 = arith.constant 0 : index
    %6 = vector.load %arg2[%c0_5, %c0_6] : memref<32x128xf32, #tpu.memory_space<vmem>>, vector<32x128xf32>
    %cst_7 = arith.constant 0.000000e+00 : f32
    %7 = vector.broadcast %cst_7 : f32 to vector<2x32xf32>
    %cst_8 = arith.constant 0.000000e+00 : f32
    %8 = vector.broadcast %cst_8 : f32 to vector<2x32xf32>
    %9 = vector.extract_strided_slice %5 {offsets = [0, 0], sizes = [2, 128], strides = [1, 1]} : vector<16x128xf32> to vector<2x128xf32>
    %cst_9 = arith.constant dense<0.000000e+00> : vector<2x128xf32>
    %10 = tpu.matmul %7, %6, %cst_9 {dimension_numbers = #tpu.dot_dimension_numbers<[1], [0], [0], [1], [0, 0, 1, 1], [], []>} : vector<2x32xf32>, vector<32x128xf32>, vector<2x128xf32> -> vector<2x128xf32>
    %11 = arith.addf %9, %10 : vector<2x128xf32>
    %12 = vector.extract_strided_slice %11 {offsets = [0, 0], sizes = [2, 32], strides = [1, 1]} : vector<2x128xf32> to vector<2x32xf32>
    %13 = arith.negf %12 : vector<2x32xf32>
    %14 = math.exp %13 : vector<2x32xf32>
    %cst_10 = arith.constant 1.000000e+00 : f32
    %15 = vector.broadcast %cst_10 : f32 to vector<2x32xf32>
    %16 = arith.addf %15, %14 : vector<2x32xf32>
    %17 = arith.divf %15, %16 : vector<2x32xf32>
    %18 = vector.extract_strided_slice %11 {offsets = [0, 32], sizes = [2, 32], strides = [1, 1]} : vector<2x128xf32> to vector<2x32xf32>
    %19 = arith.negf %18 : vector<2x32xf32>
    %20 = math.exp %19 : vector<2x32xf32>
    %cst_11 = arith.constant 1.000000e+00 : f32
    %21 = vector.broadcast %cst_11 : f32 to vector<2x32xf32>
    %22 = arith.addf %21, %20 : vector<2x32xf32>
    %23 = arith.divf %21, %22 : vector<2x32xf32>
    %24 = vector.extract_strided_slice %11 {offsets = [0, 64], sizes = [2, 32], strides = [1, 1]} : vector<2x128xf32> to vector<2x32xf32>
    %25 = math.tanh %24 : vector<2x32xf32>
    %26 = vector.extract_strided_slice %11 {offsets = [0, 96], sizes = [2, 32], strides = [1, 1]} : vector<2x128xf32> to vector<2x32xf32>
    %27 = arith.negf %26 : vector<2x32xf32>
    %28 = math.exp %27 : vector<2x32xf32>
    %cst_12 = arith.constant 1.000000e+00 : f32
    %29 = vector.broadcast %cst_12 : f32 to vector<2x32xf32>
    %30 = arith.addf %29, %28 : vector<2x32xf32>
    %31 = arith.divf %29, %30 : vector<2x32xf32>
    %32 = arith.mulf %23, %8 : vector<2x32xf32>
    %33 = arith.mulf %17, %25 : vector<2x32xf32>
    %34 = arith.addf %32, %33 : vector<2x32xf32>
    %35 = math.tanh %34 : vector<2x32xf32>
    %36 = arith.mulf %31, %35 : vector<2x32xf32>
    %c0_13 = arith.constant 0 : index
    %c0_14 = arith.constant 0 : index
    %37 = vector.load %arg16[%c0_13, %c0_14] : memref<16x32xf32, #tpu.memory_space<vmem>>, vector<2x32xf32>
    tpu.vector_store %arg16[%c0_13, %c0_14], %36 {strides = array<i32>} : memref<16x32xf32, #tpu.memory_space<vmem>>, vector<2x32xf32>,
    %38 = vector.extract_strided_slice %5 {offsets = [2, 0], sizes = [2, 128], strides = [1, 1]} : vector<16x128xf32> to vector<2x128xf32>
    %cst_15 = arith.constant dense<0.000000e+00> : vector<2x128xf32>
    %39 = tpu.matmul %36, %6, %cst_15 {dimension_numbers = #tpu.dot_dimension_numbers<[1], [0], [0], [1], [0, 0, 1, 1], [], []>} : vector<2x32xf32>, vector<32x128xf32>, vector<2x128xf32> -> vector<2x128xf32>
    %40 = arith.addf %38, %39 : vector<2x128xf32>
    %41 = vector.extract_strided_slice %40 {offsets = [0, 0], sizes = [2, 32], strides = [1, 1]} : vector<2x128xf32> to vector<2x32xf32>
    %42 = arith.negf %41 : vector<2x32xf32>
    %43 = math.exp %42 : vector<2x32xf32>
    %cst_16 = arith.constant 1.000000e+00 : f32
    %44 = vector.broadcast %cst_16 : f32 to vector<2x32xf32>
    %45 = arith.addf %44, %43 : vector<2x32xf32>
    %46 = arith.divf %44, %45 : vector<2x32xf32>
    %47 = vector.extract_strided_slice %40 {offsets = [0, 32], sizes = [2, 32], strides = [1, 1]} : vector<2x128xf32> to vector<2x32xf32>
    %48 = arith.negf %47 : vector<2x32xf32>
    %49 = math.exp %48 : vector<2x32xf32>
    %cst_17 = arith.constant 1.000000e+00 : f32
    %50 = vector.broadcast %cst_17 : f32 to vector<2x32xf32>
    %51 = arith.addf %50, %49 : vector<2x32xf32>
    %52 = arith.divf %50, %51 : vector<2x32xf32>
    %53 = vector.extract_strided_slice %40 {offsets = [0, 64], sizes = [2, 32], strides = [1, 1]} : vector<2x128xf32> to vector<2x32xf32>
    %54 = math.tanh %53 : vector<2x32xf32>
    %55 = vector.extract_strided_slice %40 {offsets = [0, 96], sizes = [2, 32], strides = [1, 1]} : vector<2x128xf32> to vector<2x32xf32>
    %56 = arith.negf %55 : vector<2x32xf32>
    %57 = math.exp %56 : vector<2x32xf32>
    %cst_18 = arith.constant 1.000000e+00 : f32
    %58 = vector.broadcast %cst_18 : f32 to vector<2x32xf32>
    %59 = arith.addf %58, %57 : vector<2x32xf32>
    %60 = arith.divf %58, %59 : vector<2x32xf32>
    %61 = arith.mulf %52, %34 : vector<2x32xf32>
    %62 = arith.mulf %46, %54 : vector<2x32xf32>
    %63 = arith.addf %61, %62 : vector<2x32xf32>
    %64 = math.tanh %63 : vector<2x32xf32>
    %65 = arith.mulf %60, %64 : vector<2x32xf32>
    %c2 = arith.constant 2 : index
    %c0_19 = arith.constant 0 : index
    %66 = vector.load %arg16[%c2, %c0_19] : memref<16x32xf32, #tpu.memory_space<vmem>>, vector<2x32xf32>
    tpu.vector_store %arg16[%c2, %c0_19], %65 {strides = array<i32>} : memref<16x32xf32, #tpu.memory_space<vmem>>, vector<2x32xf32>,
    %67 = vector.extract_strided_slice %5 {offsets = [4, 0], sizes = [2, 128], strides = [1, 1]} : vector<16x128xf32> to vector<2x128xf32>
    %cst_20 = arith.constant dense<0.000000e+00> : vector<2x128xf32>
    %68 = tpu.matmul %65, %6, %cst_20 {dimension_numbers = #tpu.dot_dimension_numbers<[1], [0], [0], [1], [0, 0, 1, 1], [], []>} : vector<2x32xf32>, vector<32x128xf32>, vector<2x128xf32> -> vector<2x128xf32>
    %69 = arith.addf %67, %68 : vector<2x128xf32>
    %70 = vector.extract_strided_slice %69 {offsets = [0, 0], sizes = [2, 32], strides = [1, 1]} : vector<2x128xf32> to vector<2x32xf32>
    %71 = arith.negf %70 : vector<2x32xf32>
    %72 = math.exp %71 : vector<2x32xf32>
    %cst_21 = arith.constant 1.000000e+00 : f32
    %73 = vector.broadcast %cst_21 : f32 to vector<2x32xf32>
    %74 = arith.addf %73, %72 : vector<2x32xf32>
    %75 = arith.divf %73, %74 : vector<2x32xf32>
    %76 = vector.extract_strided_slice %69 {offsets = [0, 32], sizes = [2, 32], strides = [1, 1]} : vector<2x128xf32> to vector<2x32xf32>
    %77 = arith.negf %76 : vector<2x32xf32>
    %78 = math.exp %77 : vector<2x32xf32>
    %cst_22 = arith.constant 1.000000e+00 : f32
    %79 = vector.broadcast %cst_22 : f32 to vector<2x32xf32>
    %80 = arith.addf %79, %78 : vector<2x32xf32>
    %81 = arith.divf %79, %80 : vector<2x32xf32>
    %82 = vector.extract_strided_slice %69 {offsets = [0, 64], sizes = [2, 32], strides = [1, 1]} : vector<2x128xf32> to vector<2x32xf32>
    %83 = math.tanh %82 : vector<2x32xf32>
    %84 = vector.extract_strided_slice %69 {offsets = [0, 96], sizes = [2, 32], strides = [1, 1]} : vector<2x128xf32> to vector<2x32xf32>
    %85 = arith.negf %84 : vector<2x32xf32>
    %86 = math.exp %85 : vector<2x32xf32>
    %cst_23 = arith.constant 1.000000e+00 : f32
    %87 = vector.broadcast %cst_23 : f32 to vector<2x32xf32>
    %88 = arith.addf %87, %86 : vector<2x32xf32>
    %89 = arith.divf %87, %88 : vector<2x32xf32>
    %90 = arith.mulf %81, %63 : vector<2x32xf32>
    %91 = arith.mulf %75, %83 : vector<2x32xf32>
    %92 = arith.addf %90, %91 : vector<2x32xf32>
    %93 = math.tanh %92 : vector<2x32xf32>
    %94 = arith.mulf %89, %93 : vector<2x32xf32>
    %c4 = arith.constant 4 : index
    %c0_24 = arith.constant 0 : index
    %95 = vector.load %arg16[%c4, %c0_24] : memref<16x32xf32, #tpu.memory_space<vmem>>, vector<2x32xf32>
    tpu.vector_store %arg16[%c4, %c0_24], %94 {strides = array<i32>} : memref<16x32xf32, #tpu.memory_space<vmem>>, vector<2x32xf32>,
    %96 = vector.extract_strided_slice %5 {offsets = [6, 0], sizes = [2, 128], strides = [1, 1]} : vector<16x128xf32> to vector<2x128xf32>
    %cst_25 = arith.constant dense<0.000000e+00> : vector<2x128xf32>
    %97 = tpu.matmul %94, %6, %cst_25 {dimension_numbers = #tpu.dot_dimension_numbers<[1], [0], [0], [1], [0, 0, 1, 1], [], []>} : vector<2x32xf32>, vector<32x128xf32>, vector<2x128xf32> -> vector<2x128xf32>
    %98 = arith.addf %96, %97 : vector<2x128xf32>
    %99 = vector.extract_strided_slice %98 {offsets = [0, 0], sizes = [2, 32], strides = [1, 1]} : vector<2x128xf32> to vector<2x32xf32>
    %100 = arith.negf %99 : vector<2x32xf32>
    %101 = math.exp %100 : vector<2x32xf32>
    %cst_26 = arith.constant 1.000000e+00 : f32
    %102 = vector.broadcast %cst_26 : f32 to vector<2x32xf32>
    %103 = arith.addf %102, %101 : vector<2x32xf32>
    %104 = arith.divf %102, %103 : vector<2x32xf32>
    %105 = vector.extract_strided_slice %98 {offsets = [0, 32], sizes = [2, 32], strides = [1, 1]} : vector<2x128xf32> to vector<2x32xf32>
    %106 = arith.negf %105 : vector<2x32xf32>
    %107 = math.exp %106 : vector<2x32xf32>
    %cst_27 = arith.constant 1.000000e+00 : f32
    %108 = vector.broadcast %cst_27 : f32 to vector<2x32xf32>
    %109 = arith.addf %108, %107 : vector<2x32xf32>
    %110 = arith.divf %108, %109 : vector<2x32xf32>
    %111 = vector.extract_strided_slice %98 {offsets = [0, 64], sizes = [2, 32], strides = [1, 1]} : vector<2x128xf32> to vector<2x32xf32>
    %112 = math.tanh %111 : vector<2x32xf32>
    %113 = vector.extract_strided_slice %98 {offsets = [0, 96], sizes = [2, 32], strides = [1, 1]} : vector<2x128xf32> to vector<2x32xf32>
    %114 = arith.negf %113 : vector<2x32xf32>
    %115 = math.exp %114 : vector<2x32xf32>
    %cst_28 = arith.constant 1.000000e+00 : f32
    %116 = vector.broadcast %cst_28 : f32 to vector<2x32xf32>
    %117 = arith.addf %116, %115 : vector<2x32xf32>
    %118 = arith.divf %116, %117 : vector<2x32xf32>
    %119 = arith.mulf %110, %92 : vector<2x32xf32>
    %120 = arith.mulf %104, %112 : vector<2x32xf32>
    %121 = arith.addf %119, %120 : vector<2x32xf32>
    %122 = math.tanh %121 : vector<2x32xf32>
    %123 = arith.mulf %118, %122 : vector<2x32xf32>
    %c6 = arith.constant 6 : index
    %c0_29 = arith.constant 0 : index
    %124 = vector.load %arg16[%c6, %c0_29] : memref<16x32xf32, #tpu.memory_space<vmem>>, vector<2x32xf32>
    tpu.vector_store %arg16[%c6, %c0_29], %123 {strides = array<i32>} : memref<16x32xf32, #tpu.memory_space<vmem>>, vector<2x32xf32>,
    %125 = vector.extract_strided_slice %5 {offsets = [8, 0], sizes = [2, 128], strides = [1, 1]} : vector<16x128xf32> to vector<2x128xf32>
    %cst_30 = arith.constant dense<0.000000e+00> : vector<2x128xf32>
    %126 = tpu.matmul %123, %6, %cst_30 {dimension_numbers = #tpu.dot_dimension_numbers<[1], [0], [0], [1], [0, 0, 1, 1], [], []>} : vector<2x32xf32>, vector<32x128xf32>, vector<2x128xf32> -> vector<2x128xf32>
    %127 = arith.addf %125, %126 : vector<2x128xf32>
    %128 = vector.extract_strided_slice %127 {offsets = [0, 0], sizes = [2, 32], strides = [1, 1]} : vector<2x128xf32> to vector<2x32xf32>
    %129 = arith.negf %128 : vector<2x32xf32>
    %130 = math.exp %129 : vector<2x32xf32>
    %cst_31 = arith.constant 1.000000e+00 : f32
    %131 = vector.broadcast %cst_31 : f32 to vector<2x32xf32>
    %132 = arith.addf %131, %130 : vector<2x32xf32>
    %133 = arith.divf %131, %132 : vector<2x32xf32>
    %134 = vector.extract_strided_slice %127 {offsets = [0, 32], sizes = [2, 32], strides = [1, 1]} : vector<2x128xf32> to vector<2x32xf32>
    %135 = arith.negf %134 : vector<2x32xf32>
    %136 = math.exp %135 : vector<2x32xf32>
    %cst_32 = arith.constant 1.000000e+00 : f32
    %137 = vector.broadcast %cst_32 : f32 to vector<2x32xf32>
    %138 = arith.addf %137, %136 : vector<2x32xf32>
    %139 = arith.divf %137, %138 : vector<2x32xf32>
    %140 = vector.extract_strided_slice %127 {offsets = [0, 64], sizes = [2, 32], strides = [1, 1]} : vector<2x128xf32> to vector<2x32xf32>
    %141 = math.tanh %140 : vector<2x32xf32>
    %142 = vector.extract_strided_slice %127 {offsets = [0, 96], sizes = [2, 32], strides = [1, 1]} : vector<2x128xf32> to vector<2x32xf32>
    %143 = arith.negf %142 : vector<2x32xf32>
    %144 = math.exp %143 : vector<2x32xf32>
    %cst_33 = arith.constant 1.000000e+00 : f32
    %145 = vector.broadcast %cst_33 : f32 to vector<2x32xf32>
    %146 = arith.addf %145, %144 : vector<2x32xf32>
    %147 = arith.divf %145, %146 : vector<2x32xf32>
    %148 = arith.mulf %139, %121 : vector<2x32xf32>
    %149 = arith.mulf %133, %141 : vector<2x32xf32>
    %150 = arith.addf %148, %149 : vector<2x32xf32>
    %151 = math.tanh %150 : vector<2x32xf32>
    %152 = arith.mulf %147, %151 : vector<2x32xf32>
    %c8 = arith.constant 8 : index
    %c0_34 = arith.constant 0 : index
    %153 = vector.load %arg16[%c8, %c0_34] : memref<16x32xf32, #tpu.memory_space<vmem>>, vector<2x32xf32>
    tpu.vector_store %arg16[%c8, %c0_34], %152 {strides = array<i32>} : memref<16x32xf32, #tpu.memory_space<vmem>>, vector<2x32xf32>,
    %154 = vector.extract_strided_slice %5 {offsets = [10, 0], sizes = [2, 128], strides = [1, 1]} : vector<16x128xf32> to vector<2x128xf32>
    %cst_35 = arith.constant dense<0.000000e+00> : vector<2x128xf32>
    %155 = tpu.matmul %152, %6, %cst_35 {dimension_numbers = #tpu.dot_dimension_numbers<[1], [0], [0], [1], [0, 0, 1, 1], [], []>} : vector<2x32xf32>, vector<32x128xf32>, vector<2x128xf32> -> vector<2x128xf32>
    %156 = arith.addf %154, %155 : vector<2x128xf32>
    %157 = vector.extract_strided_slice %156 {offsets = [0, 0], sizes = [2, 32], strides = [1, 1]} : vector<2x128xf32> to vector<2x32xf32>
    %158 = arith.negf %157 : vector<2x32xf32>
    %159 = math.exp %158 : vector<2x32xf32>
    %cst_36 = arith.constant 1.000000e+00 : f32
    %160 = vector.broadcast %cst_36 : f32 to vector<2x32xf32>
    %161 = arith.addf %160, %159 : vector<2x32xf32>
    %162 = arith.divf %160, %161 : vector<2x32xf32>
    %163 = vector.extract_strided_slice %156 {offsets = [0, 32], sizes = [2, 32], strides = [1, 1]} : vector<2x128xf32> to vector<2x32xf32>
    %164 = arith.negf %163 : vector<2x32xf32>
    %165 = math.exp %164 : vector<2x32xf32>
    %cst_37 = arith.constant 1.000000e+00 : f32
    %166 = vector.broadcast %cst_37 : f32 to vector<2x32xf32>
    %167 = arith.addf %166, %165 : vector<2x32xf32>
    %168 = arith.divf %166, %167 : vector<2x32xf32>
    %169 = vector.extract_strided_slice %156 {offsets = [0, 64], sizes = [2, 32], strides = [1, 1]} : vector<2x128xf32> to vector<2x32xf32>
    %170 = math.tanh %169 : vector<2x32xf32>
    %171 = vector.extract_strided_slice %156 {offsets = [0, 96], sizes = [2, 32], strides = [1, 1]} : vector<2x128xf32> to vector<2x32xf32>
    %172 = arith.negf %171 : vector<2x32xf32>
    %173 = math.exp %172 : vector<2x32xf32>
    %cst_38 = arith.constant 1.000000e+00 : f32
    %174 = vector.broadcast %cst_38 : f32 to vector<2x32xf32>
    %175 = arith.addf %174, %173 : vector<2x32xf32>
    %176 = arith.divf %174, %175 : vector<2x32xf32>
    %177 = arith.mulf %168, %150 : vector<2x32xf32>
    %178 = arith.mulf %162, %170 : vector<2x32xf32>
    %179 = arith.addf %177, %178 : vector<2x32xf32>
    %180 = math.tanh %179 : vector<2x32xf32>
    %181 = arith.mulf %176, %180 : vector<2x32xf32>
    %c10 = arith.constant 10 : index
    %c0_39 = arith.constant 0 : index
    %182 = vector.load %arg16[%c10, %c0_39] : memref<16x32xf32, #tpu.memory_space<vmem>>, vector<2x32xf32>
    tpu.vector_store %arg16[%c10, %c0_39], %181 {strides = array<i32>} : memref<16x32xf32, #tpu.memory_space<vmem>>, vector<2x32xf32>,
    %183 = vector.extract_strided_slice %5 {offsets = [12, 0], sizes = [2, 128], strides = [1, 1]} : vector<16x128xf32> to vector<2x128xf32>
    %cst_40 = arith.constant dense<0.000000e+00> : vector<2x128xf32>
    %184 = tpu.matmul %181, %6, %cst_40 {dimension_numbers = #tpu.dot_dimension_numbers<[1], [0], [0], [1], [0, 0, 1, 1], [], []>} : vector<2x32xf32>, vector<32x128xf32>, vector<2x128xf32> -> vector<2x128xf32>
    %185 = arith.addf %183, %184 : vector<2x128xf32>
    %186 = vector.extract_strided_slice %185 {offsets = [0, 0], sizes = [2, 32], strides = [1, 1]} : vector<2x128xf32> to vector<2x32xf32>
    %187 = arith.negf %186 : vector<2x32xf32>
    %188 = math.exp %187 : vector<2x32xf32>
    %cst_41 = arith.constant 1.000000e+00 : f32
    %189 = vector.broadcast %cst_41 : f32 to vector<2x32xf32>
    %190 = arith.addf %189, %188 : vector<2x32xf32>
    %191 = arith.divf %189, %190 : vector<2x32xf32>
    %192 = vector.extract_strided_slice %185 {offsets = [0, 32], sizes = [2, 32], strides = [1, 1]} : vector<2x128xf32> to vector<2x32xf32>
    %193 = arith.negf %192 : vector<2x32xf32>
    %194 = math.exp %193 : vector<2x32xf32>
    %cst_42 = arith.constant 1.000000e+00 : f32
    %195 = vector.broadcast %cst_42 : f32 to vector<2x32xf32>
    %196 = arith.addf %195, %194 : vector<2x32xf32>
    %197 = arith.divf %195, %196 : vector<2x32xf32>
    %198 = vector.extract_strided_slice %185 {offsets = [0, 64], sizes = [2, 32], strides = [1, 1]} : vector<2x128xf32> to vector<2x32xf32>
    %199 = math.tanh %198 : vector<2x32xf32>
    %200 = vector.extract_strided_slice %185 {offsets = [0, 96], sizes = [2, 32], strides = [1, 1]} : vector<2x128xf32> to vector<2x32xf32>
    %201 = arith.negf %200 : vector<2x32xf32>
    %202 = math.exp %201 : vector<2x32xf32>
    %cst_43 = arith.constant 1.000000e+00 : f32
    %203 = vector.broadcast %cst_43 : f32 to vector<2x32xf32>
    %204 = arith.addf %203, %202 : vector<2x32xf32>
    %205 = arith.divf %203, %204 : vector<2x32xf32>
    %206 = arith.mulf %197, %179 : vector<2x32xf32>
    %207 = arith.mulf %191, %199 : vector<2x32xf32>
    %208 = arith.addf %206, %207 : vector<2x32xf32>
    %209 = math.tanh %208 : vector<2x32xf32>
    %210 = arith.mulf %205, %209 : vector<2x32xf32>
    %c12 = arith.constant 12 : index
    %c0_44 = arith.constant 0 : index
    %211 = vector.load %arg16[%c12, %c0_44] : memref<16x32xf32, #tpu.memory_space<vmem>>, vector<2x32xf32>
    tpu.vector_store %arg16[%c12, %c0_44], %210 {strides = array<i32>} : memref<16x32xf32, #tpu.memory_space<vmem>>, vector<2x32xf32>,
    %212 = vector.extract_strided_slice %5 {offsets = [14, 0], sizes = [2, 128], strides = [1, 1]} : vector<16x128xf32> to vector<2x128xf32>
    %cst_45 = arith.constant dense<0.000000e+00> : vector<2x128xf32>
    %213 = tpu.matmul %210, %6, %cst_45 {dimension_numbers = #tpu.dot_dimension_numbers<[1], [0], [0], [1], [0, 0, 1, 1], [], []>} : vector<2x32xf32>, vector<32x128xf32>, vector<2x128xf32> -> vector<2x128xf32>
    %214 = arith.addf %212, %213 : vector<2x128xf32>
    %215 = vector.extract_strided_slice %214 {offsets = [0, 0], sizes = [2, 32], strides = [1, 1]} : vector<2x128xf32> to vector<2x32xf32>
    %216 = arith.negf %215 : vector<2x32xf32>
    %217 = math.exp %216 : vector<2x32xf32>
    %cst_46 = arith.constant 1.000000e+00 : f32
    %218 = vector.broadcast %cst_46 : f32 to vector<2x32xf32>
    %219 = arith.addf %218, %217 : vector<2x32xf32>
    %220 = arith.divf %218, %219 : vector<2x32xf32>
    %221 = vector.extract_strided_slice %214 {offsets = [0, 32], sizes = [2, 32], strides = [1, 1]} : vector<2x128xf32> to vector<2x32xf32>
    %222 = arith.negf %221 : vector<2x32xf32>
    %223 = math.exp %222 : vector<2x32xf32>
    %cst_47 = arith.constant 1.000000e+00 : f32
    %224 = vector.broadcast %cst_47 : f32 to vector<2x32xf32>
    %225 = arith.addf %224, %223 : vector<2x32xf32>
    %226 = arith.divf %224, %225 : vector<2x32xf32>
    %227 = vector.extract_strided_slice %214 {offsets = [0, 64], sizes = [2, 32], strides = [1, 1]} : vector<2x128xf32> to vector<2x32xf32>
    %228 = math.tanh %227 : vector<2x32xf32>
    %229 = vector.extract_strided_slice %214 {offsets = [0, 96], sizes = [2, 32], strides = [1, 1]} : vector<2x128xf32> to vector<2x32xf32>
    %230 = arith.negf %229 : vector<2x32xf32>
    %231 = math.exp %230 : vector<2x32xf32>
    %cst_48 = arith.constant 1.000000e+00 : f32
    %232 = vector.broadcast %cst_48 : f32 to vector<2x32xf32>
    %233 = arith.addf %232, %231 : vector<2x32xf32>
    %234 = arith.divf %232, %233 : vector<2x32xf32>
    %235 = arith.mulf %226, %208 : vector<2x32xf32>
    %236 = arith.mulf %220, %228 : vector<2x32xf32>
    %237 = arith.addf %235, %236 : vector<2x32xf32>
    %238 = math.tanh %237 : vector<2x32xf32>
    %239 = arith.mulf %234, %238 : vector<2x32xf32>
    %c14 = arith.constant 14 : index
    %c0_49 = arith.constant 0 : index
    %240 = vector.load %arg16[%c14, %c0_49] : memref<16x32xf32, #tpu.memory_space<vmem>>, vector<2x32xf32>
    tpu.vector_store %arg16[%c14, %c0_49], %239 {strides = array<i32>} : memref<16x32xf32, #tpu.memory_space<vmem>>, vector<2x32xf32>,
    %c0_50 = arith.constant 0 : index
    %c0_51 = arith.constant 0 : index
    %241 = vector.load %arg16[%c0_50, %c0_51] : memref<16x32xf32, #tpu.memory_space<vmem>>, vector<16x32xf32>
    %c0_52 = arith.constant 0 : index
    %c0_53 = arith.constant 0 : index
    %242 = vector.load %arg4[%c0_52, %c0_53] : memref<32x128xf32, #tpu.memory_space<vmem>>, vector<32x128xf32>
    %cst_54 = arith.constant dense<0.000000e+00> : vector<16x128xf32>
    %243 = tpu.matmul %241, %242, %cst_54 {dimension_numbers = #tpu.dot_dimension_numbers<[1], [0], [0], [1], [0, 0, 1, 1], [], []>} : vector<16x32xf32>, vector<32x128xf32>, vector<16x128xf32> -> vector<16x128xf32>
    %c0_55 = arith.constant 0 : index
    %c0_56 = arith.constant 0 : index
    %244 = vector.load %arg6[%c0_55, %c0_56] : memref<1x128xf32, #tpu.memory_space<vmem>>, vector<1x128xf32>
    %245 = vector.broadcast %244 : vector<1x128xf32> to vector<16x128xf32>
    %246 = arith.addf %243, %245 : vector<16x128xf32>
    %c0_57 = arith.constant 0 : index
    %c0_58 = arith.constant 0 : index
    %247 = vector.load %arg5[%c0_57, %c0_58] : memref<32x128xf32, #tpu.memory_space<vmem>>, vector<32x128xf32>
    %cst_59 = arith.constant 0.000000e+00 : f32
    %248 = vector.broadcast %cst_59 : f32 to vector<2x32xf32>
    %cst_60 = arith.constant 0.000000e+00 : f32
    %249 = vector.broadcast %cst_60 : f32 to vector<2x32xf32>
    %250 = vector.extract_strided_slice %246 {offsets = [0, 0], sizes = [2, 128], strides = [1, 1]} : vector<16x128xf32> to vector<2x128xf32>
    %cst_61 = arith.constant dense<0.000000e+00> : vector<2x128xf32>
    %251 = tpu.matmul %248, %247, %cst_61 {dimension_numbers = #tpu.dot_dimension_numbers<[1], [0], [0], [1], [0, 0, 1, 1], [], []>} : vector<2x32xf32>, vector<32x128xf32>, vector<2x128xf32> -> vector<2x128xf32>
    %252 = arith.addf %250, %251 : vector<2x128xf32>
    %253 = vector.extract_strided_slice %252 {offsets = [0, 0], sizes = [2, 32], strides = [1, 1]} : vector<2x128xf32> to vector<2x32xf32>
    %254 = arith.negf %253 : vector<2x32xf32>
    %255 = math.exp %254 : vector<2x32xf32>
    %cst_62 = arith.constant 1.000000e+00 : f32
    %256 = vector.broadcast %cst_62 : f32 to vector<2x32xf32>
    %257 = arith.addf %256, %255 : vector<2x32xf32>
    %258 = arith.divf %256, %257 : vector<2x32xf32>
    %259 = vector.extract_strided_slice %252 {offsets = [0, 32], sizes = [2, 32], strides = [1, 1]} : vector<2x128xf32> to vector<2x32xf32>
    %260 = arith.negf %259 : vector<2x32xf32>
    %261 = math.exp %260 : vector<2x32xf32>
    %cst_63 = arith.constant 1.000000e+00 : f32
    %262 = vector.broadcast %cst_63 : f32 to vector<2x32xf32>
    %263 = arith.addf %262, %261 : vector<2x32xf32>
    %264 = arith.divf %262, %263 : vector<2x32xf32>
    %265 = vector.extract_strided_slice %252 {offsets = [0, 64], sizes = [2, 32], strides = [1, 1]} : vector<2x128xf32> to vector<2x32xf32>
    %266 = math.tanh %265 : vector<2x32xf32>
    %267 = vector.extract_strided_slice %252 {offsets = [0, 96], sizes = [2, 32], strides = [1, 1]} : vector<2x128xf32> to vector<2x32xf32>
    %268 = arith.negf %267 : vector<2x32xf32>
    %269 = math.exp %268 : vector<2x32xf32>
    %cst_64 = arith.constant 1.000000e+00 : f32
    %270 = vector.broadcast %cst_64 : f32 to vector<2x32xf32>
    %271 = arith.addf %270, %269 : vector<2x32xf32>
    %272 = arith.divf %270, %271 : vector<2x32xf32>
    %273 = arith.mulf %264, %249 : vector<2x32xf32>
    %274 = arith.mulf %258, %266 : vector<2x32xf32>
    %275 = arith.addf %273, %274 : vector<2x32xf32>
    %276 = math.tanh %275 : vector<2x32xf32>
    %277 = arith.mulf %272, %276 : vector<2x32xf32>
    %c0_65 = arith.constant 0 : index
    %c0_66 = arith.constant 0 : index
    %278 = vector.load %arg16[%c0_65, %c0_66] : memref<16x32xf32, #tpu.memory_space<vmem>>, vector<2x32xf32>
    tpu.vector_store %arg16[%c0_65, %c0_66], %277 {strides = array<i32>} : memref<16x32xf32, #tpu.memory_space<vmem>>, vector<2x32xf32>,
    %279 = vector.extract_strided_slice %246 {offsets = [2, 0], sizes = [2, 128], strides = [1, 1]} : vector<16x128xf32> to vector<2x128xf32>
    %cst_67 = arith.constant dense<0.000000e+00> : vector<2x128xf32>
    %280 = tpu.matmul %277, %247, %cst_67 {dimension_numbers = #tpu.dot_dimension_numbers<[1], [0], [0], [1], [0, 0, 1, 1], [], []>} : vector<2x32xf32>, vector<32x128xf32>, vector<2x128xf32> -> vector<2x128xf32>
    %281 = arith.addf %279, %280 : vector<2x128xf32>
    %282 = vector.extract_strided_slice %281 {offsets = [0, 0], sizes = [2, 32], strides = [1, 1]} : vector<2x128xf32> to vector<2x32xf32>
    %283 = arith.negf %282 : vector<2x32xf32>
    %284 = math.exp %283 : vector<2x32xf32>
    %cst_68 = arith.constant 1.000000e+00 : f32
    %285 = vector.broadcast %cst_68 : f32 to vector<2x32xf32>
    %286 = arith.addf %285, %284 : vector<2x32xf32>
    %287 = arith.divf %285, %286 : vector<2x32xf32>
    %288 = vector.extract_strided_slice %281 {offsets = [0, 32], sizes = [2, 32], strides = [1, 1]} : vector<2x128xf32> to vector<2x32xf32>
    %289 = arith.negf %288 : vector<2x32xf32>
    %290 = math.exp %289 : vector<2x32xf32>
    %cst_69 = arith.constant 1.000000e+00 : f32
    %291 = vector.broadcast %cst_69 : f32 to vector<2x32xf32>
    %292 = arith.addf %291, %290 : vector<2x32xf32>
    %293 = arith.divf %291, %292 : vector<2x32xf32>
    %294 = vector.extract_strided_slice %281 {offsets = [0, 64], sizes = [2, 32], strides = [1, 1]} : vector<2x128xf32> to vector<2x32xf32>
    %295 = math.tanh %294 : vector<2x32xf32>
    %296 = vector.extract_strided_slice %281 {offsets = [0, 96], sizes = [2, 32], strides = [1, 1]} : vector<2x128xf32> to vector<2x32xf32>
    %297 = arith.negf %296 : vector<2x32xf32>
    %298 = math.exp %297 : vector<2x32xf32>
    %cst_70 = arith.constant 1.000000e+00 : f32
    %299 = vector.broadcast %cst_70 : f32 to vector<2x32xf32>
    %300 = arith.addf %299, %298 : vector<2x32xf32>
    %301 = arith.divf %299, %300 : vector<2x32xf32>
    %302 = arith.mulf %293, %275 : vector<2x32xf32>
    %303 = arith.mulf %287, %295 : vector<2x32xf32>
    %304 = arith.addf %302, %303 : vector<2x32xf32>
    %305 = math.tanh %304 : vector<2x32xf32>
    %306 = arith.mulf %301, %305 : vector<2x32xf32>
    %c2_71 = arith.constant 2 : index
    %c0_72 = arith.constant 0 : index
    %307 = vector.load %arg16[%c2_71, %c0_72] : memref<16x32xf32, #tpu.memory_space<vmem>>, vector<2x32xf32>
    tpu.vector_store %arg16[%c2_71, %c0_72], %306 {strides = array<i32>} : memref<16x32xf32, #tpu.memory_space<vmem>>, vector<2x32xf32>,
    %308 = vector.extract_strided_slice %246 {offsets = [4, 0], sizes = [2, 128], strides = [1, 1]} : vector<16x128xf32> to vector<2x128xf32>
    %cst_73 = arith.constant dense<0.000000e+00> : vector<2x128xf32>
    %309 = tpu.matmul %306, %247, %cst_73 {dimension_numbers = #tpu.dot_dimension_numbers<[1], [0], [0], [1], [0, 0, 1, 1], [], []>} : vector<2x32xf32>, vector<32x128xf32>, vector<2x128xf32> -> vector<2x128xf32>
    %310 = arith.addf %308, %309 : vector<2x128xf32>
    %311 = vector.extract_strided_slice %310 {offsets = [0, 0], sizes = [2, 32], strides = [1, 1]} : vector<2x128xf32> to vector<2x32xf32>
    %312 = arith.negf %311 : vector<2x32xf32>
    %313 = math.exp %312 : vector<2x32xf32>
    %cst_74 = arith.constant 1.000000e+00 : f32
    %314 = vector.broadcast %cst_74 : f32 to vector<2x32xf32>
    %315 = arith.addf %314, %313 : vector<2x32xf32>
    %316 = arith.divf %314, %315 : vector<2x32xf32>
    %317 = vector.extract_strided_slice %310 {offsets = [0, 32], sizes = [2, 32], strides = [1, 1]} : vector<2x128xf32> to vector<2x32xf32>
    %318 = arith.negf %317 : vector<2x32xf32>
    %319 = math.exp %318 : vector<2x32xf32>
    %cst_75 = arith.constant 1.000000e+00 : f32
    %320 = vector.broadcast %cst_75 : f32 to vector<2x32xf32>
    %321 = arith.addf %320, %319 : vector<2x32xf32>
    %322 = arith.divf %320, %321 : vector<2x32xf32>
    %323 = vector.extract_strided_slice %310 {offsets = [0, 64], sizes = [2, 32], strides = [1, 1]} : vector<2x128xf32> to vector<2x32xf32>
    %324 = math.tanh %323 : vector<2x32xf32>
    %325 = vector.extract_strided_slice %310 {offsets = [0, 96], sizes = [2, 32], strides = [1, 1]} : vector<2x128xf32> to vector<2x32xf32>
    %326 = arith.negf %325 : vector<2x32xf32>
    %327 = math.exp %326 : vector<2x32xf32>
    %cst_76 = arith.constant 1.000000e+00 : f32
    %328 = vector.broadcast %cst_76 : f32 to vector<2x32xf32>
    %329 = arith.addf %328, %327 : vector<2x32xf32>
    %330 = arith.divf %328, %329 : vector<2x32xf32>
    %331 = arith.mulf %322, %304 : vector<2x32xf32>
    %332 = arith.mulf %316, %324 : vector<2x32xf32>
    %333 = arith.addf %331, %332 : vector<2x32xf32>
    %334 = math.tanh %333 : vector<2x32xf32>
    %335 = arith.mulf %330, %334 : vector<2x32xf32>
    %c4_77 = arith.constant 4 : index
    %c0_78 = arith.constant 0 : index
    %336 = vector.load %arg16[%c4_77, %c0_78] : memref<16x32xf32, #tpu.memory_space<vmem>>, vector<2x32xf32>
    tpu.vector_store %arg16[%c4_77, %c0_78], %335 {strides = array<i32>} : memref<16x32xf32, #tpu.memory_space<vmem>>, vector<2x32xf32>,
    %337 = vector.extract_strided_slice %246 {offsets = [6, 0], sizes = [2, 128], strides = [1, 1]} : vector<16x128xf32> to vector<2x128xf32>
    %cst_79 = arith.constant dense<0.000000e+00> : vector<2x128xf32>
    %338 = tpu.matmul %335, %247, %cst_79 {dimension_numbers = #tpu.dot_dimension_numbers<[1], [0], [0], [1], [0, 0, 1, 1], [], []>} : vector<2x32xf32>, vector<32x128xf32>, vector<2x128xf32> -> vector<2x128xf32>
    %339 = arith.addf %337, %338 : vector<2x128xf32>
    %340 = vector.extract_strided_slice %339 {offsets = [0, 0], sizes = [2, 32], strides = [1, 1]} : vector<2x128xf32> to vector<2x32xf32>
    %341 = arith.negf %340 : vector<2x32xf32>
    %342 = math.exp %341 : vector<2x32xf32>
    %cst_80 = arith.constant 1.000000e+00 : f32
    %343 = vector.broadcast %cst_80 : f32 to vector<2x32xf32>
    %344 = arith.addf %343, %342 : vector<2x32xf32>
    %345 = arith.divf %343, %344 : vector<2x32xf32>
    %346 = vector.extract_strided_slice %339 {offsets = [0, 32], sizes = [2, 32], strides = [1, 1]} : vector<2x128xf32> to vector<2x32xf32>
    %347 = arith.negf %346 : vector<2x32xf32>
    %348 = math.exp %347 : vector<2x32xf32>
    %cst_81 = arith.constant 1.000000e+00 : f32
    %349 = vector.broadcast %cst_81 : f32 to vector<2x32xf32>
    %350 = arith.addf %349, %348 : vector<2x32xf32>
    %351 = arith.divf %349, %350 : vector<2x32xf32>
    %352 = vector.extract_strided_slice %339 {offsets = [0, 64], sizes = [2, 32], strides = [1, 1]} : vector<2x128xf32> to vector<2x32xf32>
    %353 = math.tanh %352 : vector<2x32xf32>
    %354 = vector.extract_strided_slice %339 {offsets = [0, 96], sizes = [2, 32], strides = [1, 1]} : vector<2x128xf32> to vector<2x32xf32>
    %355 = arith.negf %354 : vector<2x32xf32>
    %356 = math.exp %355 : vector<2x32xf32>
    %cst_82 = arith.constant 1.000000e+00 : f32
    %357 = vector.broadcast %cst_82 : f32 to vector<2x32xf32>
    %358 = arith.addf %357, %356 : vector<2x32xf32>
    %359 = arith.divf %357, %358 : vector<2x32xf32>
    %360 = arith.mulf %351, %333 : vector<2x32xf32>
    %361 = arith.mulf %345, %353 : vector<2x32xf32>
    %362 = arith.addf %360, %361 : vector<2x32xf32>
    %363 = math.tanh %362 : vector<2x32xf32>
    %364 = arith.mulf %359, %363 : vector<2x32xf32>
    %c6_83 = arith.constant 6 : index
    %c0_84 = arith.constant 0 : index
    %365 = vector.load %arg16[%c6_83, %c0_84] : memref<16x32xf32, #tpu.memory_space<vmem>>, vector<2x32xf32>
    tpu.vector_store %arg16[%c6_83, %c0_84], %364 {strides = array<i32>} : memref<16x32xf32, #tpu.memory_space<vmem>>, vector<2x32xf32>,
    %366 = vector.extract_strided_slice %246 {offsets = [8, 0], sizes = [2, 128], strides = [1, 1]} : vector<16x128xf32> to vector<2x128xf32>
    %cst_85 = arith.constant dense<0.000000e+00> : vector<2x128xf32>
    %367 = tpu.matmul %364, %247, %cst_85 {dimension_numbers = #tpu.dot_dimension_numbers<[1], [0], [0], [1], [0, 0, 1, 1], [], []>} : vector<2x32xf32>, vector<32x128xf32>, vector<2x128xf32> -> vector<2x128xf32>
    %368 = arith.addf %366, %367 : vector<2x128xf32>
    %369 = vector.extract_strided_slice %368 {offsets = [0, 0], sizes = [2, 32], strides = [1, 1]} : vector<2x128xf32> to vector<2x32xf32>
    %370 = arith.negf %369 : vector<2x32xf32>
    %371 = math.exp %370 : vector<2x32xf32>
    %cst_86 = arith.constant 1.000000e+00 : f32
    %372 = vector.broadcast %cst_86 : f32 to vector<2x32xf32>
    %373 = arith.addf %372, %371 : vector<2x32xf32>
    %374 = arith.divf %372, %373 : vector<2x32xf32>
    %375 = vector.extract_strided_slice %368 {offsets = [0, 32], sizes = [2, 32], strides = [1, 1]} : vector<2x128xf32> to vector<2x32xf32>
    %376 = arith.negf %375 : vector<2x32xf32>
    %377 = math.exp %376 : vector<2x32xf32>
    %cst_87 = arith.constant 1.000000e+00 : f32
    %378 = vector.broadcast %cst_87 : f32 to vector<2x32xf32>
    %379 = arith.addf %378, %377 : vector<2x32xf32>
    %380 = arith.divf %378, %379 : vector<2x32xf32>
    %381 = vector.extract_strided_slice %368 {offsets = [0, 64], sizes = [2, 32], strides = [1, 1]} : vector<2x128xf32> to vector<2x32xf32>
    %382 = math.tanh %381 : vector<2x32xf32>
    %383 = vector.extract_strided_slice %368 {offsets = [0, 96], sizes = [2, 32], strides = [1, 1]} : vector<2x128xf32> to vector<2x32xf32>
    %384 = arith.negf %383 : vector<2x32xf32>
    %385 = math.exp %384 : vector<2x32xf32>
    %cst_88 = arith.constant 1.000000e+00 : f32
    %386 = vector.broadcast %cst_88 : f32 to vector<2x32xf32>
    %387 = arith.addf %386, %385 : vector<2x32xf32>
    %388 = arith.divf %386, %387 : vector<2x32xf32>
    %389 = arith.mulf %380, %362 : vector<2x32xf32>
    %390 = arith.mulf %374, %382 : vector<2x32xf32>
    %391 = arith.addf %389, %390 : vector<2x32xf32>
    %392 = math.tanh %391 : vector<2x32xf32>
    %393 = arith.mulf %388, %392 : vector<2x32xf32>
    %c8_89 = arith.constant 8 : index
    %c0_90 = arith.constant 0 : index
    %394 = vector.load %arg16[%c8_89, %c0_90] : memref<16x32xf32, #tpu.memory_space<vmem>>, vector<2x32xf32>
    tpu.vector_store %arg16[%c8_89, %c0_90], %393 {strides = array<i32>} : memref<16x32xf32, #tpu.memory_space<vmem>>, vector<2x32xf32>,
    %395 = vector.extract_strided_slice %246 {offsets = [10, 0], sizes = [2, 128], strides = [1, 1]} : vector<16x128xf32> to vector<2x128xf32>
    %cst_91 = arith.constant dense<0.000000e+00> : vector<2x128xf32>
    %396 = tpu.matmul %393, %247, %cst_91 {dimension_numbers = #tpu.dot_dimension_numbers<[1], [0], [0], [1], [0, 0, 1, 1], [], []>} : vector<2x32xf32>, vector<32x128xf32>, vector<2x128xf32> -> vector<2x128xf32>
    %397 = arith.addf %395, %396 : vector<2x128xf32>
    %398 = vector.extract_strided_slice %397 {offsets = [0, 0], sizes = [2, 32], strides = [1, 1]} : vector<2x128xf32> to vector<2x32xf32>
    %399 = arith.negf %398 : vector<2x32xf32>
    %400 = math.exp %399 : vector<2x32xf32>
    %cst_92 = arith.constant 1.000000e+00 : f32
    %401 = vector.broadcast %cst_92 : f32 to vector<2x32xf32>
    %402 = arith.addf %401, %400 : vector<2x32xf32>
    %403 = arith.divf %401, %402 : vector<2x32xf32>
    %404 = vector.extract_strided_slice %397 {offsets = [0, 32], sizes = [2, 32], strides = [1, 1]} : vector<2x128xf32> to vector<2x32xf32>
    %405 = arith.negf %404 : vector<2x32xf32>
    %406 = math.exp %405 : vector<2x32xf32>
    %cst_93 = arith.constant 1.000000e+00 : f32
    %407 = vector.broadcast %cst_93 : f32 to vector<2x32xf32>
    %408 = arith.addf %407, %406 : vector<2x32xf32>
    %409 = arith.divf %407, %408 : vector<2x32xf32>
    %410 = vector.extract_strided_slice %397 {offsets = [0, 64], sizes = [2, 32], strides = [1, 1]} : vector<2x128xf32> to vector<2x32xf32>
    %411 = math.tanh %410 : vector<2x32xf32>
    %412 = vector.extract_strided_slice %397 {offsets = [0, 96], sizes = [2, 32], strides = [1, 1]} : vector<2x128xf32> to vector<2x32xf32>
    %413 = arith.negf %412 : vector<2x32xf32>
    %414 = math.exp %413 : vector<2x32xf32>
    %cst_94 = arith.constant 1.000000e+00 : f32
    %415 = vector.broadcast %cst_94 : f32 to vector<2x32xf32>
    %416 = arith.addf %415, %414 : vector<2x32xf32>
    %417 = arith.divf %415, %416 : vector<2x32xf32>
    %418 = arith.mulf %409, %391 : vector<2x32xf32>
    %419 = arith.mulf %403, %411 : vector<2x32xf32>
    %420 = arith.addf %418, %419 : vector<2x32xf32>
    %421 = math.tanh %420 : vector<2x32xf32>
    %422 = arith.mulf %417, %421 : vector<2x32xf32>
    %c10_95 = arith.constant 10 : index
    %c0_96 = arith.constant 0 : index
    %423 = vector.load %arg16[%c10_95, %c0_96] : memref<16x32xf32, #tpu.memory_space<vmem>>, vector<2x32xf32>
    tpu.vector_store %arg16[%c10_95, %c0_96], %422 {strides = array<i32>} : memref<16x32xf32, #tpu.memory_space<vmem>>, vector<2x32xf32>,
    %424 = vector.extract_strided_slice %246 {offsets = [12, 0], sizes = [2, 128], strides = [1, 1]} : vector<16x128xf32> to vector<2x128xf32>
    %cst_97 = arith.constant dense<0.000000e+00> : vector<2x128xf32>
    %425 = tpu.matmul %422, %247, %cst_97 {dimension_numbers = #tpu.dot_dimension_numbers<[1], [0], [0], [1], [0, 0, 1, 1], [], []>} : vector<2x32xf32>, vector<32x128xf32>, vector<2x128xf32> -> vector<2x128xf32>
    %426 = arith.addf %424, %425 : vector<2x128xf32>
    %427 = vector.extract_strided_slice %426 {offsets = [0, 0], sizes = [2, 32], strides = [1, 1]} : vector<2x128xf32> to vector<2x32xf32>
    %428 = arith.negf %427 : vector<2x32xf32>
    %429 = math.exp %428 : vector<2x32xf32>
    %cst_98 = arith.constant 1.000000e+00 : f32
    %430 = vector.broadcast %cst_98 : f32 to vector<2x32xf32>
    %431 = arith.addf %430, %429 : vector<2x32xf32>
    %432 = arith.divf %430, %431 : vector<2x32xf32>
    %433 = vector.extract_strided_slice %426 {offsets = [0, 32], sizes = [2, 32], strides = [1, 1]} : vector<2x128xf32> to vector<2x32xf32>
    %434 = arith.negf %433 : vector<2x32xf32>
    %435 = math.exp %434 : vector<2x32xf32>
    %cst_99 = arith.constant 1.000000e+00 : f32
    %436 = vector.broadcast %cst_99 : f32 to vector<2x32xf32>
    %437 = arith.addf %436, %435 : vector<2x32xf32>
    %438 = arith.divf %436, %437 : vector<2x32xf32>
    %439 = vector.extract_strided_slice %426 {offsets = [0, 64], sizes = [2, 32], strides = [1, 1]} : vector<2x128xf32> to vector<2x32xf32>
    %440 = math.tanh %439 : vector<2x32xf32>
    %441 = vector.extract_strided_slice %426 {offsets = [0, 96], sizes = [2, 32], strides = [1, 1]} : vector<2x128xf32> to vector<2x32xf32>
    %442 = arith.negf %441 : vector<2x32xf32>
    %443 = math.exp %442 : vector<2x32xf32>
    %cst_100 = arith.constant 1.000000e+00 : f32
    %444 = vector.broadcast %cst_100 : f32 to vector<2x32xf32>
    %445 = arith.addf %444, %443 : vector<2x32xf32>
    %446 = arith.divf %444, %445 : vector<2x32xf32>
    %447 = arith.mulf %438, %420 : vector<2x32xf32>
    %448 = arith.mulf %432, %440 : vector<2x32xf32>
    %449 = arith.addf %447, %448 : vector<2x32xf32>
    %450 = math.tanh %449 : vector<2x32xf32>
    %451 = arith.mulf %446, %450 : vector<2x32xf32>
    %c12_101 = arith.constant 12 : index
    %c0_102 = arith.constant 0 : index
    %452 = vector.load %arg16[%c12_101, %c0_102] : memref<16x32xf32, #tpu.memory_space<vmem>>, vector<2x32xf32>
    tpu.vector_store %arg16[%c12_101, %c0_102], %451 {strides = array<i32>} : memref<16x32xf32, #tpu.memory_space<vmem>>, vector<2x32xf32>,
    %453 = vector.extract_strided_slice %246 {offsets = [14, 0], sizes = [2, 128], strides = [1, 1]} : vector<16x128xf32> to vector<2x128xf32>
    %cst_103 = arith.constant dense<0.000000e+00> : vector<2x128xf32>
    %454 = tpu.matmul %451, %247, %cst_103 {dimension_numbers = #tpu.dot_dimension_numbers<[1], [0], [0], [1], [0, 0, 1, 1], [], []>} : vector<2x32xf32>, vector<32x128xf32>, vector<2x128xf32> -> vector<2x128xf32>
    %455 = arith.addf %453, %454 : vector<2x128xf32>
    %456 = vector.extract_strided_slice %455 {offsets = [0, 0], sizes = [2, 32], strides = [1, 1]} : vector<2x128xf32> to vector<2x32xf32>
    %457 = arith.negf %456 : vector<2x32xf32>
    %458 = math.exp %457 : vector<2x32xf32>
    %cst_104 = arith.constant 1.000000e+00 : f32
    %459 = vector.broadcast %cst_104 : f32 to vector<2x32xf32>
    %460 = arith.addf %459, %458 : vector<2x32xf32>
    %461 = arith.divf %459, %460 : vector<2x32xf32>
    %462 = vector.extract_strided_slice %455 {offsets = [0, 32], sizes = [2, 32], strides = [1, 1]} : vector<2x128xf32> to vector<2x32xf32>
    %463 = arith.negf %462 : vector<2x32xf32>
    %464 = math.exp %463 : vector<2x32xf32>
    %cst_105 = arith.constant 1.000000e+00 : f32
    %465 = vector.broadcast %cst_105 : f32 to vector<2x32xf32>
    %466 = arith.addf %465, %464 : vector<2x32xf32>
    %467 = arith.divf %465, %466 : vector<2x32xf32>
    %468 = vector.extract_strided_slice %455 {offsets = [0, 64], sizes = [2, 32], strides = [1, 1]} : vector<2x128xf32> to vector<2x32xf32>
    %469 = math.tanh %468 : vector<2x32xf32>
    %470 = vector.extract_strided_slice %455 {offsets = [0, 96], sizes = [2, 32], strides = [1, 1]} : vector<2x128xf32> to vector<2x32xf32>
    %471 = arith.negf %470 : vector<2x32xf32>
    %472 = math.exp %471 : vector<2x32xf32>
    %cst_106 = arith.constant 1.000000e+00 : f32
    %473 = vector.broadcast %cst_106 : f32 to vector<2x32xf32>
    %474 = arith.addf %473, %472 : vector<2x32xf32>
    %475 = arith.divf %473, %474 : vector<2x32xf32>
    %476 = arith.mulf %467, %449 : vector<2x32xf32>
    %477 = arith.mulf %461, %469 : vector<2x32xf32>
    %478 = arith.addf %476, %477 : vector<2x32xf32>
    %479 = math.tanh %478 : vector<2x32xf32>
    %480 = arith.mulf %475, %479 : vector<2x32xf32>
    %c14_107 = arith.constant 14 : index
    %c0_108 = arith.constant 0 : index
    %481 = vector.load %arg16[%c14_107, %c0_108] : memref<16x32xf32, #tpu.memory_space<vmem>>, vector<2x32xf32>
    tpu.vector_store %arg16[%c14_107, %c0_108], %480 {strides = array<i32>} : memref<16x32xf32, #tpu.memory_space<vmem>>, vector<2x32xf32>,
    %c0_109 = arith.constant 0 : index
    %c0_110 = arith.constant 0 : index
    %482 = vector.load %arg16[%c0_109, %c0_110] : memref<16x32xf32, #tpu.memory_space<vmem>>, vector<16x32xf32>
    %c0_111 = arith.constant 0 : index
    %c0_112 = arith.constant 0 : index
    %483 = vector.load %arg7[%c0_111, %c0_112] : memref<32x128xf32, #tpu.memory_space<vmem>>, vector<32x128xf32>
    %cst_113 = arith.constant dense<0.000000e+00> : vector<16x128xf32>
    %484 = tpu.matmul %482, %483, %cst_113 {dimension_numbers = #tpu.dot_dimension_numbers<[1], [0], [0], [1], [0, 0, 1, 1], [], []>} : vector<16x32xf32>, vector<32x128xf32>, vector<16x128xf32> -> vector<16x128xf32>
    %c0_114 = arith.constant 0 : index
    %c0_115 = arith.constant 0 : index
    %485 = vector.load %arg9[%c0_114, %c0_115] : memref<1x128xf32, #tpu.memory_space<vmem>>, vector<1x128xf32>
    %486 = vector.broadcast %485 : vector<1x128xf32> to vector<16x128xf32>
    %487 = arith.addf %484, %486 : vector<16x128xf32>
    %c0_116 = arith.constant 0 : index
    %c0_117 = arith.constant 0 : index
    %488 = vector.load %arg8[%c0_116, %c0_117] : memref<32x128xf32, #tpu.memory_space<vmem>>, vector<32x128xf32>
    %cst_118 = arith.constant 0.000000e+00 : f32
    %489 = vector.broadcast %cst_118 : f32 to vector<2x32xf32>
    %cst_119 = arith.constant 0.000000e+00 : f32
    %490 = vector.broadcast %cst_119 : f32 to vector<2x32xf32>
    %491 = vector.extract_strided_slice %487 {offsets = [0, 0], sizes = [2, 128], strides = [1, 1]} : vector<16x128xf32> to vector<2x128xf32>
    %cst_120 = arith.constant dense<0.000000e+00> : vector<2x128xf32>
    %492 = tpu.matmul %489, %488, %cst_120 {dimension_numbers = #tpu.dot_dimension_numbers<[1], [0], [0], [1], [0, 0, 1, 1], [], []>} : vector<2x32xf32>, vector<32x128xf32>, vector<2x128xf32> -> vector<2x128xf32>
    %493 = arith.addf %491, %492 : vector<2x128xf32>
    %494 = vector.extract_strided_slice %493 {offsets = [0, 0], sizes = [2, 32], strides = [1, 1]} : vector<2x128xf32> to vector<2x32xf32>
    %495 = arith.negf %494 : vector<2x32xf32>
    %496 = math.exp %495 : vector<2x32xf32>
    %cst_121 = arith.constant 1.000000e+00 : f32
    %497 = vector.broadcast %cst_121 : f32 to vector<2x32xf32>
    %498 = arith.addf %497, %496 : vector<2x32xf32>
    %499 = arith.divf %497, %498 : vector<2x32xf32>
    %500 = vector.extract_strided_slice %493 {offsets = [0, 32], sizes = [2, 32], strides = [1, 1]} : vector<2x128xf32> to vector<2x32xf32>
    %501 = arith.negf %500 : vector<2x32xf32>
    %502 = math.exp %501 : vector<2x32xf32>
    %cst_122 = arith.constant 1.000000e+00 : f32
    %503 = vector.broadcast %cst_122 : f32 to vector<2x32xf32>
    %504 = arith.addf %503, %502 : vector<2x32xf32>
    %505 = arith.divf %503, %504 : vector<2x32xf32>
    %506 = vector.extract_strided_slice %493 {offsets = [0, 64], sizes = [2, 32], strides = [1, 1]} : vector<2x128xf32> to vector<2x32xf32>
    %507 = math.tanh %506 : vector<2x32xf32>
    %508 = vector.extract_strided_slice %493 {offsets = [0, 96], sizes = [2, 32], strides = [1, 1]} : vector<2x128xf32> to vector<2x32xf32>
    %509 = arith.negf %508 : vector<2x32xf32>
    %510 = math.exp %509 : vector<2x32xf32>
    %cst_123 = arith.constant 1.000000e+00 : f32
    %511 = vector.broadcast %cst_123 : f32 to vector<2x32xf32>
    %512 = arith.addf %511, %510 : vector<2x32xf32>
    %513 = arith.divf %511, %512 : vector<2x32xf32>
    %514 = arith.mulf %505, %490 : vector<2x32xf32>
    %515 = arith.mulf %499, %507 : vector<2x32xf32>
    %516 = arith.addf %514, %515 : vector<2x32xf32>
    %517 = math.tanh %516 : vector<2x32xf32>
    %518 = arith.mulf %513, %517 : vector<2x32xf32>
    %519 = vector.extract_strided_slice %487 {offsets = [2, 0], sizes = [2, 128], strides = [1, 1]} : vector<16x128xf32> to vector<2x128xf32>
    %cst_124 = arith.constant dense<0.000000e+00> : vector<2x128xf32>
    %520 = tpu.matmul %518, %488, %cst_124 {dimension_numbers = #tpu.dot_dimension_numbers<[1], [0], [0], [1], [0, 0, 1, 1], [], []>} : vector<2x32xf32>, vector<32x128xf32>, vector<2x128xf32> -> vector<2x128xf32>
    %521 = arith.addf %519, %520 : vector<2x128xf32>
    %522 = vector.extract_strided_slice %521 {offsets = [0, 0], sizes = [2, 32], strides = [1, 1]} : vector<2x128xf32> to vector<2x32xf32>
    %523 = arith.negf %522 : vector<2x32xf32>
    %524 = math.exp %523 : vector<2x32xf32>
    %cst_125 = arith.constant 1.000000e+00 : f32
    %525 = vector.broadcast %cst_125 : f32 to vector<2x32xf32>
    %526 = arith.addf %525, %524 : vector<2x32xf32>
    %527 = arith.divf %525, %526 : vector<2x32xf32>
    %528 = vector.extract_strided_slice %521 {offsets = [0, 32], sizes = [2, 32], strides = [1, 1]} : vector<2x128xf32> to vector<2x32xf32>
    %529 = arith.negf %528 : vector<2x32xf32>
    %530 = math.exp %529 : vector<2x32xf32>
    %cst_126 = arith.constant 1.000000e+00 : f32
    %531 = vector.broadcast %cst_126 : f32 to vector<2x32xf32>
    %532 = arith.addf %531, %530 : vector<2x32xf32>
    %533 = arith.divf %531, %532 : vector<2x32xf32>
    %534 = vector.extract_strided_slice %521 {offsets = [0, 64], sizes = [2, 32], strides = [1, 1]} : vector<2x128xf32> to vector<2x32xf32>
    %535 = math.tanh %534 : vector<2x32xf32>
    %536 = vector.extract_strided_slice %521 {offsets = [0, 96], sizes = [2, 32], strides = [1, 1]} : vector<2x128xf32> to vector<2x32xf32>
    %537 = arith.negf %536 : vector<2x32xf32>
    %538 = math.exp %537 : vector<2x32xf32>
    %cst_127 = arith.constant 1.000000e+00 : f32
    %539 = vector.broadcast %cst_127 : f32 to vector<2x32xf32>
    %540 = arith.addf %539, %538 : vector<2x32xf32>
    %541 = arith.divf %539, %540 : vector<2x32xf32>
    %542 = arith.mulf %533, %516 : vector<2x32xf32>
    %543 = arith.mulf %527, %535 : vector<2x32xf32>
    %544 = arith.addf %542, %543 : vector<2x32xf32>
    %545 = math.tanh %544 : vector<2x32xf32>
    %546 = arith.mulf %541, %545 : vector<2x32xf32>
    %547 = vector.extract_strided_slice %487 {offsets = [4, 0], sizes = [2, 128], strides = [1, 1]} : vector<16x128xf32> to vector<2x128xf32>
    %cst_128 = arith.constant dense<0.000000e+00> : vector<2x128xf32>
    %548 = tpu.matmul %546, %488, %cst_128 {dimension_numbers = #tpu.dot_dimension_numbers<[1], [0], [0], [1], [0, 0, 1, 1], [], []>} : vector<2x32xf32>, vector<32x128xf32>, vector<2x128xf32> -> vector<2x128xf32>
    %549 = arith.addf %547, %548 : vector<2x128xf32>
    %550 = vector.extract_strided_slice %549 {offsets = [0, 0], sizes = [2, 32], strides = [1, 1]} : vector<2x128xf32> to vector<2x32xf32>
    %551 = arith.negf %550 : vector<2x32xf32>
    %552 = math.exp %551 : vector<2x32xf32>
    %cst_129 = arith.constant 1.000000e+00 : f32
    %553 = vector.broadcast %cst_129 : f32 to vector<2x32xf32>
    %554 = arith.addf %553, %552 : vector<2x32xf32>
    %555 = arith.divf %553, %554 : vector<2x32xf32>
    %556 = vector.extract_strided_slice %549 {offsets = [0, 32], sizes = [2, 32], strides = [1, 1]} : vector<2x128xf32> to vector<2x32xf32>
    %557 = arith.negf %556 : vector<2x32xf32>
    %558 = math.exp %557 : vector<2x32xf32>
    %cst_130 = arith.constant 1.000000e+00 : f32
    %559 = vector.broadcast %cst_130 : f32 to vector<2x32xf32>
    %560 = arith.addf %559, %558 : vector<2x32xf32>
    %561 = arith.divf %559, %560 : vector<2x32xf32>
    %562 = vector.extract_strided_slice %549 {offsets = [0, 64], sizes = [2, 32], strides = [1, 1]} : vector<2x128xf32> to vector<2x32xf32>
    %563 = math.tanh %562 : vector<2x32xf32>
    %564 = vector.extract_strided_slice %549 {offsets = [0, 96], sizes = [2, 32], strides = [1, 1]} : vector<2x128xf32> to vector<2x32xf32>
    %565 = arith.negf %564 : vector<2x32xf32>
    %566 = math.exp %565 : vector<2x32xf32>
    %cst_131 = arith.constant 1.000000e+00 : f32
    %567 = vector.broadcast %cst_131 : f32 to vector<2x32xf32>
    %568 = arith.addf %567, %566 : vector<2x32xf32>
    %569 = arith.divf %567, %568 : vector<2x32xf32>
    %570 = arith.mulf %561, %544 : vector<2x32xf32>
    %571 = arith.mulf %555, %563 : vector<2x32xf32>
    %572 = arith.addf %570, %571 : vector<2x32xf32>
    %573 = math.tanh %572 : vector<2x32xf32>
    %574 = arith.mulf %569, %573 : vector<2x32xf32>
    %575 = vector.extract_strided_slice %487 {offsets = [6, 0], sizes = [2, 128], strides = [1, 1]} : vector<16x128xf32> to vector<2x128xf32>
    %cst_132 = arith.constant dense<0.000000e+00> : vector<2x128xf32>
    %576 = tpu.matmul %574, %488, %cst_132 {dimension_numbers = #tpu.dot_dimension_numbers<[1], [0], [0], [1], [0, 0, 1, 1], [], []>} : vector<2x32xf32>, vector<32x128xf32>, vector<2x128xf32> -> vector<2x128xf32>
    %577 = arith.addf %575, %576 : vector<2x128xf32>
    %578 = vector.extract_strided_slice %577 {offsets = [0, 0], sizes = [2, 32], strides = [1, 1]} : vector<2x128xf32> to vector<2x32xf32>
    %579 = arith.negf %578 : vector<2x32xf32>
    %580 = math.exp %579 : vector<2x32xf32>
    %cst_133 = arith.constant 1.000000e+00 : f32
    %581 = vector.broadcast %cst_133 : f32 to vector<2x32xf32>
    %582 = arith.addf %581, %580 : vector<2x32xf32>
    %583 = arith.divf %581, %582 : vector<2x32xf32>
    %584 = vector.extract_strided_slice %577 {offsets = [0, 32], sizes = [2, 32], strides = [1, 1]} : vector<2x128xf32> to vector<2x32xf32>
    %585 = arith.negf %584 : vector<2x32xf32>
    %586 = math.exp %585 : vector<2x32xf32>
    %cst_134 = arith.constant 1.000000e+00 : f32
    %587 = vector.broadcast %cst_134 : f32 to vector<2x32xf32>
    %588 = arith.addf %587, %586 : vector<2x32xf32>
    %589 = arith.divf %587, %588 : vector<2x32xf32>
    %590 = vector.extract_strided_slice %577 {offsets = [0, 64], sizes = [2, 32], strides = [1, 1]} : vector<2x128xf32> to vector<2x32xf32>
    %591 = math.tanh %590 : vector<2x32xf32>
    %592 = vector.extract_strided_slice %577 {offsets = [0, 96], sizes = [2, 32], strides = [1, 1]} : vector<2x128xf32> to vector<2x32xf32>
    %593 = arith.negf %592 : vector<2x32xf32>
    %594 = math.exp %593 : vector<2x32xf32>
    %cst_135 = arith.constant 1.000000e+00 : f32
    %595 = vector.broadcast %cst_135 : f32 to vector<2x32xf32>
    %596 = arith.addf %595, %594 : vector<2x32xf32>
    %597 = arith.divf %595, %596 : vector<2x32xf32>
    %598 = arith.mulf %589, %572 : vector<2x32xf32>
    %599 = arith.mulf %583, %591 : vector<2x32xf32>
    %600 = arith.addf %598, %599 : vector<2x32xf32>
    %601 = math.tanh %600 : vector<2x32xf32>
    %602 = arith.mulf %597, %601 : vector<2x32xf32>
    %603 = vector.extract_strided_slice %487 {offsets = [8, 0], sizes = [2, 128], strides = [1, 1]} : vector<16x128xf32> to vector<2x128xf32>
    %cst_136 = arith.constant dense<0.000000e+00> : vector<2x128xf32>
    %604 = tpu.matmul %602, %488, %cst_136 {dimension_numbers = #tpu.dot_dimension_numbers<[1], [0], [0], [1], [0, 0, 1, 1], [], []>} : vector<2x32xf32>, vector<32x128xf32>, vector<2x128xf32> -> vector<2x128xf32>
    %605 = arith.addf %603, %604 : vector<2x128xf32>
    %606 = vector.extract_strided_slice %605 {offsets = [0, 0], sizes = [2, 32], strides = [1, 1]} : vector<2x128xf32> to vector<2x32xf32>
    %607 = arith.negf %606 : vector<2x32xf32>
    %608 = math.exp %607 : vector<2x32xf32>
    %cst_137 = arith.constant 1.000000e+00 : f32
    %609 = vector.broadcast %cst_137 : f32 to vector<2x32xf32>
    %610 = arith.addf %609, %608 : vector<2x32xf32>
    %611 = arith.divf %609, %610 : vector<2x32xf32>
    %612 = vector.extract_strided_slice %605 {offsets = [0, 32], sizes = [2, 32], strides = [1, 1]} : vector<2x128xf32> to vector<2x32xf32>
    %613 = arith.negf %612 : vector<2x32xf32>
    %614 = math.exp %613 : vector<2x32xf32>
    %cst_138 = arith.constant 1.000000e+00 : f32
    %615 = vector.broadcast %cst_138 : f32 to vector<2x32xf32>
    %616 = arith.addf %615, %614 : vector<2x32xf32>
    %617 = arith.divf %615, %616 : vector<2x32xf32>
    %618 = vector.extract_strided_slice %605 {offsets = [0, 64], sizes = [2, 32], strides = [1, 1]} : vector<2x128xf32> to vector<2x32xf32>
    %619 = math.tanh %618 : vector<2x32xf32>
    %620 = vector.extract_strided_slice %605 {offsets = [0, 96], sizes = [2, 32], strides = [1, 1]} : vector<2x128xf32> to vector<2x32xf32>
    %621 = arith.negf %620 : vector<2x32xf32>
    %622 = math.exp %621 : vector<2x32xf32>
    %cst_139 = arith.constant 1.000000e+00 : f32
    %623 = vector.broadcast %cst_139 : f32 to vector<2x32xf32>
    %624 = arith.addf %623, %622 : vector<2x32xf32>
    %625 = arith.divf %623, %624 : vector<2x32xf32>
    %626 = arith.mulf %617, %600 : vector<2x32xf32>
    %627 = arith.mulf %611, %619 : vector<2x32xf32>
    %628 = arith.addf %626, %627 : vector<2x32xf32>
    %629 = math.tanh %628 : vector<2x32xf32>
    %630 = arith.mulf %625, %629 : vector<2x32xf32>
    %631 = vector.extract_strided_slice %487 {offsets = [10, 0], sizes = [2, 128], strides = [1, 1]} : vector<16x128xf32> to vector<2x128xf32>
    %cst_140 = arith.constant dense<0.000000e+00> : vector<2x128xf32>
    %632 = tpu.matmul %630, %488, %cst_140 {dimension_numbers = #tpu.dot_dimension_numbers<[1], [0], [0], [1], [0, 0, 1, 1], [], []>} : vector<2x32xf32>, vector<32x128xf32>, vector<2x128xf32> -> vector<2x128xf32>
    %633 = arith.addf %631, %632 : vector<2x128xf32>
    %634 = vector.extract_strided_slice %633 {offsets = [0, 0], sizes = [2, 32], strides = [1, 1]} : vector<2x128xf32> to vector<2x32xf32>
    %635 = arith.negf %634 : vector<2x32xf32>
    %636 = math.exp %635 : vector<2x32xf32>
    %cst_141 = arith.constant 1.000000e+00 : f32
    %637 = vector.broadcast %cst_141 : f32 to vector<2x32xf32>
    %638 = arith.addf %637, %636 : vector<2x32xf32>
    %639 = arith.divf %637, %638 : vector<2x32xf32>
    %640 = vector.extract_strided_slice %633 {offsets = [0, 32], sizes = [2, 32], strides = [1, 1]} : vector<2x128xf32> to vector<2x32xf32>
    %641 = arith.negf %640 : vector<2x32xf32>
    %642 = math.exp %641 : vector<2x32xf32>
    %cst_142 = arith.constant 1.000000e+00 : f32
    %643 = vector.broadcast %cst_142 : f32 to vector<2x32xf32>
    %644 = arith.addf %643, %642 : vector<2x32xf32>
    %645 = arith.divf %643, %644 : vector<2x32xf32>
    %646 = vector.extract_strided_slice %633 {offsets = [0, 64], sizes = [2, 32], strides = [1, 1]} : vector<2x128xf32> to vector<2x32xf32>
    %647 = math.tanh %646 : vector<2x32xf32>
    %648 = vector.extract_strided_slice %633 {offsets = [0, 96], sizes = [2, 32], strides = [1, 1]} : vector<2x128xf32> to vector<2x32xf32>
    %649 = arith.negf %648 : vector<2x32xf32>
    %650 = math.exp %649 : vector<2x32xf32>
    %cst_143 = arith.constant 1.000000e+00 : f32
    %651 = vector.broadcast %cst_143 : f32 to vector<2x32xf32>
    %652 = arith.addf %651, %650 : vector<2x32xf32>
    %653 = arith.divf %651, %652 : vector<2x32xf32>
    %654 = arith.mulf %645, %628 : vector<2x32xf32>
    %655 = arith.mulf %639, %647 : vector<2x32xf32>
    %656 = arith.addf %654, %655 : vector<2x32xf32>
    %657 = math.tanh %656 : vector<2x32xf32>
    %658 = arith.mulf %653, %657 : vector<2x32xf32>
    %659 = vector.extract_strided_slice %487 {offsets = [12, 0], sizes = [2, 128], strides = [1, 1]} : vector<16x128xf32> to vector<2x128xf32>
    %cst_144 = arith.constant dense<0.000000e+00> : vector<2x128xf32>
    %660 = tpu.matmul %658, %488, %cst_144 {dimension_numbers = #tpu.dot_dimension_numbers<[1], [0], [0], [1], [0, 0, 1, 1], [], []>} : vector<2x32xf32>, vector<32x128xf32>, vector<2x128xf32> -> vector<2x128xf32>
    %661 = arith.addf %659, %660 : vector<2x128xf32>
    %662 = vector.extract_strided_slice %661 {offsets = [0, 0], sizes = [2, 32], strides = [1, 1]} : vector<2x128xf32> to vector<2x32xf32>
    %663 = arith.negf %662 : vector<2x32xf32>
    %664 = math.exp %663 : vector<2x32xf32>
    %cst_145 = arith.constant 1.000000e+00 : f32
    %665 = vector.broadcast %cst_145 : f32 to vector<2x32xf32>
    %666 = arith.addf %665, %664 : vector<2x32xf32>
    %667 = arith.divf %665, %666 : vector<2x32xf32>
    %668 = vector.extract_strided_slice %661 {offsets = [0, 32], sizes = [2, 32], strides = [1, 1]} : vector<2x128xf32> to vector<2x32xf32>
    %669 = arith.negf %668 : vector<2x32xf32>
    %670 = math.exp %669 : vector<2x32xf32>
    %cst_146 = arith.constant 1.000000e+00 : f32
    %671 = vector.broadcast %cst_146 : f32 to vector<2x32xf32>
    %672 = arith.addf %671, %670 : vector<2x32xf32>
    %673 = arith.divf %671, %672 : vector<2x32xf32>
    %674 = vector.extract_strided_slice %661 {offsets = [0, 64], sizes = [2, 32], strides = [1, 1]} : vector<2x128xf32> to vector<2x32xf32>
    %675 = math.tanh %674 : vector<2x32xf32>
    %676 = vector.extract_strided_slice %661 {offsets = [0, 96], sizes = [2, 32], strides = [1, 1]} : vector<2x128xf32> to vector<2x32xf32>
    %677 = arith.negf %676 : vector<2x32xf32>
    %678 = math.exp %677 : vector<2x32xf32>
    %cst_147 = arith.constant 1.000000e+00 : f32
    %679 = vector.broadcast %cst_147 : f32 to vector<2x32xf32>
    %680 = arith.addf %679, %678 : vector<2x32xf32>
    %681 = arith.divf %679, %680 : vector<2x32xf32>
    %682 = arith.mulf %673, %656 : vector<2x32xf32>
    %683 = arith.mulf %667, %675 : vector<2x32xf32>
    %684 = arith.addf %682, %683 : vector<2x32xf32>
    %685 = math.tanh %684 : vector<2x32xf32>
    %686 = arith.mulf %681, %685 : vector<2x32xf32>
    %687 = vector.extract_strided_slice %487 {offsets = [14, 0], sizes = [2, 128], strides = [1, 1]} : vector<16x128xf32> to vector<2x128xf32>
    %cst_148 = arith.constant dense<0.000000e+00> : vector<2x128xf32>
    %688 = tpu.matmul %686, %488, %cst_148 {dimension_numbers = #tpu.dot_dimension_numbers<[1], [0], [0], [1], [0, 0, 1, 1], [], []>} : vector<2x32xf32>, vector<32x128xf32>, vector<2x128xf32> -> vector<2x128xf32>
    %689 = arith.addf %687, %688 : vector<2x128xf32>
    %690 = vector.extract_strided_slice %689 {offsets = [0, 0], sizes = [2, 32], strides = [1, 1]} : vector<2x128xf32> to vector<2x32xf32>
    %691 = arith.negf %690 : vector<2x32xf32>
    %692 = math.exp %691 : vector<2x32xf32>
    %cst_149 = arith.constant 1.000000e+00 : f32
    %693 = vector.broadcast %cst_149 : f32 to vector<2x32xf32>
    %694 = arith.addf %693, %692 : vector<2x32xf32>
    %695 = arith.divf %693, %694 : vector<2x32xf32>
    %696 = vector.extract_strided_slice %689 {offsets = [0, 32], sizes = [2, 32], strides = [1, 1]} : vector<2x128xf32> to vector<2x32xf32>
    %697 = arith.negf %696 : vector<2x32xf32>
    %698 = math.exp %697 : vector<2x32xf32>
    %cst_150 = arith.constant 1.000000e+00 : f32
    %699 = vector.broadcast %cst_150 : f32 to vector<2x32xf32>
    %700 = arith.addf %699, %698 : vector<2x32xf32>
    %701 = arith.divf %699, %700 : vector<2x32xf32>
    %702 = vector.extract_strided_slice %689 {offsets = [0, 64], sizes = [2, 32], strides = [1, 1]} : vector<2x128xf32> to vector<2x32xf32>
    %703 = math.tanh %702 : vector<2x32xf32>
    %704 = vector.extract_strided_slice %689 {offsets = [0, 96], sizes = [2, 32], strides = [1, 1]} : vector<2x128xf32> to vector<2x32xf32>
    %705 = arith.negf %704 : vector<2x32xf32>
    %706 = math.exp %705 : vector<2x32xf32>
    %cst_151 = arith.constant 1.000000e+00 : f32
    %707 = vector.broadcast %cst_151 : f32 to vector<2x32xf32>
    %708 = arith.addf %707, %706 : vector<2x32xf32>
    %709 = arith.divf %707, %708 : vector<2x32xf32>
    %710 = arith.mulf %701, %684 : vector<2x32xf32>
    %711 = arith.mulf %695, %703 : vector<2x32xf32>
    %712 = arith.addf %710, %711 : vector<2x32xf32>
    %713 = math.tanh %712 : vector<2x32xf32>
    %714 = arith.mulf %709, %713 : vector<2x32xf32>
    %c0_152 = arith.constant 0 : index
    %c0_153 = arith.constant 0 : index
    %715 = vector.load %arg10[%c0_152, %c0_153] : memref<32x32xf32, #tpu.memory_space<vmem>>, vector<32x32xf32>
    %cst_154 = arith.constant dense<0.000000e+00> : vector<2x32xf32>
    %716 = tpu.matmul %714, %715, %cst_154 {dimension_numbers = #tpu.dot_dimension_numbers<[1], [0], [0], [1], [0, 0, 1, 1], [], []>} : vector<2x32xf32>, vector<32x32xf32>, vector<2x32xf32> -> vector<2x32xf32>
    %c0_155 = arith.constant 0 : index
    %c0_156 = arith.constant 0 : index
    %717 = vector.load %arg11[%c0_155, %c0_156] : memref<1x32xf32, #tpu.memory_space<vmem>>, vector<1x32xf32>
    %718 = vector.broadcast %717 : vector<1x32xf32> to vector<2x32xf32>
    %719 = arith.addf %716, %718 : vector<2x32xf32>
    %c0_157 = arith.constant 0 : index
    %c0_158 = arith.constant 0 : index
    %720 = vector.load %arg12[%c0_157, %c0_158] : memref<32x9xf32, #tpu.memory_space<vmem>>, vector<32x9xf32>
    %cst_159 = arith.constant dense<0.000000e+00> : vector<2x9xf32>
    %721 = tpu.matmul %719, %720, %cst_159 {dimension_numbers = #tpu.dot_dimension_numbers<[1], [0], [0], [1], [0, 0, 1, 1], [], []>} : vector<2x32xf32>, vector<32x9xf32>, vector<2x9xf32> -> vector<2x9xf32>
    %c0_160 = arith.constant 0 : index
    %c0_161 = arith.constant 0 : index
    %722 = vector.load %arg13[%c0_160, %c0_161] : memref<1x9xf32, #tpu.memory_space<vmem>>, vector<1x9xf32>
    %723 = vector.broadcast %722 : vector<1x9xf32> to vector<2x9xf32>
    %724 = arith.addf %721, %723 : vector<2x9xf32>
    %725 = vector.extract_strided_slice %724 {offsets = [0, 0], sizes = [2, 3], strides = [1, 1]} : vector<2x9xf32> to vector<2x3xf32>
    %c0_162 = arith.constant 0 : index
    %c0_163 = arith.constant 0 : index
    %726 = vector.load %arg14[%c0_162, %c0_163] : memref<2x3xf32, #tpu.memory_space<vmem>>, vector<2x3xf32>
    tpu.vector_store %arg14[%c0_162, %c0_163], %725 {strides = array<i32>} : memref<2x3xf32, #tpu.memory_space<vmem>>, vector<2x3xf32>,
    %727 = vector.extract_strided_slice %724 {offsets = [0, 3], sizes = [2, 6], strides = [1, 1]} : vector<2x9xf32> to vector<2x6xf32>
    %c0_164 = arith.constant 0 : index
    %c0_165 = arith.constant 0 : index
    %728 = vector.load %arg15[%c0_164, %c0_165] : memref<2x6xf32, #tpu.memory_space<vmem>>, vector<2x6xf32>
    tpu.vector_store %arg15[%c0_164, %c0_165], %727 {strides = array<i32>} : memref<2x6xf32, #tpu.memory_space<vmem>>, vector<2x6xf32>,
    return
  }
}

</mosaic_0001>

<llo_original>
// kernel: lstmime_pallas.1
$region0: #{lstmime_pallas.1}
  #allocation0 [shape = 'u32[]', space=smem, size = 0x4, offset = 0x4, fixed_abs, tag = 'smem constant byte address 0x4 - core index']
  #allocation1 [shape = 'u32[144,128]{1,0:T(1,128)}', space=vmem, size = 0x12000, scoped, tag = 'internal scratch']
  #allocation2 [shape = 'f32[16,32]{1,0:T(8,128)}', space=vmem, size = 0x2000, scoped, tag = 'scratch operand']
  %s0 = inlined_call_operand.vmem [shape: f32[16,4], index: 0, kind: input, shape index: {}]
  %s1 = inlined_call_operand.vmem [shape: f32[4,128], index: 1, kind: input, shape index: {}]
  %s2 = inlined_call_operand.vmem [shape: f32[32,128], index: 2, kind: input, shape index: {}]
  %s3 = inlined_call_operand.vmem [shape: f32[1,128], index: 3, kind: input, shape index: {}]
  %s4 = inlined_call_operand.vmem [shape: f32[32,128], index: 4, kind: input, shape index: {}]
  %s5 = inlined_call_operand.vmem [shape: f32[32,128], index: 5, kind: input, shape index: {}]
  %s6 = inlined_call_operand.vmem [shape: f32[1,128], index: 6, kind: input, shape index: {}]
  %s7 = inlined_call_operand.vmem [shape: f32[32,128], index: 7, kind: input, shape index: {}]
  %s8 = inlined_call_operand.vmem [shape: f32[32,128], index: 8, kind: input, shape index: {}]
  %s9 = inlined_call_operand.hbm [shape: f32[1,128], index: 9, kind: input, shape index: {}]
  %s10 = inlined_call_operand.vmem [shape: f32[32,32], index: 10, kind: input, shape index: {}]
  %s11 = inlined_call_operand.vmem [shape: f32[1,32], index: 11, kind: input, shape index: {}]
  %s12 = inlined_call_operand.vmem [shape: f32[32,9], index: 12, kind: input, shape index: {}]
  %s13 = inlined_call_operand.vmem [shape: f32[1,9], index: 13, kind: input, shape index: {}]
  %s14 = inlined_call_operand.hbm [shape: f32[2,3], index: 14, kind: output, shape index: {0}]
  %s15 = inlined_call_operand.hbm [shape: f32[2,6], index: 15, kind: output, shape index: {1}]
  %16 = xla_tuple %s14, %s15
  %s17 = sld [smem:[#allocation0]]
  $region78: #{lstmime_pallas.1} parent=0
    _
  %s19 = ssub.s32 1, %s17
  %s20 = scalar_select 0, %s19, %s17
  $region1: #{lstmime_pallas.1} parent=0
    #allocation3 [shape = 'u8[512]{0}', space=vmem, size = 0x400, scoped, tag = 'input window, operand 9, single buffered']
    #allocation4 [shape = 's32[1]{0}', space=sflag, size = 0x4, scoped, tag = 'scoped memory for lstmime_pallas.1']
    #allocation5 [shape = 's32[1]{0}', space=sflag, size = 0x4, scoped, tag = 'scoped memory for lstmime_pallas.1']
    #allocation6 [shape = 'u8[1024]{0}', space=vmem, size = 0x400, scoped, tag = 'output window, operand 0, single buffered']
    #allocation7 [shape = 'u8[1024]{0}', space=vmem, size = 0x400, scoped, tag = 'output window, operand 1, single buffered']
    #allocation8 [shape = 's32[1]{0}', space=sflag, size = 0x4, scoped, tag = 'scoped memory for lstmime_pallas.1']
    %21 = vsyncpa [#allocation4], 0
    %22 = vsyncpa [#allocation5], 0
    %23 = vsyncpa [#allocation8], 0
    // Predicated region
    $region2: #{lstmime_pallas.1} parent=1 // pred_check
      _
    $region3: #{lstmime_pallas.1} parent=1 // pred_check_branch
      %25 = sbr.rel (0) target = $region5
    $region4: #{lstmime_pallas.1} parent=1 // pred_region
      _
    $region5: #{lstmime_pallas.1} parent=1 // pred_fallthru
      _
    // Predicated region
    $region6: #{lstmime_pallas.1} parent=1 // pred_check
      _
    $region7: #{lstmime_pallas.1} parent=1 // pred_check_branch
      %27 = sbr.rel (0) target = $region9
    $region8: #{lstmime_pallas.1} parent=1 // pred_region
      _
    $region9: #{lstmime_pallas.1} parent=1 // pred_fallthru
      _
    // Predicated region
    $region10: #{lstmime_pallas.1} parent=1 // pred_check
      _
    $region11: #{lstmime_pallas.1} parent=1 // pred_check_branch
      %29 = sbr.rel (0) target = $region13
    $region12: #{lstmime_pallas.1} parent=1 // pred_region
      _
    $region13: #{lstmime_pallas.1} parent=1 // pred_fallthru
      _
    // Predicated region
    $region14: #{lstmime_pallas.1} parent=1 // pred_check
      _
    $region15: #{lstmime_pallas.1} parent=1 // pred_check_branch
      %31 = sbr.rel (0) target = $region17
    $region16: #{lstmime_pallas.1} parent=1 // pred_region
      _
    $region17: #{lstmime_pallas.1} parent=1 // pred_fallthru
      _
    // Predicated region
    $region18: #{lstmime_pallas.1} parent=1 // pred_check
      _
    $region19: #{lstmime_pallas.1} parent=1 // pred_check_branch
      %33 = sbr.rel (0) target = $region21
    $region20: #{lstmime_pallas.1} parent=1 // pred_region
      _
    $region21: #{lstmime_pallas.1} parent=1 // pred_fallthru
      _
    // Predicated region
    $region22: #{lstmime_pallas.1} parent=1 // pred_check
      _
    $region23: #{lstmime_pallas.1} parent=1 // pred_check_branch
      %35 = sbr.rel (0) target = $region25
    $region24: #{lstmime_pallas.1} parent=1 // pred_region
      _
    $region25: #{lstmime_pallas.1} parent=1 // pred_fallthru
      _
    // Predicated region
    $region26: #{lstmime_pallas.1} parent=1 // pred_check
      _
    $region27: #{lstmime_pallas.1} parent=1 // pred_check_branch
      %37 = sbr.rel (0) target = $region29
    $region28: #{lstmime_pallas.1} parent=1 // pred_region
      _
    $region29: #{lstmime_pallas.1} parent=1 // pred_fallthru
      _
    // Predicated region
    $region30: #{lstmime_pallas.1} parent=1 // pred_check
      _
    $region31: #{lstmime_pallas.1} parent=1 // pred_check_branch
      %39 = sbr.rel (0) target = $region33
    $region32: #{lstmime_pallas.1} parent=1 // pred_region
      _
    $region33: #{lstmime_pallas.1} parent=1 // pred_fallthru
      _
    // Predicated region
    $region34: #{lstmime_pallas.1} parent=1 // pred_check
      _
    $region35: #{lstmime_pallas.1} parent=1 // pred_check_branch
      %41 = sbr.rel (0) target = $region37
    $region36: #{lstmime_pallas.1} parent=1 // pred_region
      _
    $region37: #{lstmime_pallas.1} parent=1 // pred_fallthru
      _
    // Predicated region
    $region38: #{lstmime_pallas.1} parent=1 // pred_check
      _
    $region39: #{lstmime_pallas.1} parent=1 // pred_check_branch
      %43 = sbr.rel (0) target = $region41
    $region40: #{lstmime_pallas.1} parent=1 // pred_region
      %s45 = ssub.s32 16, 16
      %46 = vsyncadd [#allocation4], %s45
      %s48 = sshll.u32 [#allocation3], 4
      %s49 = int_to_ptr.vmem [resolvable:$true] %s48
      %51 = dma.hbm_to_vmem [thread:$0]  %s9, 16, %s49, [#allocation4]
    $region41: #{lstmime_pallas.1} parent=1 // pred_fallthru
      _
    // Predicated region
    $region42: #{lstmime_pallas.1} parent=1 // pred_check
      _
    $region43: #{lstmime_pallas.1} parent=1 // pred_check_branch
      %53 = sbr.rel (0) target = $region45
    $region44: #{lstmime_pallas.1} parent=1 // pred_region
      _
    $region45: #{lstmime_pallas.1} parent=1 // pred_fallthru
      _
    // Predicated region
    $region46: #{lstmime_pallas.1} parent=1 // pred_check
      _
    $region47: #{lstmime_pallas.1} parent=1 // pred_check_branch
      %55 = sbr.rel (0) target = $region49
    $region48: #{lstmime_pallas.1} parent=1 // pred_region
      _
    $region49: #{lstmime_pallas.1} parent=1 // pred_fallthru
      _
    // Predicated region
    $region50: #{lstmime_pallas.1} parent=1 // pred_check
      _
    $region51: #{lstmime_pallas.1} parent=1 // pred_check_branch
      %57 = sbr.rel (0) target = $region53
    $region52: #{lstmime_pallas.1} parent=1 // pred_region
      _
    $region53: #{lstmime_pallas.1} parent=1 // pred_fallthru
      _
    // Predicated region
    $region54: #{lstmime_pallas.1} parent=1 // pred_check
      _
    $region55: #{lstmime_pallas.1} parent=1 // pred_check_branch
      %59 = sbr.rel (0) target = $region57
    $region56: #{lstmime_pallas.1} parent=1 // pred_region
      _
    $region57: #{lstmime_pallas.1} parent=1 // pred_fallthru
      _
    // Predicated region
    $region58: #{lstmime_pallas.1} parent=1 // pred_check
      _
    $region59: #{lstmime_pallas.1} parent=1 // pred_check_branch
      %61 = sbr.rel (0) target = $region61
    $region60: #{lstmime_pallas.1} parent=1 // pred_region
      %62 = dma.done [#allocation4], 16
    $region61: #{lstmime_pallas.1} parent=1 // pred_fallthru
      _
    %v63 = vld [vmem:[%s0] sm:$0xff]
    %v64 = vld [vmem:[%s0 + $0x8] sm:$0xff]
    %v65 = vld [vmem:[%s1] sm:$0xf]
    %v66 = vld [vmem:[%s3] sm:$0x1]
    %v68 = vlaneseq
    %v69 = vshrl.u32 %v68, 7
    %v70 = vsub.s32 0, %v69
    %v71 = vrot.slane %v66, %v70
    %vm73 = vcmask 31744
    %v75 = vsel %vm73, %v63, 0
    %v78 = vsel %vm73, %v64, 0
    %vm80 = vcmask 1043456
    %v82 = vsel %vm80, %v65, 0
    %84 = vmatprep.subr.mxu0 0.0
    %85 = vmatpush1.msra.mxu0 %v82
    %86 = vmatprep.subr.mxu0 0.0
    %87 = vmatpush1.msra.mxu0 0.0
    %88 = vmatprep.subr.mxu0 0.0
    %89 = vmatpush1.msra.mxu0 0.0
    %90 = vmatprep.subr.mxu0 0.0
    %91 = vmatpush1.msra.mxu0 0.0
    %92 = vmatprep.subr.mxu0 0.0
    %93 = vmatpush1.msra.mxu0 0.0
    %94 = vmatprep.subr.mxu0 0.0
    %95 = vmatpush1.msra.mxu0 0.0
    %96 = vmatprep.subr.mxu0 0.0
    %97 = vmatpush1.msra.mxu0 0.0
    %98 = vmatprep.subr.mxu0 0.0
    %99 = vmatpush1.msra.mxu0 0.0
    %100 = vmatprep.subr.mxu0 0.0
    %101 = vmatpush1.msra.mxu0 0.0
    %102 = vmatprep.subr.mxu0 0.0
    %103 = vmatpush1.msra.mxu0 0.0
    %104 = vmatprep.subr.mxu0 0.0
    %105 = vmatpush1.msra.mxu0 0.0
    %106 = vmatprep.subr.mxu0 0.0
    %107 = vmatpush1.msra.mxu0 0.0
    %108 = vmatprep.subr.mxu0 0.0
    %109 = vmatpush1.msra.mxu0 0.0
    %110 = vmatprep.subr.mxu0 0.0
    %111 = vmatpush1.msra.mxu0 0.0
    %112 = vmatprep.subr.mxu0 0.0
    %113 = vmatpush1.msra.mxu0 0.0
    %114 = vmatprep.subr.mxu0 0.0
    %115 = vmatpush1.msra.mxu0 0.0
    %116 = vmatprep.subr.mxu0 0.0
    %117 = vmatpush1.msra.mxu0 0.0
    %118 = vmatprep.subr.mxu0 0.0
    %119 = vmatpush1.msra.mxu0 0.0
    %120 = vmatprep.subr.mxu0 0.0
    %121 = vmatpush1.msra.mxu0 0.0
    %122 = vmatprep.subr.mxu0 0.0
    %123 = vmatpush1.msra.mxu0 0.0
    %124 = vmatprep.subr.mxu0 0.0
    %125 = vmatpush1.msra.mxu0 0.0
    %126 = vmatprep.subr.mxu0 0.0
    %127 = vmatpush1.msra.mxu0 0.0
    %128 = vmatprep.subr.mxu0 0.0
    %129 = vmatpush1.msra.mxu0 0.0
    %130 = vmatprep.subr.mxu0 0.0
    %131 = vmatpush1.msra.mxu0 0.0
    %132 = vmatprep.subr.mxu0 0.0
    %133 = vmatpush1.msra.mxu0 0.0
    %134 = vmatprep.subr.mxu0 0.0
    %135 = vmatpush1.msra.mxu0 0.0
    %136 = vmatprep.subr.mxu0 0.0
    %137 = vmatpush1.msra.mxu0 0.0
    %138 = vmatprep.subr.mxu0 0.0
    %139 = vmatpush1.msra.mxu0 0.0
    %140 = vmatprep.subr.mxu0 0.0
    %141 = vmatpush1.msra.mxu0 0.0
    %142 = vmatprep.subr.mxu0 0.0
    %143 = vmatpush1.msra.mxu0 0.0
    %144 = vmatprep.subr.mxu0 0.0
    %145 = vmatpush1.msra.mxu0 0.0
    %146 = vmatprep.subr.mxu0 0.0
    %147 = vmatpush1.msra.mxu0 0.0
    %148 = vmatprep.mubr.f32.mxu0 0.0
    %149 = vmatmul.mubr.f32.gmra.mrb[0].mxu0 %v75
    %v150 = vpop.f32.mrb[0].mxu0
    %v151 = vadd.f32 %v71, %v150
    %v152 = vpop.f32.mrb[0].mxu0
    %153 = vmatprep.mubr.f32.mxu0 0.0
    %154 = vmatmul.mubr.f32.gmra.mrb[0].mxu0 %v78
    %v155 = vpop.f32.mrb[0].mxu0
    %v156 = vadd.f32 %v71, %v155
    %v157 = vpop.f32.mrb[0].mxu0
    %158 = vdwg.mxu0
    %v159 = vld [vmem:[%s2] sm:$0xff]
    %v160 = vld [vmem:[%s2 + $0x8] sm:$0xff]
    %v161 = vld [vmem:[%s2 + $0x10] sm:$0xff]
    %v162 = vld [vmem:[%s2 + $0x18] sm:$0xff]
    %vm163 = vcmask 261120
    %v165 = vsel %vm163, 0.0, 0
    %167 = vmatprep.subr.mxu0 0.0
    %168 = vmatpush1.msra.mxu0 %v159
    %169 = vmatprep.subr.mxu0 0.0
    %170 = vmatpush1.msra.mxu0 %v160
    %171 = vmatprep.subr.mxu0 0.0
    %172 = vmatpush1.msra.mxu0 %v161
    %173 = vmatprep.subr.mxu0 0.0
    %174 = vmatpush1.msra.mxu0 %v162
    %175 = vmatprep.subr.mxu0 0.0
    %176 = vmatpush1.msra.mxu0 0.0
    %177 = vmatprep.subr.mxu0 0.0
    %178 = vmatpush1.msra.mxu0 0.0
    %179 = vmatprep.subr.mxu0 0.0
    %180 = vmatpush1.msra.mxu0 0.0
    %181 = vmatprep.subr.mxu0 0.0
    %182 = vmatpush1.msra.mxu0 0.0
    %183 = vmatprep.subr.mxu0 0.0
    %184 = vmatpush1.msra.mxu0 0.0
    %185 = vmatprep.subr.mxu0 0.0
    %186 = vmatpush1.msra.mxu0 0.0
    %187 = vmatprep.subr.mxu0 0.0
    %188 = vmatpush1.msra.mxu0 0.0
    %189 = vmatprep.subr.mxu0 0.0
    %190 = vmatpush1.msra.mxu0 0.0
    %191 = vmatprep.subr.mxu0 0.0
    %192 = vmatpush1.msra.mxu0 0.0
    %193 = vmatprep.subr.mxu0 0.0
    %194 = vmatpush1.msra.mxu0 0.0
    %195 = vmatprep.subr.mxu0 0.0
    %196 = vmatpush1.msra.mxu0 0.0
    %197 = vmatprep.subr.mxu0 0.0
    %198 = vmatpush1.msra.mxu0 0.0
    %199 = vmatprep.subr.mxu0 0.0
    %200 = vmatpush1.msra.mxu0 0.0
    %201 = vmatprep.subr.mxu0 0.0
    %202 = vmatpush1.msra.mxu0 0.0
    %203 = vmatprep.subr.mxu0 0.0
    %204 = vmatpush1.msra.mxu0 0.0
    %205 = vmatprep.subr.mxu0 0.0
    %206 = vmatpush1.msra.mxu0 0.0
    %207 = vmatprep.subr.mxu0 0.0
    %208 = vmatpush1.msra.mxu0 0.0
    %209 = vmatprep.subr.mxu0 0.0
    %210 = vmatpush1.msra.mxu0 0.0
    %211 = vmatprep.subr.mxu0 0.0
    %212 = vmatpush1.msra.mxu0 0.0
    %213 = vmatprep.subr.mxu0 0.0
    %214 = vmatpush1.msra.mxu0 0.0
    %215 = vmatprep.subr.mxu0 0.0
    %216 = vmatpush1.msra.mxu0 0.0
    %217 = vmatprep.subr.mxu0 0.0
    %218 = vmatpush1.msra.mxu0 0.0
    %219 = vmatprep.subr.mxu0 0.0
    %220 = vmatpush1.msra.mxu0 0.0
    %221 = vmatprep.subr.mxu0 0.0
    %222 = vmatpush1.msra.mxu0 0.0
    %223 = vmatprep.subr.mxu0 0.0
    %224 = vmatpush1.msra.mxu0 0.0
    %225 = vmatprep.subr.mxu0 0.0
    %226 = vmatpush1.msra.mxu0 0.0
    %227 = vmatprep.subr.mxu0 0.0
    %228 = vmatpush1.msra.mxu0 0.0
    %229 = vmatprep.subr.mxu0 0.0
    %230 = vmatpush1.msra.mxu0 0.0
    %231 = vmatprep.mubr.f32.mxu0 0.0
    %232 = vmatmul.mubr.f32.gmra.mrb[0].mxu0 %v165
    %v233 = vpop.f32.mrb[0].mxu0
    %v234 = vadd.f32 0.0, %v233
    %v235 = vpop.f32.mrb[0].mxu0
    %236 = vdwg.mxu0
    %v237 = vadd.f32 %v151, %v234
    %v238 = vxor.u32 %v237, 2147483648
    %v239 = vmul.f32 %v238, 1.442695
    %v240 = vpow.pop %v239
    %v241 = vadd.f32 %v240, 1.0
    %v242 = vrcp.pop %v241
    %v243 = vmul.f32 1.0, %v242
    %v244 = vtanh.pop %v237
    %v245 = vmul.f32 %v243, 0.0
    %247 = vrot.lane.b32.xlu0 %v244, 64
    %v248 = vpop.permute.xlu0 %247
    %v250 = vmul.f32 %v243, %v248
    %252 = vrot.lane.b32.xlu0 %v250, 32
    %v253 = vpop.permute.xlu0 %252
    %v255 = vadd.f32 %v245, %v253
    %v256 = vtanh.pop %v255
    %258 = vrot.lane.b32.xlu0 %v256, 64
    %v259 = vpop.permute.xlu0 %258
    %v261 = vmul.f32 %v243, %v259
    %263 = vrot.lane.b32.xlu0 %v261, 32
    %v264 = vpop.permute.xlu0 %263
    %vm266 = vcmask 254976
    %267 = vst.msk [vmem:[#allocation2] sm:$0x3] %vm266, %v264
    %v268 = vsel %vm163, %v264, 0
    %270 = vmatprep.subr.mxu0 0.0
    %271 = vmatpush1.msra.mxu0 %v159
    %272 = vmatprep.subr.mxu0 0.0
    %273 = vmatpush1.msra.mxu0 %v160
    %274 = vmatprep.subr.mxu0 0.0
    %275 = vmatpush1.msra.mxu0 %v161
    %276 = vmatprep.subr.mxu0 0.0
    %277 = vmatpush1.msra.mxu0 %v162
    %278 = vmatprep.subr.mxu0 0.0
    %279 = vmatpush1.msra.mxu0 0.0
    %280 = vmatprep.subr.mxu0 0.0
    %281 = vmatpush1.msra.mxu0 0.0
    %282 = vmatprep.subr.mxu0 0.0
    %283 = vmatpush1.msra.mxu0 0.0
    %284 = vmatprep.subr.mxu0 0.0
    %285 = vmatpush1.msra.mxu0 0.0
    %286 = vmatprep.subr.mxu0 0.0
    %287 = vmatpush1.msra.mxu0 0.0
    %288 = vmatprep.subr.mxu0 0.0
    %289 = vmatpush1.msra.mxu0 0.0
    %290 = vmatprep.subr.mxu0 0.0
    %291 = vmatpush1.msra.mxu0 0.0
    %292 = vmatprep.subr.mxu0 0.0
    %293 = vmatpush1.msra.mxu0 0.0
    %294 = vmatprep.subr.mxu0 0.0
    %295 = vmatpush1.msra.mxu0 0.0
    %296 = vmatprep.subr.mxu0 0.0
    %297 = vmatpush1.msra.mxu0 0.0
    %298 = vmatprep.subr.mxu0 0.0
    %299 = vmatpush1.msra.mxu0 0.0
    %300 = vmatprep.subr.mxu0 0.0
    %301 = vmatpush1.msra.mxu0 0.0
    %302 = vmatprep.subr.mxu0 0.0
    %303 = vmatpush1.msra.mxu0 0.0
    %304 = vmatprep.subr.mxu0 0.0
    %305 = vmatpush1.msra.mxu0 0.0
    %306 = vmatprep.subr.mxu0 0.0
    %307 = vmatpush1.msra.mxu0 0.0
    %308 = vmatprep.subr.mxu0 0.0
    %309 = vmatpush1.msra.mxu0 0.0
    %310 = vmatprep.subr.mxu0 0.0
    %311 = vmatpush1.msra.mxu0 0.0
    %312 = vmatprep.subr.mxu0 0.0
    %313 = vmatpush1.msra.mxu0 0.0
    %314 = vmatprep.subr.mxu0 0.0
    %315 = vmatpush1.msra.mxu0 0.0
    %316 = vmatprep.subr.mxu0 0.0
    %317 = vmatpush1.msra.mxu0 0.0
    %318 = vmatprep.subr.mxu0 0.0
    %319 = vmatpush1.msra.mxu0 0.0
    %320 = vmatprep.subr.mxu0 0.0
    %321 = vmatpush1.msra.mxu0 0.0
    %322 = vmatprep.subr.mxu0 0.0
    %323 = vmatpush1.msra.mxu0 0.0
    %324 = vmatprep.subr.mxu0 0.0
    %325 = vmatpush1.msra.mxu0 0.0
    %326 = vmatprep.subr.mxu0 0.0
    %327 = vmatpush1.msra.mxu0 0.0
    %328 = vmatprep.subr.mxu0 0.0
    %329 = vmatpush1.msra.mxu0 0.0
    %330 = vmatprep.subr.mxu0 0.0
    %331 = vmatpush1.msra.mxu0 0.0
    %332 = vmatprep.subr.mxu0 0.0
    %333 = vmatpush1.msra.mxu0 0.0
    %334 = vmatprep.mubr.f32.mxu0 0.0
    %335 = vmatmul.mubr.f32.gmra.mrb[0].mxu0 %v268
    %v336 = vpop.f32.mrb[0].mxu0
    %v337 = vadd.f32 0.0, %v336
    %v338 = vpop.f32.mrb[0].mxu0
    %339 = vdwg.mxu0
    %v341 = vrot.slane %v337, 6
    %v343 = vadd.f32 %v151, %v341
    %v344 = vxor.u32 %v343, 2147483648
    %v345 = vmul.f32 %v344, 1.442695
    %v346 = vpow.pop %v345
    %v347 = vadd.f32 %v346, 1.0
    %v348 = vrcp.pop %v347
    %v349 = vmul.f32 1.0, %v348
    %v350 = vtanh.pop %v343
    %v352 = vrot.slane %v255, 6
    %v354 = vmul.f32 %v349, %v352
    %356 = vrot.lane.b32.xlu0 %v350, 64
    %v357 = vpop.permute.xlu0 %356
    %v359 = vmul.f32 %v349, %v357
    %361 = vrot.lane.b32.xlu0 %v359, 32
    %v362 = vpop.permute.xlu0 %361
    %v364 = vadd.f32 %v354, %v362
    %v365 = vtanh.pop %v364
    %367 = vrot.lane.b32.xlu0 %v365, 64
    %v368 = vpop.permute.xlu0 %367
    %v370 = vmul.f32 %v349, %v368
    %372 = vrot.lane.b32.xlu0 %v370, 32
    %v373 = vpop.permute.xlu0 %372
    %vm375 = vcmask 257026
    %376 = vst.msk [vmem:[#allocation2] sm:$0xc] %vm375, %v373
    %v377 = vrot.slane %v370, 2
    %378 = vrot.lane.b32.xlu0 %v377, 32
    %v379 = vpop.permute.xlu0 %378
    %v380 = vsel %vm163, %v379, 0
    %382 = vmatprep.subr.mxu0 0.0
    %383 = vmatpush1.msra.mxu0 %v159
    %384 = vmatprep.subr.mxu0 0.0
    %385 = vmatpush1.msra.mxu0 %v160
    %386 = vmatprep.subr.mxu0 0.0
    %387 = vmatpush1.msra.mxu0 %v161
    %388 = vmatprep.subr.mxu0 0.0
    %389 = vmatpush1.msra.mxu0 %v162
    %390 = vmatprep.subr.mxu0 0.0
    %391 = vmatpush1.msra.mxu0 0.0
    %392 = vmatprep.subr.mxu0 0.0
    %393 = vmatpush1.msra.mxu0 0.0
    %394 = vmatprep.subr.mxu0 0.0
    %395 = vmatpush1.msra.mxu0 0.0
    %396 = vmatprep.subr.mxu0 0.0
    %397 = vmatpush1.msra.mxu0 0.0
    %398 = vmatprep.subr.mxu0 0.0
    %399 = vmatpush1.msra.mxu0 0.0
    %400 = vmatprep.subr.mxu0 0.0
    %401 = vmatpush1.msra.mxu0 0.0
    %402 = vmatprep.subr.mxu0 0.0
    %403 = vmatpush1.msra.mxu0 0.0
    %404 = vmatprep.subr.mxu0 0.0
    %405 = vmatpush1.msra.mxu0 0.0
    %406 = vmatprep.subr.mxu0 0.0
    %407 = vmatpush1.msra.mxu0 0.0
    %408 = vmatprep.subr.mxu0 0.0
    %409 = vmatpush1.msra.mxu0 0.0
    %410 = vmatprep.subr.mxu0 0.0
    %411 = vmatpush1.msra.mxu0 0.0
    %412 = vmatprep.subr.mxu0 0.0
    %413 = vmatpush1.msra.mxu0 0.0
    %414 = vmatprep.subr.mxu0 0.0
    %415 = vmatpush1.msra.mxu0 0.0
    %416 = vmatprep.subr.mxu0 0.0
    %417 = vmatpush1.msra.mxu0 0.0
    %418 = vmatprep.subr.mxu0 0.0
    %419 = vmatpush1.msra.mxu0 0.0
    %420 = vmatprep.subr.mxu0 0.0
    %421 = vmatpush1.msra.mxu0 0.0
    %422 = vmatprep.subr.mxu0 0.0
    %423 = vmatpush1.msra.mxu0 0.0
    %424 = vmatprep.subr.mxu0 0.0
    %425 = vmatpush1.msra.mxu0 0.0
    %426 = vmatprep.subr.mxu0 0.0
    %427 = vmatpush1.msra.mxu0 0.0
    %428 = vmatprep.subr.mxu0 0.0
    %429 = vmatpush1.msra.mxu0 0.0
    %430 = vmatprep.subr.mxu0 0.0
    %431 = vmatpush1.msra.mxu0 0.0
    %432 = vmatprep.subr.mxu0 0.0
    %433 = vmatpush1.msra.mxu0 0.0
    %434 = vmatprep.subr.mxu0 0.0
    %435 = vmatpush1.msra.mxu0 0.0
    %436 = vmatprep.subr.mxu0 0.0
    %437 = vmatpush1.msra.mxu0 0.0
    %438 = vmatprep.subr.mxu0 0.0
    %439 = vmatpush1.msra.mxu0 0.0
    %440 = vmatprep.subr.mxu0 0.0
    %441 = vmatpush1.msra.mxu0 0.0
    %442 = vmatprep.subr.mxu0 0.0
    %443 = vmatpush1.msra.mxu0 0.0
    %444 = vmatprep.subr.mxu0 0.0
    %445 = vmatpush1.msra.mxu0 0.0
    %446 = vmatprep.mubr.f32.mxu0 0.0
    %447 = vmatmul.mubr.f32.gmra.mrb[0].mxu0 %v380
    %v448 = vpop.f32.mrb[0].mxu0
    %v449 = vadd.f32 0.0, %v448
    %v450 = vpop.f32.mrb[0].mxu0
    %451 = vdwg.mxu0
    %v453 = vrot.slane %v449, 4
    %v455 = vadd.f32 %v151, %v453
    %v456 = vxor.u32 %v455, 2147483648
    %v457 = vmul.f32 %v456, 1.442695
    %v458 = vpow.pop %v457
    %v459 = vadd.f32 %v458, 1.0
    %v460 = vrcp.pop %v459
    %v461 = vmul.f32 1.0, %v460
    %v462 = vtanh.pop %v455
    %v464 = vrot.slane %v364, 6
    %v466 = vmul.f32 %v461, %v464
    %468 = vrot.lane.b32.xlu0 %v462, 64
    %v469 = vpop.permute.xlu0 %468
    %v471 = vmul.f32 %v461, %v469
    %473 = vrot.lane.b32.xlu0 %v471, 32
    %v474 = vpop.permute.xlu0 %473
    %v476 = vadd.f32 %v466, %v474
    %v477 = vtanh.pop %v476
    %479 = vrot.lane.b32.xlu0 %v477, 64
    %v480 = vpop.permute.xlu0 %479
    %v482 = vmul.f32 %v461, %v480
    %484 = vrot.lane.b32.xlu0 %v482, 32
    %v485 = vpop.permute.xlu0 %484
    %vm487 = vcmask 259076
    %488 = vst.msk [vmem:[#allocation2] sm:$0x30] %vm487, %v485
    %v489 = vrot.slane %v482, 4
    %490 = vrot.lane.b32.xlu0 %v489, 32
    %v491 = vpop.permute.xlu0 %490
    %v492 = vsel %vm163, %v491, 0
    %494 = vmatprep.subr.mxu0 0.0
    %495 = vmatpush1.msra.mxu0 %v159
    %496 = vmatprep.subr.mxu0 0.0
    %497 = vmatpush1.msra.mxu0 %v160
    %498 = vmatprep.subr.mxu0 0.0
    %499 = vmatpush1.msra.mxu0 %v161
    %500 = vmatprep.subr.mxu0 0.0
    %501 = vmatpush1.msra.mxu0 %v162
    %502 = vmatprep.subr.mxu0 0.0
    %503 = vmatpush1.msra.mxu0 0.0
    %504 = vmatprep.subr.mxu0 0.0
    %505 = vmatpush1.msra.mxu0 0.0
    %506 = vmatprep.subr.mxu0 0.0
    %507 = vmatpush1.msra.mxu0 0.0
    %508 = vmatprep.subr.mxu0 0.0
    %509 = vmatpush1.msra.mxu0 0.0
    %510 = vmatprep.subr.mxu0 0.0
    %511 = vmatpush1.msra.mxu0 0.0
    %512 = vmatprep.subr.mxu0 0.0
    %513 = vmatpush1.msra.mxu0 0.0
    %514 = vmatprep.subr.mxu0 0.0
    %515 = vmatpush1.msra.mxu0 0.0
    %516 = vmatprep.subr.mxu0 0.0
    %517 = vmatpush1.msra.mxu0 0.0
    %518 = vmatprep.subr.mxu0 0.0
    %519 = vmatpush1.msra.mxu0 0.0
    %520 = vmatprep.subr.mxu0 0.0
    %521 = vmatpush1.msra.mxu0 0.0
    %522 = vmatprep.subr.mxu0 0.0
    %523 = vmatpush1.msra.mxu0 0.0
    %524 = vmatprep.subr.mxu0 0.0
    %525 = vmatpush1.msra.mxu0 0.0
    %526 = vmatprep.subr.mxu0 0.0
    %527 = vmatpush1.msra.mxu0 0.0
    %528 = vmatprep.subr.mxu0 0.0
    %529 = vmatpush1.msra.mxu0 0.0
    %530 = vmatprep.subr.mxu0 0.0
    %531 = vmatpush1.msra.mxu0 0.0
    %532 = vmatprep.subr.mxu0 0.0
    %533 = vmatpush1.msra.mxu0 0.0
    %534 = vmatprep.subr.mxu0 0.0
    %535 = vmatpush1.msra.mxu0 0.0
    %536 = vmatprep.subr.mxu0 0.0
    %537 = vmatpush1.msra.mxu0 0.0
    %538 = vmatprep.subr.mxu0 0.0
    %539 = vmatpush1.msra.mxu0 0.0
    %540 = vmatprep.subr.mxu0 0.0
    %541 = vmatpush1.msra.mxu0 0.0
    %542 = vmatprep.subr.mxu0 0.0
    %543 = vmatpush1.msra.mxu0 0.0
    %544 = vmatprep.subr.mxu0 0.0
    %545 = vmatpush1.msra.mxu0 0.0
    %546 = vmatprep.subr.mxu0 0.0
    %547 = vmatpush1.msra.mxu0 0.0
    %548 = vmatprep.subr.mxu0 0.0
    %549 = vmatpush1.msra.mxu0 0.0
    %550 = vmatprep.subr.mxu0 0.0
    %551 = vmatpush1.msra.mxu0 0.0
    %552 = vmatprep.subr.mxu0 0.0
    %553 = vmatpush1.msra.mxu0 0.0
    %554 = vmatprep.subr.mxu0 0.0
    %555 = vmatpush1.msra.mxu0 0.0
    %556 = vmatprep.subr.mxu0 0.0
    %557 = vmatpush1.msra.mxu0 0.0
    %558 = vmatprep.mubr.f32.mxu0 0.0
    %559 = vmatmul.mubr.f32.gmra.mrb[0].mxu0 %v492
    %v560 = vpop.f32.mrb[0].mxu0
    %v561 = vadd.f32 0.0, %v560
    %v562 = vpop.f32.mrb[0].mxu0
    %563 = vdwg.mxu0
    %v565 = vrot.slane %v561, 2
    %v567 = vadd.f32 %v151, %v565
    %v568 = vxor.u32 %v567, 2147483648
    %v569 = vmul.f32 %v568, 1.442695
    %v570 = vpow.pop %v569
    %v571 = vadd.f32 %v570, 1.0
    %v572 = vrcp.pop %v571
    %v573 = vmul.f32 1.0, %v572
    %v574 = vtanh.pop %v567
    %v576 = vrot.slane %v476, 6
    %v578 = vmul.f32 %v573, %v576
    %580 = vrot.lane.b32.xlu0 %v574, 64
    %v581 = vpop.permute.xlu0 %580
    %v583 = vmul.f32 %v573, %v581
    %585 = vrot.lane.b32.xlu0 %v583, 32
    %v586 = vpop.permute.xlu0 %585
    %v588 = vadd.f32 %v578, %v586
    %v589 = vtanh.pop %v588
    %591 = vrot.lane.b32.xlu0 %v589, 64
    %v592 = vpop.permute.xlu0 %591
    %v594 = vmul.f32 %v573, %v592
    %596 = vrot.lane.b32.xlu0 %v594, 32
    %v597 = vpop.permute.xlu0 %596
    %vm599 = vcmask 261126
    %600 = vst.msk [vmem:[#allocation2] sm:$0xc0] %vm599, %v597
    %v601 = vrot.slane %v594, 6
    %602 = vrot.lane.b32.xlu0 %v601, 32
    %v603 = vpop.permute.xlu0 %602
    %v604 = vsel %vm163, %v603, 0
    %606 = vmatprep.subr.mxu0 0.0
    %607 = vmatpush1.msra.mxu0 %v159
    %608 = vmatprep.subr.mxu0 0.0
    %609 = vmatpush1.msra.mxu0 %v160
    %610 = vmatprep.subr.mxu0 0.0
    %611 = vmatpush1.msra.mxu0 %v161
    %612 = vmatprep.subr.mxu0 0.0
    %613 = vmatpush1.msra.mxu0 %v162
    %614 = vmatprep.subr.mxu0 0.0
    %615 = vmatpush1.msra.mxu0 0.0
    %616 = vmatprep.subr.mxu0 0.0
    %617 = vmatpush1.msra.mxu0 0.0
    %618 = vmatprep.subr.mxu0 0.0
    %619 = vmatpush1.msra.mxu0 0.0
    %620 = vmatprep.subr.mxu0 0.0
    %621 = vmatpush1.msra.mxu0 0.0
    %622 = vmatprep.subr.mxu0 0.0
    %623 = vmatpush1.msra.mxu0 0.0
    %624 = vmatprep.subr.mxu0 0.0
    %625 = vmatpush1.msra.mxu0 0.0
    %626 = vmatprep.subr.mxu0 0.0
    %627 = vmatpush1.msra.mxu0 0.0
    %628 = vmatprep.subr.mxu0 0.0
    %629 = vmatpush1.msra.mxu0 0.0
    %630 = vmatprep.subr.mxu0 0.0
    %631 = vmatpush1.msra.mxu0 0.0
    %632 = vmatprep.subr.mxu0 0.0
    %633 = vmatpush1.msra.mxu0 0.0
    %634 = vmatprep.subr.mxu0 0.0
    %635 = vmatpush1.msra.mxu0 0.0
    %636 = vmatprep.subr.mxu0 0.0
    %637 = vmatpush1.msra.mxu0 0.0
    %638 = vmatprep.subr.mxu0 0.0
    %639 = vmatpush1.msra.mxu0 0.0
    %640 = vmatprep.subr.mxu0 0.0
    %641 = vmatpush1.msra.mxu0 0.0
    %642 = vmatprep.subr.mxu0 0.0
    %643 = vmatpush1.msra.mxu0 0.0
    %644 = vmatprep.subr.mxu0 0.0
    %645 = vmatpush1.msra.mxu0 0.0
    %646 = vmatprep.subr.mxu0 0.0
    %647 = vmatpush1.msra.mxu0 0.0
    %648 = vmatprep.subr.mxu0 0.0
    %649 = vmatpush1.msra.mxu0 0.0
    %650 = vmatprep.subr.mxu0 0.0
    %651 = vmatpush1.msra.mxu0 0.0
    %652 = vmatprep.subr.mxu0 0.0
    %653 = vmatpush1.msra.mxu0 0.0
    %654 = vmatprep.subr.mxu0 0.0
    %655 = vmatpush1.msra.mxu0 0.0
    %656 = vmatprep.subr.mxu0 0.0
    %657 = vmatpush1.msra.mxu0 0.0
    %658 = vmatprep.subr.mxu0 0.0
    %659 = vmatpush1.msra.mxu0 0.0
    %660 = vmatprep.subr.mxu0 0.0
    %661 = vmatpush1.msra.mxu0 0.0
    %662 = vmatprep.subr.mxu0 0.0
    %663 = vmatpush1.msra.mxu0 0.0
    %664 = vmatprep.subr.mxu0 0.0
    %665 = vmatpush1.msra.mxu0 0.0
    %666 = vmatprep.subr.mxu0 0.0
    %667 = vmatpush1.msra.mxu0 0.0
    %668 = vmatprep.subr.mxu0 0.0
    %669 = vmatpush1.msra.mxu0 0.0
    %670 = vmatprep.mubr.f32.mxu0 0.0
    %671 = vmatmul.mubr.f32.gmra.mrb[0].mxu0 %v604
    %v672 = vpop.f32.mrb[0].mxu0
    %v673 = vadd.f32 0.0, %v672
    %v674 = vpop.f32.mrb[0].mxu0
    %675 = vdwg.mxu0
    %v676 = vadd.f32 %v156, %v673
    %v677 = vxor.u32 %v676, 2147483648
    %v678 = vmul.f32 %v677, 1.442695
    %v679 = vpow.pop %v678
    %v680 = vadd.f32 %v679, 1.0
    %v681 = vrcp.pop %v680
    %v682 = vmul.f32 1.0, %v681
    %v683 = vtanh.pop %v676
    %v685 = vrot.slane %v588, 6
    %v687 = vmul.f32 %v682, %v685
    %689 = vrot.lane.b32.xlu0 %v683, 64
    %v690 = vpop.permute.xlu0 %689
    %v692 = vmul.f32 %v682, %v690
    %694 = vrot.lane.b32.xlu0 %v692, 32
    %v695 = vpop.permute.xlu0 %694
    %v697 = vadd.f32 %v687, %v695
    %v698 = vtanh.pop %v697
    %700 = vrot.lane.b32.xlu0 %v698, 64
    %v701 = vpop.permute.xlu0 %700
    %v703 = vmul.f32 %v682, %v701
    %705 = vrot.lane.b32.xlu0 %v703, 32
    %v706 = vpop.permute.xlu0 %705
    %708 = vst.msk [vmem:[#allocation2 + $0x8] sm:$0x3] %vm266, %v706
    %v709 = vsel %vm163, %v706, 0
    %711 = vmatprep.subr.mxu0 0.0
    %712 = vmatpush1.msra.mxu0 %v159
    %713 = vmatprep.subr.mxu0 0.0
    %714 = vmatpush1.msra.mxu0 %v160
    %715 = vmatprep.subr.mxu0 0.0
    %716 = vmatpush1.msra.mxu0 %v161
    %717 = vmatprep.subr.mxu0 0.0
    %718 = vmatpush1.msra.mxu0 %v162
    %719 = vmatprep.subr.mxu0 0.0
    %720 = vmatpush1.msra.mxu0 0.0
    %721 = vmatprep.subr.mxu0 0.0
    %722 = vmatpush1.msra.mxu0 0.0
    %723 = vmatprep.subr.mxu0 0.0
    %724 = vmatpush1.msra.mxu0 0.0
    %725 = vmatprep.subr.mxu0 0.0
    %726 = vmatpush1.msra.mxu0 0.0
    %727 = vmatprep.subr.mxu0 0.0
    %728 = vmatpush1.msra.mxu0 0.0
    %729 = vmatprep.subr.mxu0 0.0
    %730 = vmatpush1.msra.mxu0 0.0
    %731 = vmatprep.subr.mxu0 0.0
    %732 = vmatpush1.msra.mxu0 0.0
    %733 = vmatprep.subr.mxu0 0.0
    %734 = vmatpush1.msra.mxu0 0.0
    %735 = vmatprep.subr.mxu0 0.0
    %736 = vmatpush1.msra.mxu0 0.0
    %737 = vmatprep.subr.mxu0 0.0
    %738 = vmatpush1.msra.mxu0 0.0
    %739 = vmatprep.subr.mxu0 0.0
    %740 = vmatpush1.msra.mxu0 0.0
    %741 = vmatprep.subr.mxu0 0.0
    %742 = vmatpush1.msra.mxu0 0.0
    %743 = vmatprep.subr.mxu0 0.0
    %744 = vmatpush1.msra.mxu0 0.0
    %745 = vmatprep.subr.mxu0 0.0
    %746 = vmatpush1.msra.mxu0 0.0
    %747 = vmatprep.subr.mxu0 0.0
    %748 = vmatpush1.msra.mxu0 0.0
    %749 = vmatprep.subr.mxu0 0.0
    %750 = vmatpush1.msra.mxu0 0.0
    %751 = vmatprep.subr.mxu0 0.0
    %752 = vmatpush1.msra.mxu0 0.0
    %753 = vmatprep.subr.mxu0 0.0
    %754 = vmatpush1.msra.mxu0 0.0
    %755 = vmatprep.subr.mxu0 0.0
    %756 = vmatpush1.msra.mxu0 0.0
    %757 = vmatprep.subr.mxu0 0.0
    %758 = vmatpush1.msra.mxu0 0.0
    %759 = vmatprep.subr.mxu0 0.0
    %760 = vmatpush1.msra.mxu0 0.0
    %761 = vmatprep.subr.mxu0 0.0
    %762 = vmatpush1.msra.mxu0 0.0
    %763 = vmatprep.subr.mxu0 0.0
    %764 = vmatpush1.msra.mxu0 0.0
    %765 = vmatprep.subr.mxu0 0.0
    %766 = vmatpush1.msra.mxu0 0.0
    %767 = vmatprep.subr.mxu0 0.0
    %768 = vmatpush1.msra.mxu0 0.0
    %769 = vmatprep.subr.mxu0 0.0
    %770 = vmatpush1.msra.mxu0 0.0
    %771 = vmatprep.subr.mxu0 0.0
    %772 = vmatpush1.msra.mxu0 0.0
    %773 = vmatprep.subr.mxu0 0.0
    %774 = vmatpush1.msra.mxu0 0.0
    %775 = vmatprep.mubr.f32.mxu0 0.0
    %776 = vmatmul.mubr.f32.gmra.mrb[0].mxu0 %v709
    %v777 = vpop.f32.mrb[0].mxu0
    %v778 = vadd.f32 0.0, %v777
    %v779 = vpop.f32.mrb[0].mxu0
    %780 = vdwg.mxu0
    %v782 = vrot.slane %v778, 6
    %v784 = vadd.f32 %v156, %v782
    %v785 = vxor.u32 %v784, 2147483648
    %v786 = vmul.f32 %v785, 1.442695
    %v787 = vpow.pop %v786
    %v788 = vadd.f32 %v787, 1.0
    %v789 = vrcp.pop %v788
    %v790 = vmul.f32 1.0, %v789
    %v791 = vtanh.pop %v784
    %v793 = vrot.slane %v697, 6
    %v795 = vmul.f32 %v790, %v793
    %797 = vrot.lane.b32.xlu0 %v791, 64
    %v798 = vpop.permute.xlu0 %797
    %v800 = vmul.f32 %v790, %v798
    %802 = vrot.lane.b32.xlu0 %v800, 32
    %v803 = vpop.permute.xlu0 %802
    %v805 = vadd.f32 %v795, %v803
    %v806 = vtanh.pop %v805
    %808 = vrot.lane.b32.xlu0 %v806, 64
    %v809 = vpop.permute.xlu0 %808
    %v811 = vmul.f32 %v790, %v809
    %813 = vrot.lane.b32.xlu0 %v811, 32
    %v814 = vpop.permute.xlu0 %813
    %816 = vst.msk [vmem:[#allocation2 + $0x8] sm:$0xc] %vm375, %v814
    %v817 = vrot.slane %v811, 2
    %818 = vrot.lane.b32.xlu0 %v817, 32
    %v819 = vpop.permute.xlu0 %818
    %v820 = vsel %vm163, %v819, 0
    %822 = vmatprep.subr.mxu0 0.0
    %823 = vmatpush1.msra.mxu0 %v159
    %824 = vmatprep.subr.mxu0 0.0
    %825 = vmatpush1.msra.mxu0 %v160
    %826 = vmatprep.subr.mxu0 0.0
    %827 = vmatpush1.msra.mxu0 %v161
    %828 = vmatprep.subr.mxu0 0.0
    %829 = vmatpush1.msra.mxu0 %v162
    %830 = vmatprep.subr.mxu0 0.0
    %831 = vmatpush1.msra.mxu0 0.0
    %832 = vmatprep.subr.mxu0 0.0
    %833 = vmatpush1.msra.mxu0 0.0
    %834 = vmatprep.subr.mxu0 0.0
    %835 = vmatpush1.msra.mxu0 0.0
    %836 = vmatprep.subr.mxu0 0.0
    %837 = vmatpush1.msra.mxu0 0.0
    %838 = vmatprep.subr.mxu0 0.0
    %839 = vmatpush1.msra.mxu0 0.0
    %840 = vmatprep.subr.mxu0 0.0
    %841 = vmatpush1.msra.mxu0 0.0
    %842 = vmatprep.subr.mxu0 0.0
    %843 = vmatpush1.msra.mxu0 0.0
    %844 = vmatprep.subr.mxu0 0.0
    %845 = vmatpush1.msra.mxu0 0.0
    %846 = vmatprep.subr.mxu0 0.0
    %847 = vmatpush1.msra.mxu0 0.0
    %848 = vmatprep.subr.mxu0 0.0
    %849 = vmatpush1.msra.mxu0 0.0
    %850 = vmatprep.subr.mxu0 0.0
    %851 = vmatpush1.msra.mxu0 0.0
    %852 = vmatprep.subr.mxu0 0.0
    %853 = vmatpush1.msra.mxu0 0.0
    %854 = vmatprep.subr.mxu0 0.0
    %855 = vmatpush1.msra.mxu0 0.0
    %856 = vmatprep.subr.mxu0 0.0
    %857 = vmatpush1.msra.mxu0 0.0
    %858 = vmatprep.subr.mxu0 0.0
    %859 = vmatpush1.msra.mxu0 0.0
    %860 = vmatprep.subr.mxu0 0.0
    %861 = vmatpush1.msra.mxu0 0.0
    %862 = vmatprep.subr.mxu0 0.0
    %863 = vmatpush1.msra.mxu0 0.0
    %864 = vmatprep.subr.mxu0 0.0
    %865 = vmatpush1.msra.mxu0 0.0
    %866 = vmatprep.subr.mxu0 0.0
    %867 = vmatpush1.msra.mxu0 0.0
    %868 = vmatprep.subr.mxu0 0.0
    %869 = vmatpush1.msra.mxu0 0.0
    %870 = vmatprep.subr.mxu0 0.0
    %871 = vmatpush1.msra.mxu0 0.0
    %872 = vmatprep.subr.mxu0 0.0
    %873 = vmatpush1.msra.mxu0 0.0
    %874 = vmatprep.subr.mxu0 0.0
    %875 = vmatpush1.msra.mxu0 0.0
    %876 = vmatprep.subr.mxu0 0.0
    %877 = vmatpush1.msra.mxu0 0.0
    %878 = vmatprep.subr.mxu0 0.0
    %879 = vmatpush1.msra.mxu0 0.0
    %880 = vmatprep.subr.mxu0 0.0
    %881 = vmatpush1.msra.mxu0 0.0
    %882 = vmatprep.subr.mxu0 0.0
    %883 = vmatpush1.msra.mxu0 0.0
    %884 = vmatprep.subr.mxu0 0.0
    %885 = vmatpush1.msra.mxu0 0.0
    %886 = vmatprep.mubr.f32.mxu0 0.0
    %887 = vmatmul.mubr.f32.gmra.mrb[0].mxu0 %v820
    %v888 = vpop.f32.mrb[0].mxu0
    %v889 = vadd.f32 0.0, %v888
    %v890 = vpop.f32.mrb[0].mxu0
    %891 = vdwg.mxu0
    %v893 = vrot.slane %v889, 4
    %v895 = vadd.f32 %v156, %v893
    %v896 = vxor.u32 %v895, 2147483648
    %v897 = vmul.f32 %v896, 1.442695
    %v898 = vpow.pop %v897
    %v899 = vadd.f32 %v898, 1.0
    %v900 = vrcp.pop %v899
    %v901 = vmul.f32 1.0, %v900
    %v902 = vtanh.pop %v895
    %v904 = vrot.slane %v805, 6
    %v906 = vmul.f32 %v901, %v904
    %908 = vrot.lane.b32.xlu0 %v902, 64
    %v909 = vpop.permute.xlu0 %908
    %v911 = vmul.f32 %v901, %v909
    %913 = vrot.lane.b32.xlu0 %v911, 32
    %v914 = vpop.permute.xlu0 %913
    %v916 = vadd.f32 %v906, %v914
    %v917 = vtanh.pop %v916
    %919 = vrot.lane.b32.xlu0 %v917, 64
    %v920 = vpop.permute.xlu0 %919
    %v922 = vmul.f32 %v901, %v920
    %924 = vrot.lane.b32.xlu0 %v922, 32
    %v925 = vpop.permute.xlu0 %924
    %927 = vst.msk [vmem:[#allocation2 + $0x8] sm:$0x30] %vm487, %v925
    %v928 = vrot.slane %v922, 4
    %929 = vrot.lane.b32.xlu0 %v928, 32
    %v930 = vpop.permute.xlu0 %929
    %v931 = vsel %vm163, %v930, 0
    %933 = vmatprep.subr.mxu0 0.0
    %934 = vmatpush1.msra.mxu0 %v159
    %935 = vmatprep.subr.mxu0 0.0
    %936 = vmatpush1.msra.mxu0 %v160
    %937 = vmatprep.subr.mxu0 0.0
    %938 = vmatpush1.msra.mxu0 %v161
    %939 = vmatprep.subr.mxu0 0.0
    %940 = vmatpush1.msra.mxu0 %v162
    %941 = vmatprep.subr.mxu0 0.0
    %942 = vmatpush1.msra.mxu0 0.0
    %943 = vmatprep.subr.mxu0 0.0
    %944 = vmatpush1.msra.mxu0 0.0
    %945 = vmatprep.subr.mxu0 0.0
    %946 = vmatpush1.msra.mxu0 0.0
    %947 = vmatprep.subr.mxu0 0.0
    %948 = vmatpush1.msra.mxu0 0.0
    %949 = vmatprep.subr.mxu0 0.0
    %950 = vmatpush1.msra.mxu0 0.0
    %951 = vmatprep.subr.mxu0 0.0
    %952 = vmatpush1.msra.mxu0 0.0
    %953 = vmatprep.subr.mxu0 0.0
    %954 = vmatpush1.msra.mxu0 0.0
    %955 = vmatprep.subr.mxu0 0.0
    %956 = vmatpush1.msra.mxu0 0.0
    %957 = vmatprep.subr.mxu0 0.0
    %958 = vmatpush1.msra.mxu0 0.0
    %959 = vmatprep.subr.mxu0 0.0
    %960 = vmatpush1.msra.mxu0 0.0
    %961 = vmatprep.subr.mxu0 0.0
    %962 = vmatpush1.msra.mxu0 0.0
    %963 = vmatprep.subr.mxu0 0.0
    %964 = vmatpush1.msra.mxu0 0.0
    %965 = vmatprep.subr.mxu0 0.0
    %966 = vmatpush1.msra.mxu0 0.0
    %967 = vmatprep.subr.mxu0 0.0
    %968 = vmatpush1.msra.mxu0 0.0
    %969 = vmatprep.subr.mxu0 0.0
    %970 = vmatpush1.msra.mxu0 0.0
    %971 = vmatprep.subr.mxu0 0.0
    %972 = vmatpush1.msra.mxu0 0.0
    %973 = vmatprep.subr.mxu0 0.0
    %974 = vmatpush1.msra.mxu0 0.0
    %975 = vmatprep.subr.mxu0 0.0
    %976 = vmatpush1.msra.mxu0 0.0
    %977 = vmatprep.subr.mxu0 0.0
    %978 = vmatpush1.msra.mxu0 0.0
    %979 = vmatprep.subr.mxu0 0.0
    %980 = vmatpush1.msra.mxu0 0.0
    %981 = vmatprep.subr.mxu0 0.0
    %982 = vmatpush1.msra.mxu0 0.0
    %983 = vmatprep.subr.mxu0 0.0
    %984 = vmatpush1.msra.mxu0 0.0
    %985 = vmatprep.subr.mxu0 0.0
    %986 = vmatpush1.msra.mxu0 0.0
    %987 = vmatprep.subr.mxu0 0.0
    %988 = vmatpush1.msra.mxu0 0.0
    %989 = vmatprep.subr.mxu0 0.0
    %990 = vmatpush1.msra.mxu0 0.0
    %991 = vmatprep.subr.mxu0 0.0
    %992 = vmatpush1.msra.mxu0 0.0
    %993 = vmatprep.subr.mxu0 0.0
    %994 = vmatpush1.msra.mxu0 0.0
    %995 = vmatprep.subr.mxu0 0.0
    %996 = vmatpush1.msra.mxu0 0.0
    %997 = vmatprep.mubr.f32.mxu0 0.0
    %998 = vmatmul.mubr.f32.gmra.mrb[0].mxu0 %v931
    %v999 = vpop.f32.mrb[0].mxu0
    %v1000 = vadd.f32 0.0, %v999
    %v1001 = vpop.f32.mrb[0].mxu0
    %1002 = vdwg.mxu0
    %v1004 = vrot.slane %v1000, 2
    %v1006 = vadd.f32 %v156, %v1004
    %v1007 = vxor.u32 %v1006, 2147483648
    %v1008 = vmul.f32 %v1007, 1.442695
    %v1009 = vpow.pop %v1008
    %v1010 = vadd.f32 %v1009, 1.0
    %v1011 = vrcp.pop %v1010
    %v1012 = vmul.f32 1.0, %v1011
    %v1013 = vtanh.pop %v1006
    %v1015 = vrot.slane %v916, 6
    %v1017 = vmul.f32 %v1012, %v1015
    %1019 = vrot.lane.b32.xlu0 %v1013, 64
    %v1020 = vpop.permute.xlu0 %1019
    %v1022 = vmul.f32 %v1012, %v1020
    %1024 = vrot.lane.b32.xlu0 %v1022, 32
    %v1025 = vpop.permute.xlu0 %1024
    %v1027 = vadd.f32 %v1017, %v1025
    %v1028 = vtanh.pop %v1027
    %1030 = vrot.lane.b32.xlu0 %v1028, 64
    %v1031 = vpop.permute.xlu0 %1030
    %v1033 = vmul.f32 %v1012, %v1031
    %1035 = vrot.lane.b32.xlu0 %v1033, 32
    %v1036 = vpop.permute.xlu0 %1035
    %1038 = vst.msk [vmem:[#allocation2 + $0x8] sm:$0xc0] %vm599, %v1036
    %v1039 = vld [vmem:[#allocation2] sm:$0xff]
    %v1040 = vld [vmem:[#allocation2 + $0x8] sm:$0xff]
    %v1041 = vld [vmem:[%s4] sm:$0xff]
    %v1042 = vld [vmem:[%s4 + $0x8] sm:$0xff]
    %v1043 = vld [vmem:[%s4 + $0x10] sm:$0xff]
    %v1044 = vld [vmem:[%s4 + $0x18] sm:$0xff]
    %v1045 = vld [vmem:[%s6] sm:$0x1]
    %v1047 = vlaneseq
    %v1048 = vshrl.u32 %v1047, 7
    %v1049 = vsub.s32 0, %v1048
    %v1050 = vrot.slane %v1045, %v1049
    %v1053 = vsel %vm163, %v1039, 0
    %v1056 = vsel %vm163, %v1040, 0
    %1058 = vmatprep.subr.mxu0 0.0
    %1059 = vmatpush1.msra.mxu0 %v1041
    %1060 = vmatprep.subr.mxu0 0.0
    %1061 = vmatpush1.msra.mxu0 %v1042
    %1062 = vmatprep.subr.mxu0 0.0
    %1063 = vmatpush1.msra.mxu0 %v1043
    %1064 = vmatprep.subr.mxu0 0.0
    %1065 = vmatpush1.msra.mxu0 %v1044
    %1066 = vmatprep.subr.mxu0 0.0
    %1067 = vmatpush1.msra.mxu0 0.0
    %1068 = vmatprep.subr.mxu0 0.0
    %1069 = vmatpush1.msra.mxu0 0.0
    %1070 = vmatprep.subr.mxu0 0.0
    %1071 = vmatpush1.msra.mxu0 0.0
    %1072 = vmatprep.subr.mxu0 0.0
    %1073 = vmatpush1.msra.mxu0 0.0
    %1074 = vmatprep.subr.mxu0 0.0
    %1075 = vmatpush1.msra.mxu0 0.0
    %1076 = vmatprep.subr.mxu0 0.0
    %1077 = vmatpush1.msra.mxu0 0.0
    %1078 = vmatprep.subr.mxu0 0.0
    %1079 = vmatpush1.msra.mxu0 0.0
    %1080 = vmatprep.subr.mxu0 0.0
    %1081 = vmatpush1.msra.mxu0 0.0
    %1082 = vmatprep.subr.mxu0 0.0
    %1083 = vmatpush1.msra.mxu0 0.0
    %1084 = vmatprep.subr.mxu0 0.0
    %1085 = vmatpush1.msra.mxu0 0.0
    %1086 = vmatprep.subr.mxu0 0.0
    %1087 = vmatpush1.msra.mxu0 0.0
    %1088 = vmatprep.subr.mxu0 0.0
    %1089 = vmatpush1.msra.mxu0 0.0
    %1090 = vmatprep.subr.mxu0 0.0
    %1091 = vmatpush1.msra.mxu0 0.0
    %1092 = vmatprep.subr.mxu0 0.0
    %1093 = vmatpush1.msra.mxu0 0.0
    %1094 = vmatprep.subr.mxu0 0.0
    %1095 = vmatpush1.msra.mxu0 0.0
    %1096 = vmatprep.subr.mxu0 0.0
    %1097 = vmatpush1.msra.mxu0 0.0
    %1098 = vmatprep.subr.mxu0 0.0
    %1099 = vmatpush1.msra.mxu0 0.0
    %1100 = vmatprep.subr.mxu0 0.0
    %1101 = vmatpush1.msra.mxu0 0.0
    %1102 = vmatprep.subr.mxu0 0.0
    %1103 = vmatpush1.msra.mxu0 0.0
    %1104 = vmatprep.subr.mxu0 0.0
    %1105 = vmatpush1.msra.mxu0 0.0
    %1106 = vmatprep.subr.mxu0 0.0
    %1107 = vmatpush1.msra.mxu0 0.0
    %1108 = vmatprep.subr.mxu0 0.0
    %1109 = vmatpush1.msra.mxu0 0.0
    %1110 = vmatprep.subr.mxu0 0.0
    %1111 = vmatpush1.msra.mxu0 0.0
    %1112 = vmatprep.subr.mxu0 0.0
    %1113 = vmatpush1.msra.mxu0 0.0
    %1114 = vmatprep.subr.mxu0 0.0
    %1115 = vmatpush1.msra.mxu0 0.0
    %1116 = vmatprep.subr.mxu0 0.0
    %1117 = vmatpush1.msra.mxu0 0.0
    %1118 = vmatprep.subr.mxu0 0.0
    %1119 = vmatpush1.msra.mxu0 0.0
    %1120 = vmatprep.subr.mxu0 0.0
    %1121 = vmatpush1.msra.mxu0 0.0
    %1122 = vmatprep.mubr.f32.mxu0 0.0
    %1123 = vmatmul.mubr.f32.gmra.mrb[0].mxu0 %v1053
    %v1124 = vpop.f32.mrb[0].mxu0
    %v1125 = vadd.f32 %v1050, %v1124
    %v1126 = vpop.f32.mrb[0].mxu0
    %1127 = vmatprep.mubr.f32.mxu0 0.0
    %1128 = vmatmul.mubr.f32.gmra.mrb[0].mxu0 %v1056
    %v1129 = vpop.f32.mrb[0].mxu0
    %v1130 = vadd.f32 %v1050, %v1129
    %v1131 = vpop.f32.mrb[0].mxu0
    %1132 = vdwg.mxu0
    %v1133 = vld [vmem:[%s5] sm:$0xff]
    %v1134 = vld [vmem:[%s5 + $0x8] sm:$0xff]
    %v1135 = vld [vmem:[%s5 + $0x10] sm:$0xff]
    %v1136 = vld [vmem:[%s5 + $0x18] sm:$0xff]
    %1137 = vmatprep.subr.mxu0 0.0
    %1138 = vmatpush1.msra.mxu0 %v1133
    %1139 = vmatprep.subr.mxu0 0.0
    %1140 = vmatpush1.msra.mxu0 %v1134
    %1141 = vmatprep.subr.mxu0 0.0
    %1142 = vmatpush1.msra.mxu0 %v1135
    %1143 = vmatprep.subr.mxu0 0.0
    %1144 = vmatpush1.msra.mxu0 %v1136
    %1145 = vmatprep.subr.mxu0 0.0
    %1146 = vmatpush1.msra.mxu0 0.0
    %1147 = vmatprep.subr.mxu0 0.0
    %1148 = vmatpush1.msra.mxu0 0.0
    %1149 = vmatprep.subr.mxu0 0.0
    %1150 = vmatpush1.msra.mxu0 0.0
    %1151 = vmatprep.subr.mxu0 0.0
    %1152 = vmatpush1.msra.mxu0 0.0
    %1153 = vmatprep.subr.mxu0 0.0
    %1154 = vmatpush1.msra.mxu0 0.0
    %1155 = vmatprep.subr.mxu0 0.0
    %1156 = vmatpush1.msra.mxu0 0.0
    %1157 = vmatprep.subr.mxu0 0.0
    %1158 = vmatpush1.msra.mxu0 0.0
    %1159 = vmatprep.subr.mxu0 0.0
    %1160 = vmatpush1.msra.mxu0 0.0
    %1161 = vmatprep.subr.mxu0 0.0
    %1162 = vmatpush1.msra.mxu0 0.0
    %1163 = vmatprep.subr.mxu0 0.0
    %1164 = vmatpush1.msra.mxu0 0.0
    %1165 = vmatprep.subr.mxu0 0.0
    %1166 = vmatpush1.msra.mxu0 0.0
    %1167 = vmatprep.subr.mxu0 0.0
    %1168 = vmatpush1.msra.mxu0 0.0
    %1169 = vmatprep.subr.mxu0 0.0
    %1170 = vmatpush1.msra.mxu0 0.0
    %1171 = vmatprep.subr.mxu0 0.0
    %1172 = vmatpush1.msra.mxu0 0.0
    %1173 = vmatprep.subr.mxu0 0.0
    %1174 = vmatpush1.msra.mxu0 0.0
    %1175 = vmatprep.subr.mxu0 0.0
    %1176 = vmatpush1.msra.mxu0 0.0
    %1177 = vmatprep.subr.mxu0 0.0
    %1178 = vmatpush1.msra.mxu0 0.0
    %1179 = vmatprep.subr.mxu0 0.0
    %1180 = vmatpush1.msra.mxu0 0.0
    %1181 = vmatprep.subr.mxu0 0.0
    %1182 = vmatpush1.msra.mxu0 0.0
    %1183 = vmatprep.subr.mxu0 0.0
    %1184 = vmatpush1.msra.mxu0 0.0
    %1185 = vmatprep.subr.mxu0 0.0
    %1186 = vmatpush1.msra.mxu0 0.0
    %1187 = vmatprep.subr.mxu0 0.0
    %1188 = vmatpush1.msra.mxu0 0.0
    %1189 = vmatprep.subr.mxu0 0.0
    %1190 = vmatpush1.msra.mxu0 0.0
    %1191 = vmatprep.subr.mxu0 0.0
    %1192 = vmatpush1.msra.mxu0 0.0
    %1193 = vmatprep.subr.mxu0 0.0
    %1194 = vmatpush1.msra.mxu0 0.0
    %1195 = vmatprep.subr.mxu0 0.0
    %1196 = vmatpush1.msra.mxu0 0.0
    %1197 = vmatprep.subr.mxu0 0.0
    %1198 = vmatpush1.msra.mxu0 0.0
    %1199 = vmatprep.subr.mxu0 0.0
    %1200 = vmatpush1.msra.mxu0 0.0
    %1201 = vmatprep.mubr.f32.mxu0 0.0
    %1202 = vmatmul.mubr.f32.gmra.mrb[0].mxu0 %v165
    %v1203 = vpop.f32.mrb[0].mxu0
    %v1204 = vadd.f32 0.0, %v1203
    %v1205 = vpop.f32.mrb[0].mxu0
    %1206 = vdwg.mxu0
    %v1207 = vadd.f32 %v1125, %v1204
    %v1208 = vxor.u32 %v1207, 2147483648
    %v1209 = vmul.f32 %v1208, 1.442695
    %v1210 = vpow.pop %v1209
    %v1211 = vadd.f32 %v1210, 1.0
    %v1212 = vrcp.pop %v1211
    %v1213 = vmul.f32 1.0, %v1212
    %v1214 = vtanh.pop %v1207
    %v1215 = vmul.f32 %v1213, 0.0
    %1217 = vrot.lane.b32.xlu0 %v1214, 64
    %v1218 = vpop.permute.xlu0 %1217
    %v1220 = vmul.f32 %v1213, %v1218
    %1222 = vrot.lane.b32.xlu0 %v1220, 32
    %v1223 = vpop.permute.xlu0 %1222
    %v1225 = vadd.f32 %v1215, %v1223
    %v1226 = vtanh.pop %v1225
    %1228 = vrot.lane.b32.xlu0 %v1226, 64
    %v1229 = vpop.permute.xlu0 %1228
    %v1231 = vmul.f32 %v1213, %v1229
    %1233 = vrot.lane.b32.xlu0 %v1231, 32
    %v1234 = vpop.permute.xlu0 %1233
    %1236 = vst.msk [vmem:[#allocation2] sm:$0x3] %vm266, %v1234
    %v1237 = vsel %vm163, %v1234, 0
    %1239 = vmatprep.subr.mxu0 0.0
    %1240 = vmatpush1.msra.mxu0 %v1133
    %1241 = vmatprep.subr.mxu0 0.0
    %1242 = vmatpush1.msra.mxu0 %v1134
    %1243 = vmatprep.subr.mxu0 0.0
    %1244 = vmatpush1.msra.mxu0 %v1135
    %1245 = vmatprep.subr.mxu0 0.0
    %1246 = vmatpush1.msra.mxu0 %v1136
    %1247 = vmatprep.subr.mxu0 0.0
    %1248 = vmatpush1.msra.mxu0 0.0
    %1249 = vmatprep.subr.mxu0 0.0
    %1250 = vmatpush1.msra.mxu0 0.0
    %1251 = vmatprep.subr.mxu0 0.0
    %1252 = vmatpush1.msra.mxu0 0.0
    %1253 = vmatprep.subr.mxu0 0.0
    %1254 = vmatpush1.msra.mxu0 0.0
    %1255 = vmatprep.subr.mxu0 0.0
    %1256 = vmatpush1.msra.mxu0 0.0
    %1257 = vmatprep.subr.mxu0 0.0
    %1258 = vmatpush1.msra.mxu0 0.0
    %1259 = vmatprep.subr.mxu0 0.0
    %1260 = vmatpush1.msra.mxu0 0.0
    %1261 = vmatprep.subr.mxu0 0.0
    %1262 = vmatpush1.msra.mxu0 0.0
    %1263 = vmatprep.subr.mxu0 0.0
    %1264 = vmatpush1.msra.mxu0 0.0
    %1265 = vmatprep.subr.mxu0 0.0
    %1266 = vmatpush1.msra.mxu0 0.0
    %1267 = vmatprep.subr.mxu0 0.0
    %1268 = vmatpush1.msra.mxu0 0.0
    %1269 = vmatprep.subr.mxu0 0.0
    %1270 = vmatpush1.msra.mxu0 0.0
    %1271 = vmatprep.subr.mxu0 0.0
    %1272 = vmatpush1.msra.mxu0 0.0
    %1273 = vmatprep.subr.mxu0 0.0
    %1274 = vmatpush1.msra.mxu0 0.0
    %1275 = vmatprep.subr.mxu0 0.0
    %1276 = vmatpush1.msra.mxu0 0.0
    %1277 = vmatprep.subr.mxu0 0.0
    %1278 = vmatpush1.msra.mxu0 0.0
    %1279 = vmatprep.subr.mxu0 0.0
    %1280 = vmatpush1.msra.mxu0 0.0
    %1281 = vmatprep.subr.mxu0 0.0
    %1282 = vmatpush1.msra.mxu0 0.0
    %1283 = vmatprep.subr.mxu0 0.0
    %1284 = vmatpush1.msra.mxu0 0.0
    %1285 = vmatprep.subr.mxu0 0.0
    %1286 = vmatpush1.msra.mxu0 0.0
    %1287 = vmatprep.subr.mxu0 0.0
    %1288 = vmatpush1.msra.mxu0 0.0
    %1289 = vmatprep.subr.mxu0 0.0
    %1290 = vmatpush1.msra.mxu0 0.0
    %1291 = vmatprep.subr.mxu0 0.0
    %1292 = vmatpush1.msra.mxu0 0.0
    %1293 = vmatprep.subr.mxu0 0.0
    %1294 = vmatpush1.msra.mxu0 0.0
    %1295 = vmatprep.subr.mxu0 0.0
    %1296 = vmatpush1.msra.mxu0 0.0
    %1297 = vmatprep.subr.mxu0 0.0
    %1298 = vmatpush1.msra.mxu0 0.0
    %1299 = vmatprep.subr.mxu0 0.0
    %1300 = vmatpush1.msra.mxu0 0.0
    %1301 = vmatprep.subr.mxu0 0.0
    %1302 = vmatpush1.msra.mxu0 0.0
    %1303 = vmatprep.mubr.f32.mxu0 0.0
    %1304 = vmatmul.mubr.f32.gmra.mrb[0].mxu0 %v1237
    %v1305 = vpop.f32.mrb[0].mxu0
    %v1306 = vadd.f32 0.0, %v1305
    %v1307 = vpop.f32.mrb[0].mxu0
    %1308 = vdwg.mxu0
    %v1310 = vrot.slane %v1306, 6
    %v1312 = vadd.f32 %v1125, %v1310
    %v1313 = vxor.u32 %v1312, 2147483648
    %v1314 = vmul.f32 %v1313, 1.442695
    %v1315 = vpow.pop %v1314
    %v1316 = vadd.f32 %v1315, 1.0
    %v1317 = vrcp.pop %v1316
    %v1318 = vmul.f32 1.0, %v1317
    %v1319 = vtanh.pop %v1312
    %v1321 = vrot.slane %v1225, 6
    %v1323 = vmul.f32 %v1318, %v1321
    %1325 = vrot.lane.b32.xlu0 %v1319, 64
    %v1326 = vpop.permute.xlu0 %1325
    %v1328 = vmul.f32 %v1318, %v1326
    %1330 = vrot.lane.b32.xlu0 %v1328, 32
    %v1331 = vpop.permute.xlu0 %1330
    %v1333 = vadd.f32 %v1323, %v1331
    %v1334 = vtanh.pop %v1333
    %1336 = vrot.lane.b32.xlu0 %v1334, 64
    %v1337 = vpop.permute.xlu0 %1336
    %v1339 = vmul.f32 %v1318, %v1337
    %1341 = vrot.lane.b32.xlu0 %v1339, 32
    %v1342 = vpop.permute.xlu0 %1341
    %1344 = vst.msk [vmem:[#allocation2] sm:$0xc] %vm375, %v1342
    %v1345 = vrot.slane %v1339, 2
    %1346 = vrot.lane.b32.xlu0 %v1345, 32
    %v1347 = vpop.permute.xlu0 %1346
    %v1348 = vsel %vm163, %v1347, 0
    %1350 = vmatprep.subr.mxu0 0.0
    %1351 = vmatpush1.msra.mxu0 %v1133
    %1352 = vmatprep.subr.mxu0 0.0
    %1353 = vmatpush1.msra.mxu0 %v1134
    %1354 = vmatprep.subr.mxu0 0.0
    %1355 = vmatpush1.msra.mxu0 %v1135
    %1356 = vmatprep.subr.mxu0 0.0
    %1357 = vmatpush1.msra.mxu0 %v1136
    %1358 = vmatprep.subr.mxu0 0.0
    %1359 = vmatpush1.msra.mxu0 0.0
    %1360 = vmatprep.subr.mxu0 0.0
    %1361 = vmatpush1.msra.mxu0 0.0
    %1362 = vmatprep.subr.mxu0 0.0
    %1363 = vmatpush1.msra.mxu0 0.0
    %1364 = vmatprep.subr.mxu0 0.0
    %1365 = vmatpush1.msra.mxu0 0.0
    %1366 = vmatprep.subr.mxu0 0.0
    %1367 = vmatpush1.msra.mxu0 0.0
    %1368 = vmatprep.subr.mxu0 0.0
    %1369 = vmatpush1.msra.mxu0 0.0
    %1370 = vmatprep.subr.mxu0 0.0
    %1371 = vmatpush1.msra.mxu0 0.0
    %1372 = vmatprep.subr.mxu0 0.0
    %1373 = vmatpush1.msra.mxu0 0.0
    %1374 = vmatprep.subr.mxu0 0.0
    %1375 = vmatpush1.msra.mxu0 0.0
    %1376 = vmatprep.subr.mxu0 0.0
    %1377 = vmatpush1.msra.mxu0 0.0
    %1378 = vmatprep.subr.mxu0 0.0
    %1379 = vmatpush1.msra.mxu0 0.0
    %1380 = vmatprep.subr.mxu0 0.0
    %1381 = vmatpush1.msra.mxu0 0.0
    %1382 = vmatprep.subr.mxu0 0.0
    %1383 = vmatpush1.msra.mxu0 0.0
    %1384 = vmatprep.subr.mxu0 0.0
    %1385 = vmatpush1.msra.mxu0 0.0
    %1386 = vmatprep.subr.mxu0 0.0
    %1387 = vmatpush1.msra.mxu0 0.0
    %1388 = vmatprep.subr.mxu0 0.0
    %1389 = vmatpush1.msra.mxu0 0.0
    %1390 = vmatprep.subr.mxu0 0.0
    %1391 = vmatpush1.msra.mxu0 0.0
    %1392 = vmatprep.subr.mxu0 0.0
    %1393 = vmatpush1.msra.mxu0 0.0
    %1394 = vmatprep.subr.mxu0 0.0
    %1395 = vmatpush1.msra.mxu0 0.0
    %1396 = vmatprep.subr.mxu0 0.0
    %1397 = vmatpush1.msra.mxu0 0.0
    %1398 = vmatprep.subr.mxu0 0.0
    %1399 = vmatpush1.msra.mxu0 0.0
    %1400 = vmatprep.subr.mxu0 0.0
    %1401 = vmatpush1.msra.mxu0 0.0
    %1402 = vmatprep.subr.mxu0 0.0
    %1403 = vmatpush1.msra.mxu0 0.0
    %1404 = vmatprep.subr.mxu0 0.0
    %1405 = vmatpush1.msra.mxu0 0.0
    %1406 = vmatprep.subr.mxu0 0.0
    %1407 = vmatpush1.msra.mxu0 0.0
    %1408 = vmatprep.subr.mxu0 0.0
    %1409 = vmatpush1.msra.mxu0 0.0
    %1410 = vmatprep.subr.mxu0 0.0
    %1411 = vmatpush1.msra.mxu0 0.0
    %1412 = vmatprep.subr.mxu0 0.0
    %1413 = vmatpush1.msra.mxu0 0.0
    %1414 = vmatprep.mubr.f32.mxu0 0.0
    %1415 = vmatmul.mubr.f32.gmra.mrb[0].mxu0 %v1348
    %v1416 = vpop.f32.mrb[0].mxu0
    %v1417 = vadd.f32 0.0, %v1416
    %v1418 = vpop.f32.mrb[0].mxu0
    %1419 = vdwg.mxu0
    %v1421 = vrot.slane %v1417, 4
    %v1423 = vadd.f32 %v1125, %v1421
    %v1424 = vxor.u32 %v1423, 2147483648
    %v1425 = vmul.f32 %v1424, 1.442695
    %v1426 = vpow.pop %v1425
    %v1427 = vadd.f32 %v1426, 1.0
    %v1428 = vrcp.pop %v1427
    %v1429 = vmul.f32 1.0, %v1428
    %v1430 = vtanh.pop %v1423
    %v1432 = vrot.slane %v1333, 6
    %v1434 = vmul.f32 %v1429, %v1432
    %1436 = vrot.lane.b32.xlu0 %v1430, 64
    %v1437 = vpop.permute.xlu0 %1436
    %v1439 = vmul.f32 %v1429, %v1437
    %1441 = vrot.lane.b32.xlu0 %v1439, 32
    %v1442 = vpop.permute.xlu0 %1441
    %v1444 = vadd.f32 %v1434, %v1442
    %v1445 = vtanh.pop %v1444
    %1447 = vrot.lane.b32.xlu0 %v1445, 64
    %v1448 = vpop.permute.xlu0 %1447
    %v1450 = vmul.f32 %v1429, %v1448
    %1452 = vrot.lane.b32.xlu0 %v1450, 32
    %v1453 = vpop.permute.xlu0 %1452
    %1455 = vst.msk [vmem:[#allocation2] sm:$0x30] %vm487, %v1453
    %v1456 = vrot.slane %v1450, 4
    %1457 = vrot.lane.b32.xlu0 %v1456, 32
    %v1458 = vpop.permute.xlu0 %1457
    %v1459 = vsel %vm163, %v1458, 0
    %1461 = vmatprep.subr.mxu0 0.0
    %1462 = vmatpush1.msra.mxu0 %v1133
    %1463 = vmatprep.subr.mxu0 0.0
    %1464 = vmatpush1.msra.mxu0 %v1134
    %1465 = vmatprep.subr.mxu0 0.0
    %1466 = vmatpush1.msra.mxu0 %v1135
    %1467 = vmatprep.subr.mxu0 0.0
    %1468 = vmatpush1.msra.mxu0 %v1136
    %1469 = vmatprep.subr.mxu0 0.0
    %1470 = vmatpush1.msra.mxu0 0.0
    %1471 = vmatprep.subr.mxu0 0.0
    %1472 = vmatpush1.msra.mxu0 0.0
    %1473 = vmatprep.subr.mxu0 0.0
    %1474 = vmatpush1.msra.mxu0 0.0
    %1475 = vmatprep.subr.mxu0 0.0
    %1476 = vmatpush1.msra.mxu0 0.0
    %1477 = vmatprep.subr.mxu0 0.0
    %1478 = vmatpush1.msra.mxu0 0.0
    %1479 = vmatprep.subr.mxu0 0.0
    %1480 = vmatpush1.msra.mxu0 0.0
    %1481 = vmatprep.subr.mxu0 0.0
    %1482 = vmatpush1.msra.mxu0 0.0
    %1483 = vmatprep.subr.mxu0 0.0
    %1484 = vmatpush1.msra.mxu0 0.0
    %1485 = vmatprep.subr.mxu0 0.0
    %1486 = vmatpush1.msra.mxu0 0.0
    %1487 = vmatprep.subr.mxu0 0.0
    %1488 = vmatpush1.msra.mxu0 0.0
    %1489 = vmatprep.subr.mxu0 0.0
    %1490 = vmatpush1.msra.mxu0 0.0
    %1491 = vmatprep.subr.mxu0 0.0
    %1492 = vmatpush1.msra.mxu0 0.0
    %1493 = vmatprep.subr.mxu0 0.0
    %1494 = vmatpush1.msra.mxu0 0.0
    %1495 = vmatprep.subr.mxu0 0.0
    %1496 = vmatpush1.msra.mxu0 0.0
    %1497 = vmatprep.subr.mxu0 0.0
    %1498 = vmatpush1.msra.mxu0 0.0
    %1499 = vmatprep.subr.mxu0 0.0
    %1500 = vmatpush1.msra.mxu0 0.0
    %1501 = vmatprep.subr.mxu0 0.0
    %1502 = vmatpush1.msra.mxu0 0.0
    %1503 = vmatprep.subr.mxu0 0.0
    %1504 = vmatpush1.msra.mxu0 0.0
    %1505 = vmatprep.subr.mxu0 0.0
    %1506 = vmatpush1.msra.mxu0 0.0
    %1507 = vmatprep.subr.mxu0 0.0
    %1508 = vmatpush1.msra.mxu0 0.0
    %1509 = vmatprep.subr.mxu0 0.0
    %1510 = vmatpush1.msra.mxu0 0.0
    %1511 = vmatprep.subr.mxu0 0.0
    %1512 = vmatpush1.msra.mxu0 0.0
    %1513 = vmatprep.subr.mxu0 0.0
    %1514 = vmatpush1.msra.mxu0 0.0
    %1515 = vmatprep.subr.mxu0 0.0
    %1516 = vmatpush1.msra.mxu0 0.0
    %1517 = vmatprep.subr.mxu0 0.0
    %1518 = vmatpush1.msra.mxu0 0.0
    %1519 = vmatprep.subr.mxu0 0.0
    %1520 = vmatpush1.msra.mxu0 0.0
    %1521 = vmatprep.subr.mxu0 0.0
    %1522 = vmatpush1.msra.mxu0 0.0
    %1523 = vmatprep.subr.mxu0 0.0
    %1524 = vmatpush1.msra.mxu0 0.0
    %1525 = vmatprep.mubr.f32.mxu0 0.0
    %1526 = vmatmul.mubr.f32.gmra.mrb[0].mxu0 %v1459
    %v1527 = vpop.f32.mrb[0].mxu0
    %v1528 = vadd.f32 0.0, %v1527
    %v1529 = vpop.f32.mrb[0].mxu0
    %1530 = vdwg.mxu0
    %v1532 = vrot.slane %v1528, 2
    %v1534 = vadd.f32 %v1125, %v1532
    %v1535 = vxor.u32 %v1534, 2147483648
    %v1536 = vmul.f32 %v1535, 1.442695
    %v1537 = vpow.pop %v1536
    %v1538 = vadd.f32 %v1537, 1.0
    %v1539 = vrcp.pop %v1538
    %v1540 = vmul.f32 1.0, %v1539
    %v1541 = vtanh.pop %v1534
    %v1543 = vrot.slane %v1444, 6
    %v1545 = vmul.f32 %v1540, %v1543
    %1547 = vrot.lane.b32.xlu0 %v1541, 64
    %v1548 = vpop.permute.xlu0 %1547
    %v1550 = vmul.f32 %v1540, %v1548
    %1552 = vrot.lane.b32.xlu0 %v1550, 32
    %v1553 = vpop.permute.xlu0 %1552
    %v1555 = vadd.f32 %v1545, %v1553
    %v1556 = vtanh.pop %v1555
    %1558 = vrot.lane.b32.xlu0 %v1556, 64
    %v1559 = vpop.permute.xlu0 %1558
    %v1561 = vmul.f32 %v1540, %v1559
    %1563 = vrot.lane.b32.xlu0 %v1561, 32
    %v1564 = vpop.permute.xlu0 %1563
    %1566 = vst.msk [vmem:[#allocation2] sm:$0xc0] %vm599, %v1564
    %v1567 = vrot.slane %v1561, 6
    %1568 = vrot.lane.b32.xlu0 %v1567, 32
    %v1569 = vpop.permute.xlu0 %1568
    %v1570 = vsel %vm163, %v1569, 0
    %1572 = vmatprep.subr.mxu0 0.0
    %1573 = vmatpush1.msra.mxu0 %v1133
    %1574 = vmatprep.subr.mxu0 0.0
    %1575 = vmatpush1.msra.mxu0 %v1134
    %1576 = vmatprep.subr.mxu0 0.0
    %1577 = vmatpush1.msra.mxu0 %v1135
    %1578 = vmatprep.subr.mxu0 0.0
    %1579 = vmatpush1.msra.mxu0 %v1136
    %1580 = vmatprep.subr.mxu0 0.0
    %1581 = vmatpush1.msra.mxu0 0.0
    %1582 = vmatprep.subr.mxu0 0.0
    %1583 = vmatpush1.msra.mxu0 0.0
    %1584 = vmatprep.subr.mxu0 0.0
    %1585 = vmatpush1.msra.mxu0 0.0
    %1586 = vmatprep.subr.mxu0 0.0
    %1587 = vmatpush1.msra.mxu0 0.0
    %1588 = vmatprep.subr.mxu0 0.0
    %1589 = vmatpush1.msra.mxu0 0.0
    %1590 = vmatprep.subr.mxu0 0.0
    %1591 = vmatpush1.msra.mxu0 0.0
    %1592 = vmatprep.subr.mxu0 0.0
    %1593 = vmatpush1.msra.mxu0 0.0
    %1594 = vmatprep.subr.mxu0 0.0
    %1595 = vmatpush1.msra.mxu0 0.0
    %1596 = vmatprep.subr.mxu0 0.0
    %1597 = vmatpush1.msra.mxu0 0.0
    %1598 = vmatprep.subr.mxu0 0.0
    %1599 = vmatpush1.msra.mxu0 0.0
    %1600 = vmatprep.subr.mxu0 0.0
    %1601 = vmatpush1.msra.mxu0 0.0
    %1602 = vmatprep.subr.mxu0 0.0
    %1603 = vmatpush1.msra.mxu0 0.0
    %1604 = vmatprep.subr.mxu0 0.0
    %1605 = vmatpush1.msra.mxu0 0.0
    %1606 = vmatprep.subr.mxu0 0.0
    %1607 = vmatpush1.msra.mxu0 0.0
    %1608 = vmatprep.subr.mxu0 0.0
    %1609 = vmatpush1.msra.mxu0 0.0
    %1610 = vmatprep.subr.mxu0 0.0
    %1611 = vmatpush1.msra.mxu0 0.0
    %1612 = vmatprep.subr.mxu0 0.0
    %1613 = vmatpush1.msra.mxu0 0.0
    %1614 = vmatprep.subr.mxu0 0.0
    %1615 = vmatpush1.msra.mxu0 0.0
    %1616 = vmatprep.subr.mxu0 0.0
    %1617 = vmatpush1.msra.mxu0 0.0
    %1618 = vmatprep.subr.mxu0 0.0
    %1619 = vmatpush1.msra.mxu0 0.0
    %1620 = vmatprep.subr.mxu0 0.0
    %1621 = vmatpush1.msra.mxu0 0.0
    %1622 = vmatprep.subr.mxu0 0.0
    %1623 = vmatpush1.msra.mxu0 0.0
    %1624 = vmatprep.subr.mxu0 0.0
    %1625 = vmatpush1.msra.mxu0 0.0
    %1626 = vmatprep.subr.mxu0 0.0
    %1627 = vmatpush1.msra.mxu0 0.0
    %1628 = vmatprep.subr.mxu0 0.0
    %1629 = vmatpush1.msra.mxu0 0.0
    %1630 = vmatprep.subr.mxu0 0.0
    %1631 = vmatpush1.msra.mxu0 0.0
    %1632 = vmatprep.subr.mxu0 0.0
    %1633 = vmatpush1.msra.mxu0 0.0
    %1634 = vmatprep.subr.mxu0 0.0
    %1635 = vmatpush1.msra.mxu0 0.0
    %1636 = vmatprep.mubr.f32.mxu0 0.0
    %1637 = vmatmul.mubr.f32.gmra.mrb[0].mxu0 %v1570
    %v1638 = vpop.f32.mrb[0].mxu0
    %v1639 = vadd.f32 0.0, %v1638
    %v1640 = vpop.f32.mrb[0].mxu0
    %1641 = vdwg.mxu0
    %v1642 = vadd.f32 %v1130, %v1639
    %v1643 = vxor.u32 %v1642, 2147483648
    %v1644 = vmul.f32 %v1643, 1.442695
    %v1645 = vpow.pop %v1644
    %v1646 = vadd.f32 %v1645, 1.0
    %v1647 = vrcp.pop %v1646
    %v1648 = vmul.f32 1.0, %v1647
    %v1649 = vtanh.pop %v1642
    %v1651 = vrot.slane %v1555, 6
    %v1653 = vmul.f32 %v1648, %v1651
    %1655 = vrot.lane.b32.xlu0 %v1649, 64
    %v1656 = vpop.permute.xlu0 %1655
    %v1658 = vmul.f32 %v1648, %v1656
    %1660 = vrot.lane.b32.xlu0 %v1658, 32
    %v1661 = vpop.permute.xlu0 %1660
    %v1663 = vadd.f32 %v1653, %v1661
    %v1664 = vtanh.pop %v1663
    %1666 = vrot.lane.b32.xlu0 %v1664, 64
    %v1667 = vpop.permute.xlu0 %1666
    %v1669 = vmul.f32 %v1648, %v1667
    %1671 = vrot.lane.b32.xlu0 %v1669, 32
    %v1672 = vpop.permute.xlu0 %1671
    %1674 = vst.msk [vmem:[#allocation2 + $0x8] sm:$0x3] %vm266, %v1672
    %v1675 = vsel %vm163, %v1672, 0
    %1677 = vmatprep.subr.mxu0 0.0
    %1678 = vmatpush1.msra.mxu0 %v1133
    %1679 = vmatprep.subr.mxu0 0.0
    %1680 = vmatpush1.msra.mxu0 %v1134
    %1681 = vmatprep.subr.mxu0 0.0
    %1682 = vmatpush1.msra.mxu0 %v1135
    %1683 = vmatprep.subr.mxu0 0.0
    %1684 = vmatpush1.msra.mxu0 %v1136
    %1685 = vmatprep.subr.mxu0 0.0
    %1686 = vmatpush1.msra.mxu0 0.0
    %1687 = vmatprep.subr.mxu0 0.0
    %1688 = vmatpush1.msra.mxu0 0.0
    %1689 = vmatprep.subr.mxu0 0.0
    %1690 = vmatpush1.msra.mxu0 0.0
    %1691 = vmatprep.subr.mxu0 0.0
    %1692 = vmatpush1.msra.mxu0 0.0
    %1693 = vmatprep.subr.mxu0 0.0
    %1694 = vmatpush1.msra.mxu0 0.0
    %1695 = vmatprep.subr.mxu0 0.0
    %1696 = vmatpush1.msra.mxu0 0.0
    %1697 = vmatprep.subr.mxu0 0.0
    %1698 = vmatpush1.msra.mxu0 0.0
    %1699 = vmatprep.subr.mxu0 0.0
    %1700 = vmatpush1.msra.mxu0 0.0
    %1701 = vmatprep.subr.mxu0 0.0
    %1702 = vmatpush1.msra.mxu0 0.0
    %1703 = vmatprep.subr.mxu0 0.0
    %1704 = vmatpush1.msra.mxu0 0.0
    %1705 = vmatprep.subr.mxu0 0.0
    %1706 = vmatpush1.msra.mxu0 0.0
    %1707 = vmatprep.subr.mxu0 0.0
    %1708 = vmatpush1.msra.mxu0 0.0
    %1709 = vmatprep.subr.mxu0 0.0
    %1710 = vmatpush1.msra.mxu0 0.0
    %1711 = vmatprep.subr.mxu0 0.0
    %1712 = vmatpush1.msra.mxu0 0.0
    %1713 = vmatprep.subr.mxu0 0.0
    %1714 = vmatpush1.msra.mxu0 0.0
    %1715 = vmatprep.subr.mxu0 0.0
    %1716 = vmatpush1.msra.mxu0 0.0
    %1717 = vmatprep.subr.mxu0 0.0
    %1718 = vmatpush1.msra.mxu0 0.0
    %1719 = vmatprep.subr.mxu0 0.0
    %1720 = vmatpush1.msra.mxu0 0.0
    %1721 = vmatprep.subr.mxu0 0.0
    %1722 = vmatpush1.msra.mxu0 0.0
    %1723 = vmatprep.subr.mxu0 0.0
    %1724 = vmatpush1.msra.mxu0 0.0
    %1725 = vmatprep.subr.mxu0 0.0
    %1726 = vmatpush1.msra.mxu0 0.0
    %1727 = vmatprep.subr.mxu0 0.0
    %1728 = vmatpush1.msra.mxu0 0.0
    %1729 = vmatprep.subr.mxu0 0.0
    %1730 = vmatpush1.msra.mxu0 0.0
    %1731 = vmatprep.subr.mxu0 0.0
    %1732 = vmatpush1.msra.mxu0 0.0
    %1733 = vmatprep.subr.mxu0 0.0
    %1734 = vmatpush1.msra.mxu0 0.0
    %1735 = vmatprep.subr.mxu0 0.0
    %1736 = vmatpush1.msra.mxu0 0.0
    %1737 = vmatprep.subr.mxu0 0.0
    %1738 = vmatpush1.msra.mxu0 0.0
    %1739 = vmatprep.subr.mxu0 0.0
    %1740 = vmatpush1.msra.mxu0 0.0
    %1741 = vmatprep.mubr.f32.mxu0 0.0
    %1742 = vmatmul.mubr.f32.gmra.mrb[0].mxu0 %v1675
    %v1743 = vpop.f32.mrb[0].mxu0
    %v1744 = vadd.f32 0.0, %v1743
    %v1745 = vpop.f32.mrb[0].mxu0
    %1746 = vdwg.mxu0
    %v1748 = vrot.slane %v1744, 6
    %v1750 = vadd.f32 %v1130, %v1748
    %v1751 = vxor.u32 %v1750, 2147483648
    %v1752 = vmul.f32 %v1751, 1.442695
    %v1753 = vpow.pop %v1752
    %v1754 = vadd.f32 %v1753, 1.0
    %v1755 = vrcp.pop %v1754
    %v1756 = vmul.f32 1.0, %v1755
    %v1757 = vtanh.pop %v1750
    %v1759 = vrot.slane %v1663, 6
    %v1761 = vmul.f32 %v1756, %v1759
    %1763 = vrot.lane.b32.xlu0 %v1757, 64
    %v1764 = vpop.permute.xlu0 %1763
    %v1766 = vmul.f32 %v1756, %v1764
    %1768 = vrot.lane.b32.xlu0 %v1766, 32
    %v1769 = vpop.permute.xlu0 %1768
    %v1771 = vadd.f32 %v1761, %v1769
    %v1772 = vtanh.pop %v1771
    %1774 = vrot.lane.b32.xlu0 %v1772, 64
    %v1775 = vpop.permute.xlu0 %1774
    %v1777 = vmul.f32 %v1756, %v1775
    %1779 = vrot.lane.b32.xlu0 %v1777, 32
    %v1780 = vpop.permute.xlu0 %1779
    %1782 = vst.msk [vmem:[#allocation2 + $0x8] sm:$0xc] %vm375, %v1780
    %v1783 = vrot.slane %v1777, 2
    %1784 = vrot.lane.b32.xlu0 %v1783, 32
    %v1785 = vpop.permute.xlu0 %1784
    %v1786 = vsel %vm163, %v1785, 0
    %1788 = vmatprep.subr.mxu0 0.0
    %1789 = vmatpush1.msra.mxu0 %v1133
    %1790 = vmatprep.subr.mxu0 0.0
    %1791 = vmatpush1.msra.mxu0 %v1134
    %1792 = vmatprep.subr.mxu0 0.0
    %1793 = vmatpush1.msra.mxu0 %v1135
    %1794 = vmatprep.subr.mxu0 0.0
    %1795 = vmatpush1.msra.mxu0 %v1136
    %1796 = vmatprep.subr.mxu0 0.0
    %1797 = vmatpush1.msra.mxu0 0.0
    %1798 = vmatprep.subr.mxu0 0.0
    %1799 = vmatpush1.msra.mxu0 0.0
    %1800 = vmatprep.subr.mxu0 0.0
    %1801 = vmatpush1.msra.mxu0 0.0
    %1802 = vmatprep.subr.mxu0 0.0
    %1803 = vmatpush1.msra.mxu0 0.0
    %1804 = vmatprep.subr.mxu0 0.0
    %1805 = vmatpush1.msra.mxu0 0.0
    %1806 = vmatprep.subr.mxu0 0.0
    %1807 = vmatpush1.msra.mxu0 0.0
    %1808 = vmatprep.subr.mxu0 0.0
    %1809 = vmatpush1.msra.mxu0 0.0
    %1810 = vmatprep.subr.mxu0 0.0
    %1811 = vmatpush1.msra.mxu0 0.0
    %1812 = vmatprep.subr.mxu0 0.0
    %1813 = vmatpush1.msra.mxu0 0.0
    %1814 = vmatprep.subr.mxu0 0.0
    %1815 = vmatpush1.msra.mxu0 0.0
    %1816 = vmatprep.subr.mxu0 0.0
    %1817 = vmatpush1.msra.mxu0 0.0
    %1818 = vmatprep.subr.mxu0 0.0
    %1819 = vmatpush1.msra.mxu0 0.0
    %1820 = vmatprep.subr.mxu0 0.0
    %1821 = vmatpush1.msra.mxu0 0.0
    %1822 = vmatprep.subr.mxu0 0.0
    %1823 = vmatpush1.msra.mxu0 0.0
    %1824 = vmatprep.subr.mxu0 0.0
    %1825 = vmatpush1.msra.mxu0 0.0
    %1826 = vmatprep.subr.mxu0 0.0
    %1827 = vmatpush1.msra.mxu0 0.0
    %1828 = vmatprep.subr.mxu0 0.0
    %1829 = vmatpush1.msra.mxu0 0.0
    %1830 = vmatprep.subr.mxu0 0.0
    %1831 = vmatpush1.msra.mxu0 0.0
    %1832 = vmatprep.subr.mxu0 0.0
    %1833 = vmatpush1.msra.mxu0 0.0
    %1834 = vmatprep.subr.mxu0 0.0
    %1835 = vmatpush1.msra.mxu0 0.0
    %1836 = vmatprep.subr.mxu0 0.0
    %1837 = vmatpush1.msra.mxu0 0.0
    %1838 = vmatprep.subr.mxu0 0.0
    %1839 = vmatpush1.msra.mxu0 0.0
    %1840 = vmatprep.subr.mxu0 0.0
    %1841 = vmatpush1.msra.mxu0 0.0
    %1842 = vmatprep.subr.mxu0 0.0
    %1843 = vmatpush1.msra.mxu0 0.0
    %1844 = vmatprep.subr.mxu0 0.0
    %1845 = vmatpush1.msra.mxu0 0.0
    %1846 = vmatprep.subr.mxu0 0.0
    %1847 = vmatpush1.msra.mxu0 0.0
    %1848 = vmatprep.subr.mxu0 0.0
    %1849 = vmatpush1.msra.mxu0 0.0
    %1850 = vmatprep.subr.mxu0 0.0
    %1851 = vmatpush1.msra.mxu0 0.0
    %1852 = vmatprep.mubr.f32.mxu0 0.0
    %1853 = vmatmul.mubr.f32.gmra.mrb[0].mxu0 %v1786
    %v1854 = vpop.f32.mrb[0].mxu0
    %v1855 = vadd.f32 0.0, %v1854
    %v1856 = vpop.f32.mrb[0].mxu0
    %1857 = vdwg.mxu0
    %v1859 = vrot.slane %v1855, 4
    %v1861 = vadd.f32 %v1130, %v1859
    %v1862 = vxor.u32 %v1861, 2147483648
    %v1863 = vmul.f32 %v1862, 1.442695
    %v1864 = vpow.pop %v1863
    %v1865 = vadd.f32 %v1864, 1.0
    %v1866 = vrcp.pop %v1865
    %v1867 = vmul.f32 1.0, %v1866
    %v1868 = vtanh.pop %v1861
    %v1870 = vrot.slane %v1771, 6
    %v1872 = vmul.f32 %v1867, %v1870
    %1874 = vrot.lane.b32.xlu0 %v1868, 64
    %v1875 = vpop.permute.xlu0 %1874
    %v1877 = vmul.f32 %v1867, %v1875
    %1879 = vrot.lane.b32.xlu0 %v1877, 32
    %v1880 = vpop.permute.xlu0 %1879
    %v1882 = vadd.f32 %v1872, %v1880
    %v1883 = vtanh.pop %v1882
    %1885 = vrot.lane.b32.xlu0 %v1883, 64
    %v1886 = vpop.permute.xlu0 %1885
    %v1888 = vmul.f32 %v1867, %v1886
    %1890 = vrot.lane.b32.xlu0 %v1888, 32
    %v1891 = vpop.permute.xlu0 %1890
    %1893 = vst.msk [vmem:[#allocation2 + $0x8] sm:$0x30] %vm487, %v1891
    %v1894 = vrot.slane %v1888, 4
    %1895 = vrot.lane.b32.xlu0 %v1894, 32
    %v1896 = vpop.permute.xlu0 %1895
    %v1897 = vsel %vm163, %v1896, 0
    %1899 = vmatprep.subr.mxu0 0.0
    %1900 = vmatpush1.msra.mxu0 %v1133
    %1901 = vmatprep.subr.mxu0 0.0
    %1902 = vmatpush1.msra.mxu0 %v1134
    %1903 = vmatprep.subr.mxu0 0.0
    %1904 = vmatpush1.msra.mxu0 %v1135
    %1905 = vmatprep.subr.mxu0 0.0
    %1906 = vmatpush1.msra.mxu0 %v1136
    %1907 = vmatprep.subr.mxu0 0.0
    %1908 = vmatpush1.msra.mxu0 0.0
    %1909 = vmatprep.subr.mxu0 0.0
    %1910 = vmatpush1.msra.mxu0 0.0
    %1911 = vmatprep.subr.mxu0 0.0
    %1912 = vmatpush1.msra.mxu0 0.0
    %1913 = vmatprep.subr.mxu0 0.0
    %1914 = vmatpush1.msra.mxu0 0.0
    %1915 = vmatprep.subr.mxu0 0.0
    %1916 = vmatpush1.msra.mxu0 0.0
    %1917 = vmatprep.subr.mxu0 0.0
    %1918 = vmatpush1.msra.mxu0 0.0
    %1919 = vmatprep.subr.mxu0 0.0
    %1920 = vmatpush1.msra.mxu0 0.0
    %1921 = vmatprep.subr.mxu0 0.0
    %1922 = vmatpush1.msra.mxu0 0.0
    %1923 = vmatprep.subr.mxu0 0.0
    %1924 = vmatpush1.msra.mxu0 0.0
    %1925 = vmatprep.subr.mxu0 0.0
    %1926 = vmatpush1.msra.mxu0 0.0
    %1927 = vmatprep.subr.mxu0 0.0
    %1928 = vmatpush1.msra.mxu0 0.0
    %1929 = vmatprep.subr.mxu0 0.0
    %1930 = vmatpush1.msra.mxu0 0.0
    %1931 = vmatprep.subr.mxu0 0.0
    %1932 = vmatpush1.msra.mxu0 0.0
    %1933 = vmatprep.subr.mxu0 0.0
    %1934 = vmatpush1.msra.mxu0 0.0
    %1935 = vmatprep.subr.mxu0 0.0
    %1936 = vmatpush1.msra.mxu0 0.0
    %1937 = vmatprep.subr.mxu0 0.0
    %1938 = vmatpush1.msra.mxu0 0.0
    %1939 = vmatprep.subr.mxu0 0.0
    %1940 = vmatpush1.msra.mxu0 0.0
    %1941 = vmatprep.subr.mxu0 0.0
    %1942 = vmatpush1.msra.mxu0 0.0
    %1943 = vmatprep.subr.mxu0 0.0
    %1944 = vmatpush1.msra.mxu0 0.0
    %1945 = vmatprep.subr.mxu0 0.0
    %1946 = vmatpush1.msra.mxu0 0.0
    %1947 = vmatprep.subr.mxu0 0.0
    %1948 = vmatpush1.msra.mxu0 0.0
    %1949 = vmatprep.subr.mxu0 0.0
    %1950 = vmatpush1.msra.mxu0 0.0
    %1951 = vmatprep.subr.mxu0 0.0
    %1952 = vmatpush1.msra.mxu0 0.0
    %1953 = vmatprep.subr.mxu0 0.0
    %1954 = vmatpush1.msra.mxu0 0.0
    %1955 = vmatprep.subr.mxu0 0.0
    %1956 = vmatpush1.msra.mxu0 0.0
    %1957 = vmatprep.subr.mxu0 0.0
    %1958 = vmatpush1.msra.mxu0 0.0
    %1959 = vmatprep.subr.mxu0 0.0
    %1960 = vmatpush1.msra.mxu0 0.0
    %1961 = vmatprep.subr.mxu0 0.0
    %1962 = vmatpush1.msra.mxu0 0.0
    %1963 = vmatprep.mubr.f32.mxu0 0.0
    %1964 = vmatmul.mubr.f32.gmra.mrb[0].mxu0 %v1897
    %v1965 = vpop.f32.mrb[0].mxu0
    %v1966 = vadd.f32 0.0, %v1965
    %v1967 = vpop.f32.mrb[0].mxu0
    %1968 = vdwg.mxu0
    %v1970 = vrot.slane %v1966, 2
    %v1972 = vadd.f32 %v1130, %v1970
    %v1973 = vxor.u32 %v1972, 2147483648
    %v1974 = vmul.f32 %v1973, 1.442695
    %v1975 = vpow.pop %v1974
    %v1976 = vadd.f32 %v1975, 1.0
    %v1977 = vrcp.pop %v1976
    %v1978 = vmul.f32 1.0, %v1977
    %v1979 = vtanh.pop %v1972
    %v1981 = vrot.slane %v1882, 6
    %v1983 = vmul.f32 %v1978, %v1981
    %1985 = vrot.lane.b32.xlu0 %v1979, 64
    %v1986 = vpop.permute.xlu0 %1985
    %v1988 = vmul.f32 %v1978, %v1986
    %1990 = vrot.lane.b32.xlu0 %v1988, 32
    %v1991 = vpop.permute.xlu0 %1990
    %v1993 = vadd.f32 %v1983, %v1991
    %v1994 = vtanh.pop %v1993
    %1996 = vrot.lane.b32.xlu0 %v1994, 64
    %v1997 = vpop.permute.xlu0 %1996
    %v1999 = vmul.f32 %v1978, %v1997
    %2001 = vrot.lane.b32.xlu0 %v1999, 32
    %v2002 = vpop.permute.xlu0 %2001
    %2004 = vst.msk [vmem:[#allocation2 + $0x8] sm:$0xc0] %vm599, %v2002
    %v2005 = vld [vmem:[#allocation2] sm:$0xff]
    %v2006 = vld [vmem:[#allocation2 + $0x8] sm:$0xff]
    %v2007 = vld [vmem:[%s7] sm:$0xff]
    %v2008 = vld [vmem:[%s7 + $0x8] sm:$0xff]
    %v2009 = vld [vmem:[%s7 + $0x10] sm:$0xff]
    %v2010 = vld [vmem:[%s7 + $0x18] sm:$0xff]
    %v2011 = vld [vmem:[#allocation3] sm:$0x1]
    %v2013 = vlaneseq
    %v2014 = vshrl.u32 %v2013, 7
    %v2015 = vsub.s32 0, %v2014
    %v2016 = vrot.slane %v2011, %v2015
    %v2019 = vsel %vm163, %v2005, 0
    %v2022 = vsel %vm163, %v2006, 0
    %2024 = vmatprep.subr.mxu0 0.0
    %2025 = vmatpush1.msra.mxu0 %v2007
    %2026 = vmatprep.subr.mxu0 0.0
    %2027 = vmatpush1.msra.mxu0 %v2008
    %2028 = vmatprep.subr.mxu0 0.0
    %2029 = vmatpush1.msra.mxu0 %v2009
    %2030 = vmatprep.subr.mxu0 0.0
    %2031 = vmatpush1.msra.mxu0 %v2010
    %2032 = vmatprep.subr.mxu0 0.0
    %2033 = vmatpush1.msra.mxu0 0.0
    %2034 = vmatprep.subr.mxu0 0.0
    %2035 = vmatpush1.msra.mxu0 0.0
    %2036 = vmatprep.subr.mxu0 0.0
    %2037 = vmatpush1.msra.mxu0 0.0
    %2038 = vmatprep.subr.mxu0 0.0
    %2039 = vmatpush1.msra.mxu0 0.0
    %2040 = vmatprep.subr.mxu0 0.0
    %2041 = vmatpush1.msra.mxu0 0.0
    %2042 = vmatprep.subr.mxu0 0.0
    %2043 = vmatpush1.msra.mxu0 0.0
    %2044 = vmatprep.subr.mxu0 0.0
    %2045 = vmatpush1.msra.mxu0 0.0
    %2046 = vmatprep.subr.mxu0 0.0
    %2047 = vmatpush1.msra.mxu0 0.0
    %2048 = vmatprep.subr.mxu0 0.0
    %2049 = vmatpush1.msra.mxu0 0.0
    %2050 = vmatprep.subr.mxu0 0.0
    %2051 = vmatpush1.msra.mxu0 0.0
    %2052 = vmatprep.subr.mxu0 0.0
    %2053 = vmatpush1.msra.mxu0 0.0
    %2054 = vmatprep.subr.mxu0 0.0
    %2055 = vmatpush1.msra.mxu0 0.0
    %2056 = vmatprep.subr.mxu0 0.0
    %2057 = vmatpush1.msra.mxu0 0.0
    %2058 = vmatprep.subr.mxu0 0.0
    %2059 = vmatpush1.msra.mxu0 0.0
    %2060 = vmatprep.subr.mxu0 0.0
    %2061 = vmatpush1.msra.mxu0 0.0
    %2062 = vmatprep.subr.mxu0 0.0
    %2063 = vmatpush1.msra.mxu0 0.0
    %2064 = vmatprep.subr.mxu0 0.0
    %2065 = vmatpush1.msra.mxu0 0.0
    %2066 = vmatprep.subr.mxu0 0.0
    %2067 = vmatpush1.msra.mxu0 0.0
    %2068 = vmatprep.subr.mxu0 0.0
    %2069 = vmatpush1.msra.mxu0 0.0
    %2070 = vmatprep.subr.mxu0 0.0
    %2071 = vmatpush1.msra.mxu0 0.0
    %2072 = vmatprep.subr.mxu0 0.0
    %2073 = vmatpush1.msra.mxu0 0.0
    %2074 = vmatprep.subr.mxu0 0.0
    %2075 = vmatpush1.msra.mxu0 0.0
    %2076 = vmatprep.subr.mxu0 0.0
    %2077 = vmatpush1.msra.mxu0 0.0
    %2078 = vmatprep.subr.mxu0 0.0
    %2079 = vmatpush1.msra.mxu0 0.0
    %2080 = vmatprep.subr.mxu0 0.0
    %2081 = vmatpush1.msra.mxu0 0.0
    %2082 = vmatprep.subr.mxu0 0.0
    %2083 = vmatpush1.msra.mxu0 0.0
    %2084 = vmatprep.subr.mxu0 0.0
    %2085 = vmatpush1.msra.mxu0 0.0
    %2086 = vmatprep.subr.mxu0 0.0
    %2087 = vmatpush1.msra.mxu0 0.0
    %2088 = vmatprep.mubr.f32.mxu0 0.0
    %2089 = vmatmul.mubr.f32.gmra.mrb[0].mxu0 %v2019
    %v2090 = vpop.f32.mrb[0].mxu0
    %v2091 = vadd.f32 %v2016, %v2090
    %v2092 = vpop.f32.mrb[0].mxu0
    %2093 = vmatprep.mubr.f32.mxu0 0.0
    %2094 = vmatmul.mubr.f32.gmra.mrb[0].mxu0 %v2022
    %v2095 = vpop.f32.mrb[0].mxu0
    %v2096 = vadd.f32 %v2016, %v2095
    %v2097 = vpop.f32.mrb[0].mxu0
    %2098 = vdwg.mxu0
    %v2099 = vld [vmem:[%s8] sm:$0xff]
    %v2100 = vld [vmem:[%s8 + $0x8] sm:$0xff]
    %v2101 = vld [vmem:[%s8 + $0x10] sm:$0xff]
    %v2102 = vld [vmem:[%s8 + $0x18] sm:$0xff]
    %2103 = vmatprep.subr.mxu0 0.0
    %2104 = vmatpush1.msra.mxu0 %v2099
    %2105 = vmatprep.subr.mxu0 0.0
    %2106 = vmatpush1.msra.mxu0 %v2100
    %2107 = vmatprep.subr.mxu0 0.0
    %2108 = vmatpush1.msra.mxu0 %v2101
    %2109 = vmatprep.subr.mxu0 0.0
    %2110 = vmatpush1.msra.mxu0 %v2102
    %2111 = vmatprep.subr.mxu0 0.0
    %2112 = vmatpush1.msra.mxu0 0.0
    %2113 = vmatprep.subr.mxu0 0.0
    %2114 = vmatpush1.msra.mxu0 0.0
    %2115 = vmatprep.subr.mxu0 0.0
    %2116 = vmatpush1.msra.mxu0 0.0
    %2117 = vmatprep.subr.mxu0 0.0
    %2118 = vmatpush1.msra.mxu0 0.0
    %2119 = vmatprep.subr.mxu0 0.0
    %2120 = vmatpush1.msra.mxu0 0.0
    %2121 = vmatprep.subr.mxu0 0.0
    %2122 = vmatpush1.msra.mxu0 0.0
    %2123 = vmatprep.subr.mxu0 0.0
    %2124 = vmatpush1.msra.mxu0 0.0
    %2125 = vmatprep.subr.mxu0 0.0
    %2126 = vmatpush1.msra.mxu0 0.0
    %2127 = vmatprep.subr.mxu0 0.0
    %2128 = vmatpush1.msra.mxu0 0.0
    %2129 = vmatprep.subr.mxu0 0.0
    %2130 = vmatpush1.msra.mxu0 0.0
    %2131 = vmatprep.subr.mxu0 0.0
    %2132 = vmatpush1.msra.mxu0 0.0
    %2133 = vmatprep.subr.mxu0 0.0
    %2134 = vmatpush1.msra.mxu0 0.0
    %2135 = vmatprep.subr.mxu0 0.0
    %2136 = vmatpush1.msra.mxu0 0.0
    %2137 = vmatprep.subr.mxu0 0.0
    %2138 = vmatpush1.msra.mxu0 0.0
    %2139 = vmatprep.subr.mxu0 0.0
    %2140 = vmatpush1.msra.mxu0 0.0
    %2141 = vmatprep.subr.mxu0 0.0
    %2142 = vmatpush1.msra.mxu0 0.0
    %2143 = vmatprep.subr.mxu0 0.0
    %2144 = vmatpush1.msra.mxu0 0.0
    %2145 = vmatprep.subr.mxu0 0.0
    %2146 = vmatpush1.msra.mxu0 0.0
    %2147 = vmatprep.subr.mxu0 0.0
    %2148 = vmatpush1.msra.mxu0 0.0
    %2149 = vmatprep.subr.mxu0 0.0
    %2150 = vmatpush1.msra.mxu0 0.0
    %2151 = vmatprep.subr.mxu0 0.0
    %2152 = vmatpush1.msra.mxu0 0.0
    %2153 = vmatprep.subr.mxu0 0.0
    %2154 = vmatpush1.msra.mxu0 0.0
    %2155 = vmatprep.subr.mxu0 0.0
    %2156 = vmatpush1.msra.mxu0 0.0
    %2157 = vmatprep.subr.mxu0 0.0
    %2158 = vmatpush1.msra.mxu0 0.0
    %2159 = vmatprep.subr.mxu0 0.0
    %2160 = vmatpush1.msra.mxu0 0.0
    %2161 = vmatprep.subr.mxu0 0.0
    %2162 = vmatpush1.msra.mxu0 0.0
    %2163 = vmatprep.subr.mxu0 0.0
    %2164 = vmatpush1.msra.mxu0 0.0
    %2165 = vmatprep.subr.mxu0 0.0
    %2166 = vmatpush1.msra.mxu0 0.0
    %2167 = vmatprep.mubr.f32.mxu0 0.0
    %2168 = vmatmul.mubr.f32.gmra.mrb[0].mxu0 %v165
    %v2169 = vpop.f32.mrb[0].mxu0
    %v2170 = vadd.f32 0.0, %v2169
    %v2171 = vpop.f32.mrb[0].mxu0
    %2172 = vdwg.mxu0
    %v2173 = vadd.f32 %v2091, %v2170
    %v2174 = vxor.u32 %v2173, 2147483648
    %v2175 = vmul.f32 %v2174, 1.442695
    %v2176 = vpow.pop %v2175
    %v2177 = vadd.f32 %v2176, 1.0
    %v2178 = vrcp.pop %v2177
    %v2179 = vmul.f32 1.0, %v2178
    %v2180 = vtanh.pop %v2173
    %v2181 = vmul.f32 %v2179, 0.0
    %2183 = vrot.lane.b32.xlu0 %v2180, 64
    %v2184 = vpop.permute.xlu0 %2183
    %v2186 = vmul.f32 %v2179, %v2184
    %2188 = vrot.lane.b32.xlu0 %v2186, 32
    %v2189 = vpop.permute.xlu0 %2188
    %v2191 = vadd.f32 %v2181, %v2189
    %v2192 = vtanh.pop %v2191
    %2194 = vrot.lane.b32.xlu0 %v2192, 64
    %v2195 = vpop.permute.xlu0 %2194
    %v2197 = vmul.f32 %v2179, %v2195
    %2199 = vrot.lane.b32.xlu0 %v2197, 32
    %v2200 = vpop.permute.xlu0 %2199
    %v2201 = vsel %vm163, %v2200, 0
    %2203 = vmatprep.subr.mxu0 0.0
    %2204 = vmatpush1.msra.mxu0 %v2099
    %2205 = vmatprep.subr.mxu0 0.0
    %2206 = vmatpush1.msra.mxu0 %v2100
    %2207 = vmatprep.subr.mxu0 0.0
    %2208 = vmatpush1.msra.mxu0 %v2101
    %2209 = vmatprep.subr.mxu0 0.0
    %2210 = vmatpush1.msra.mxu0 %v2102
    %2211 = vmatprep.subr.mxu0 0.0
    %2212 = vmatpush1.msra.mxu0 0.0
    %2213 = vmatprep.subr.mxu0 0.0
    %2214 = vmatpush1.msra.mxu0 0.0
    %2215 = vmatprep.subr.mxu0 0.0
    %2216 = vmatpush1.msra.mxu0 0.0
    %2217 = vmatprep.subr.mxu0 0.0
    %2218 = vmatpush1.msra.mxu0 0.0
    %2219 = vmatprep.subr.mxu0 0.0
    %2220 = vmatpush1.msra.mxu0 0.0
    %2221 = vmatprep.subr.mxu0 0.0
    %2222 = vmatpush1.msra.mxu0 0.0
    %2223 = vmatprep.subr.mxu0 0.0
    %2224 = vmatpush1.msra.mxu0 0.0
    %2225 = vmatprep.subr.mxu0 0.0
    %2226 = vmatpush1.msra.mxu0 0.0
    %2227 = vmatprep.subr.mxu0 0.0
    %2228 = vmatpush1.msra.mxu0 0.0
    %2229 = vmatprep.subr.mxu0 0.0
    %2230 = vmatpush1.msra.mxu0 0.0
    %2231 = vmatprep.subr.mxu0 0.0
    %2232 = vmatpush1.msra.mxu0 0.0
    %2233 = vmatprep.subr.mxu0 0.0
    %2234 = vmatpush1.msra.mxu0 0.0
    %2235 = vmatprep.subr.mxu0 0.0
    %2236 = vmatpush1.msra.mxu0 0.0
    %2237 = vmatprep.subr.mxu0 0.0
    %2238 = vmatpush1.msra.mxu0 0.0
    %2239 = vmatprep.subr.mxu0 0.0
    %2240 = vmatpush1.msra.mxu0 0.0
    %2241 = vmatprep.subr.mxu0 0.0
    %2242 = vmatpush1.msra.mxu0 0.0
    %2243 = vmatprep.subr.mxu0 0.0
    %2244 = vmatpush1.msra.mxu0 0.0
    %2245 = vmatprep.subr.mxu0 0.0
    %2246 = vmatpush1.msra.mxu0 0.0
    %2247 = vmatprep.subr.mxu0 0.0
    %2248 = vmatpush1.msra.mxu0 0.0
    %2249 = vmatprep.subr.mxu0 0.0
    %2250 = vmatpush1.msra.mxu0 0.0
    %2251 = vmatprep.subr.mxu0 0.0
    %2252 = vmatpush1.msra.mxu0 0.0
    %2253 = vmatprep.subr.mxu0 0.0
    %2254 = vmatpush1.msra.mxu0 0.0
    %2255 = vmatprep.subr.mxu0 0.0
    %2256 = vmatpush1.msra.mxu0 0.0
    %2257 = vmatprep.subr.mxu0 0.0
    %2258 = vmatpush1.msra.mxu0 0.0
    %2259 = vmatprep.subr.mxu0 0.0
    %2260 = vmatpush1.msra.mxu0 0.0
    %2261 = vmatprep.subr.mxu0 0.0
    %2262 = vmatpush1.msra.mxu0 0.0
    %2263 = vmatprep.subr.mxu0 0.0
    %2264 = vmatpush1.msra.mxu0 0.0
    %2265 = vmatprep.subr.mxu0 0.0
    %2266 = vmatpush1.msra.mxu0 0.0
    %2267 = vmatprep.mubr.f32.mxu0 0.0
    %2268 = vmatmul.mubr.f32.gmra.mrb[0].mxu0 %v2201
    %v2269 = vpop.f32.mrb[0].mxu0
    %v2270 = vadd.f32 0.0, %v2269
    %v2271 = vpop.f32.mrb[0].mxu0
    %2272 = vdwg.mxu0
    %v2274 = vrot.slane %v2270, 6
    %v2276 = vadd.f32 %v2091, %v2274
    %v2277 = vxor.u32 %v2276, 2147483648
    %v2278 = vmul.f32 %v2277, 1.442695
    %v2279 = vpow.pop %v2278
    %v2280 = vadd.f32 %v2279, 1.0
    %v2281 = vrcp.pop %v2280
    %v2282 = vmul.f32 1.0, %v2281
    %v2283 = vtanh.pop %v2276
    %v2285 = vrot.slane %v2191, 6
    %v2287 = vmul.f32 %v2282, %v2285
    %2289 = vrot.lane.b32.xlu0 %v2283, 64
    %v2290 = vpop.permute.xlu0 %2289
    %v2292 = vmul.f32 %v2282, %v2290
    %2294 = vrot.lane.b32.xlu0 %v2292, 32
    %v2295 = vpop.permute.xlu0 %2294
    %v2297 = vadd.f32 %v2287, %v2295
    %v2298 = vtanh.pop %v2297
    %2300 = vrot.lane.b32.xlu0 %v2298, 64
    %v2301 = vpop.permute.xlu0 %2300
    %v2303 = vmul.f32 %v2282, %v2301
    %v2305 = vrot.slane %v2303, 2
    %2306 = vrot.lane.b32.xlu0 %v2305, 32
    %v2307 = vpop.permute.xlu0 %2306
    %v2308 = vsel %vm163, %v2307, 0
    %2310 = vmatprep.subr.mxu0 0.0
    %2311 = vmatpush1.msra.mxu0 %v2099
    %2312 = vmatprep.subr.mxu0 0.0
    %2313 = vmatpush1.msra.mxu0 %v2100
    %2314 = vmatprep.subr.mxu0 0.0
    %2315 = vmatpush1.msra.mxu0 %v2101
    %2316 = vmatprep.subr.mxu0 0.0
    %2317 = vmatpush1.msra.mxu0 %v2102
    %2318 = vmatprep.subr.mxu0 0.0
    %2319 = vmatpush1.msra.mxu0 0.0
    %2320 = vmatprep.subr.mxu0 0.0
    %2321 = vmatpush1.msra.mxu0 0.0
    %2322 = vmatprep.subr.mxu0 0.0
    %2323 = vmatpush1.msra.mxu0 0.0
    %2324 = vmatprep.subr.mxu0 0.0
    %2325 = vmatpush1.msra.mxu0 0.0
    %2326 = vmatprep.subr.mxu0 0.0
    %2327 = vmatpush1.msra.mxu0 0.0
    %2328 = vmatprep.subr.mxu0 0.0
    %2329 = vmatpush1.msra.mxu0 0.0
    %2330 = vmatprep.subr.mxu0 0.0
    %2331 = vmatpush1.msra.mxu0 0.0
    %2332 = vmatprep.subr.mxu0 0.0
    %2333 = vmatpush1.msra.mxu0 0.0
    %2334 = vmatprep.subr.mxu0 0.0
    %2335 = vmatpush1.msra.mxu0 0.0
    %2336 = vmatprep.subr.mxu0 0.0
    %2337 = vmatpush1.msra.mxu0 0.0
    %2338 = vmatprep.subr.mxu0 0.0
    %2339 = vmatpush1.msra.mxu0 0.0
    %2340 = vmatprep.subr.mxu0 0.0
    %2341 = vmatpush1.msra.mxu0 0.0
    %2342 = vmatprep.subr.mxu0 0.0
    %2343 = vmatpush1.msra.mxu0 0.0
    %2344 = vmatprep.subr.mxu0 0.0
    %2345 = vmatpush1.msra.mxu0 0.0
    %2346 = vmatprep.subr.mxu0 0.0
    %2347 = vmatpush1.msra.mxu0 0.0
    %2348 = vmatprep.subr.mxu0 0.0
    %2349 = vmatpush1.msra.mxu0 0.0
    %2350 = vmatprep.subr.mxu0 0.0
    %2351 = vmatpush1.msra.mxu0 0.0
    %2352 = vmatprep.subr.mxu0 0.0
    %2353 = vmatpush1.msra.mxu0 0.0
    %2354 = vmatprep.subr.mxu0 0.0
    %2355 = vmatpush1.msra.mxu0 0.0
    %2356 = vmatprep.subr.mxu0 0.0
    %2357 = vmatpush1.msra.mxu0 0.0
    %2358 = vmatprep.subr.mxu0 0.0
    %2359 = vmatpush1.msra.mxu0 0.0
    %2360 = vmatprep.subr.mxu0 0.0
    %2361 = vmatpush1.msra.mxu0 0.0
    %2362 = vmatprep.subr.mxu0 0.0
    %2363 = vmatpush1.msra.mxu0 0.0
    %2364 = vmatprep.subr.mxu0 0.0
    %2365 = vmatpush1.msra.mxu0 0.0
    %2366 = vmatprep.subr.mxu0 0.0
    %2367 = vmatpush1.msra.mxu0 0.0
    %2368 = vmatprep.subr.mxu0 0.0
    %2369 = vmatpush1.msra.mxu0 0.0
    %2370 = vmatprep.subr.mxu0 0.0
    %2371 = vmatpush1.msra.mxu0 0.0
    %2372 = vmatprep.subr.mxu0 0.0
    %2373 = vmatpush1.msra.mxu0 0.0
    %2374 = vmatprep.mubr.f32.mxu0 0.0
    %2375 = vmatmul.mubr.f32.gmra.mrb[0].mxu0 %v2308
    %v2376 = vpop.f32.mrb[0].mxu0
    %v2377 = vadd.f32 0.0, %v2376
    %v2378 = vpop.f32.mrb[0].mxu0
    %2379 = vdwg.mxu0
    %v2381 = vrot.slane %v2377, 4
    %v2383 = vadd.f32 %v2091, %v2381
    %v2384 = vxor.u32 %v2383, 2147483648
    %v2385 = vmul.f32 %v2384, 1.442695
    %v2386 = vpow.pop %v2385
    %v2387 = vadd.f32 %v2386, 1.0
    %v2388 = vrcp.pop %v2387
    %v2389 = vmul.f32 1.0, %v2388
    %v2390 = vtanh.pop %v2383
    %v2392 = vrot.slane %v2297, 6
    %v2394 = vmul.f32 %v2389, %v2392
    %2396 = vrot.lane.b32.xlu0 %v2390, 64
    %v2397 = vpop.permute.xlu0 %2396
    %v2399 = vmul.f32 %v2389, %v2397
    %2401 = vrot.lane.b32.xlu0 %v2399, 32
    %v2402 = vpop.permute.xlu0 %2401
    %v2404 = vadd.f32 %v2394, %v2402
    %v2405 = vtanh.pop %v2404
    %2407 = vrot.lane.b32.xlu0 %v2405, 64
    %v2408 = vpop.permute.xlu0 %2407
    %v2410 = vmul.f32 %v2389, %v2408
    %v2412 = vrot.slane %v2410, 4
    %2413 = vrot.lane.b32.xlu0 %v2412, 32
    %v2414 = vpop.permute.xlu0 %2413
    %v2415 = vsel %vm163, %v2414, 0
    %2417 = vmatprep.subr.mxu0 0.0
    %2418 = vmatpush1.msra.mxu0 %v2099
    %2419 = vmatprep.subr.mxu0 0.0
    %2420 = vmatpush1.msra.mxu0 %v2100
    %2421 = vmatprep.subr.mxu0 0.0
    %2422 = vmatpush1.msra.mxu0 %v2101
    %2423 = vmatprep.subr.mxu0 0.0
    %2424 = vmatpush1.msra.mxu0 %v2102
    %2425 = vmatprep.subr.mxu0 0.0
    %2426 = vmatpush1.msra.mxu0 0.0
    %2427 = vmatprep.subr.mxu0 0.0
    %2428 = vmatpush1.msra.mxu0 0.0
    %2429 = vmatprep.subr.mxu0 0.0
    %2430 = vmatpush1.msra.mxu0 0.0
    %2431 = vmatprep.subr.mxu0 0.0
    %2432 = vmatpush1.msra.mxu0 0.0
    %2433 = vmatprep.subr.mxu0 0.0
    %2434 = vmatpush1.msra.mxu0 0.0
    %2435 = vmatprep.subr.mxu0 0.0
    %2436 = vmatpush1.msra.mxu0 0.0
    %2437 = vmatprep.subr.mxu0 0.0
    %2438 = vmatpush1.msra.mxu0 0.0
    %2439 = vmatprep.subr.mxu0 0.0
    %2440 = vmatpush1.msra.mxu0 0.0
    %2441 = vmatprep.subr.mxu0 0.0
    %2442 = vmatpush1.msra.mxu0 0.0
    %2443 = vmatprep.subr.mxu0 0.0
    %2444 = vmatpush1.msra.mxu0 0.0
    %2445 = vmatprep.subr.mxu0 0.0
    %2446 = vmatpush1.msra.mxu0 0.0
    %2447 = vmatprep.subr.mxu0 0.0
    %2448 = vmatpush1.msra.mxu0 0.0
    %2449 = vmatprep.subr.mxu0 0.0
    %2450 = vmatpush1.msra.mxu0 0.0
    %2451 = vmatprep.subr.mxu0 0.0
    %2452 = vmatpush1.msra.mxu0 0.0
    %2453 = vmatprep.subr.mxu0 0.0
    %2454 = vmatpush1.msra.mxu0 0.0
    %2455 = vmatprep.subr.mxu0 0.0
    %2456 = vmatpush1.msra.mxu0 0.0
    %2457 = vmatprep.subr.mxu0 0.0
    %2458 = vmatpush1.msra.mxu0 0.0
    %2459 = vmatprep.subr.mxu0 0.0
    %2460 = vmatpush1.msra.mxu0 0.0
    %2461 = vmatprep.subr.mxu0 0.0
    %2462 = vmatpush1.msra.mxu0 0.0
    %2463 = vmatprep.subr.mxu0 0.0
    %2464 = vmatpush1.msra.mxu0 0.0
    %2465 = vmatprep.subr.mxu0 0.0
    %2466 = vmatpush1.msra.mxu0 0.0
    %2467 = vmatprep.subr.mxu0 0.0
    %2468 = vmatpush1.msra.mxu0 0.0
    %2469 = vmatprep.subr.mxu0 0.0
    %2470 = vmatpush1.msra.mxu0 0.0
    %2471 = vmatprep.subr.mxu0 0.0
    %2472 = vmatpush1.msra.mxu0 0.0
    %2473 = vmatprep.subr.mxu0 0.0
    %2474 = vmatpush1.msra.mxu0 0.0
    %2475 = vmatprep.subr.mxu0 0.0
    %2476 = vmatpush1.msra.mxu0 0.0
    %2477 = vmatprep.subr.mxu0 0.0
    %2478 = vmatpush1.msra.mxu0 0.0
    %2479 = vmatprep.subr.mxu0 0.0
    %2480 = vmatpush1.msra.mxu0 0.0
    %2481 = vmatprep.mubr.f32.mxu0 0.0
    %2482 = vmatmul.mubr.f32.gmra.mrb[0].mxu0 %v2415
    %v2483 = vpop.f32.mrb[0].mxu0
    %v2484 = vadd.f32 0.0, %v2483
    %v2485 = vpop.f32.mrb[0].mxu0
    %2486 = vdwg.mxu0
    %v2488 = vrot.slane %v2484, 2
    %v2490 = vadd.f32 %v2091, %v2488
    %v2491 = vxor.u32 %v2490, 2147483648
    %v2492 = vmul.f32 %v2491, 1.442695
    %v2493 = vpow.pop %v2492
    %v2494 = vadd.f32 %v2493, 1.0
    %v2495 = vrcp.pop %v2494
    %v2496 = vmul.f32 1.0, %v2495
    %v2497 = vtanh.pop %v2490
    %v2499 = vrot.slane %v2404, 6
    %v2501 = vmul.f32 %v2496, %v2499
    %2503 = vrot.lane.b32.xlu0 %v2497, 64
    %v2504 = vpop.permute.xlu0 %2503
    %v2506 = vmul.f32 %v2496, %v2504
    %2508 = vrot.lane.b32.xlu0 %v2506, 32
    %v2509 = vpop.permute.xlu0 %2508
    %v2511 = vadd.f32 %v2501, %v2509
    %v2512 = vtanh.pop %v2511
    %2514 = vrot.lane.b32.xlu0 %v2512, 64
    %v2515 = vpop.permute.xlu0 %2514
    %v2517 = vmul.f32 %v2496, %v2515
    %v2519 = vrot.slane %v2517, 6
    %2520 = vrot.lane.b32.xlu0 %v2519, 32
    %v2521 = vpop.permute.xlu0 %2520
    %v2522 = vsel %vm163, %v2521, 0
    %2524 = vmatprep.subr.mxu0 0.0
    %2525 = vmatpush1.msra.mxu0 %v2099
    %2526 = vmatprep.subr.mxu0 0.0
    %2527 = vmatpush1.msra.mxu0 %v2100
    %2528 = vmatprep.subr.mxu0 0.0
    %2529 = vmatpush1.msra.mxu0 %v2101
    %2530 = vmatprep.subr.mxu0 0.0
    %2531 = vmatpush1.msra.mxu0 %v2102
    %2532 = vmatprep.subr.mxu0 0.0
    %2533 = vmatpush1.msra.mxu0 0.0
    %2534 = vmatprep.subr.mxu0 0.0
    %2535 = vmatpush1.msra.mxu0 0.0
    %2536 = vmatprep.subr.mxu0 0.0
    %2537 = vmatpush1.msra.mxu0 0.0
    %2538 = vmatprep.subr.mxu0 0.0
    %2539 = vmatpush1.msra.mxu0 0.0
    %2540 = vmatprep.subr.mxu0 0.0
    %2541 = vmatpush1.msra.mxu0 0.0
    %2542 = vmatprep.subr.mxu0 0.0
    %2543 = vmatpush1.msra.mxu0 0.0
    %2544 = vmatprep.subr.mxu0 0.0
    %2545 = vmatpush1.msra.mxu0 0.0
    %2546 = vmatprep.subr.mxu0 0.0
    %2547 = vmatpush1.msra.mxu0 0.0
    %2548 = vmatprep.subr.mxu0 0.0
    %2549 = vmatpush1.msra.mxu0 0.0
    %2550 = vmatprep.subr.mxu0 0.0
    %2551 = vmatpush1.msra.mxu0 0.0
    %2552 = vmatprep.subr.mxu0 0.0
    %2553 = vmatpush1.msra.mxu0 0.0
    %2554 = vmatprep.subr.mxu0 0.0
    %2555 = vmatpush1.msra.mxu0 0.0
    %2556 = vmatprep.subr.mxu0 0.0
    %2557 = vmatpush1.msra.mxu0 0.0
    %2558 = vmatprep.subr.mxu0 0.0
    %2559 = vmatpush1.msra.mxu0 0.0
    %2560 = vmatprep.subr.mxu0 0.0
    %2561 = vmatpush1.msra.mxu0 0.0
    %2562 = vmatprep.subr.mxu0 0.0
    %2563 = vmatpush1.msra.mxu0 0.0
    %2564 = vmatprep.subr.mxu0 0.0
    %2565 = vmatpush1.msra.mxu0 0.0
    %2566 = vmatprep.subr.mxu0 0.0
    %2567 = vmatpush1.msra.mxu0 0.0
    %2568 = vmatprep.subr.mxu0 0.0
    %2569 = vmatpush1.msra.mxu0 0.0
    %2570 = vmatprep.subr.mxu0 0.0
    %2571 = vmatpush1.msra.mxu0 0.0
    %2572 = vmatprep.subr.mxu0 0.0
    %2573 = vmatpush1.msra.mxu0 0.0
    %2574 = vmatprep.subr.mxu0 0.0
    %2575 = vmatpush1.msra.mxu0 0.0
    %2576 = vmatprep.subr.mxu0 0.0
    %2577 = vmatpush1.msra.mxu0 0.0
    %2578 = vmatprep.subr.mxu0 0.0
    %2579 = vmatpush1.msra.mxu0 0.0
    %2580 = vmatprep.subr.mxu0 0.0
    %2581 = vmatpush1.msra.mxu0 0.0
    %2582 = vmatprep.subr.mxu0 0.0
    %2583 = vmatpush1.msra.mxu0 0.0
    %2584 = vmatprep.subr.mxu0 0.0
    %2585 = vmatpush1.msra.mxu0 0.0
    %2586 = vmatprep.subr.mxu0 0.0
    %2587 = vmatpush1.msra.mxu0 0.0
    %2588 = vmatprep.mubr.f32.mxu0 0.0
    %2589 = vmatmul.mubr.f32.gmra.mrb[0].mxu0 %v2522
    %v2590 = vpop.f32.mrb[0].mxu0
    %v2591 = vadd.f32 0.0, %v2590
    %v2592 = vpop.f32.mrb[0].mxu0
    %2593 = vdwg.mxu0
    %v2594 = vadd.f32 %v2096, %v2591
    %v2595 = vxor.u32 %v2594, 2147483648
    %v2596 = vmul.f32 %v2595, 1.442695
    %v2597 = vpow.pop %v2596
    %v2598 = vadd.f32 %v2597, 1.0
    %v2599 = vrcp.pop %v2598
    %v2600 = vmul.f32 1.0, %v2599
    %v2601 = vtanh.pop %v2594
    %v2603 = vrot.slane %v2511, 6
    %v2605 = vmul.f32 %v2600, %v2603
    %2607 = vrot.lane.b32.xlu0 %v2601, 64
    %v2608 = vpop.permute.xlu0 %2607
    %v2610 = vmul.f32 %v2600, %v2608
    %2612 = vrot.lane.b32.xlu0 %v2610, 32
    %v2613 = vpop.permute.xlu0 %2612
    %v2615 = vadd.f32 %v2605, %v2613
    %v2616 = vtanh.pop %v2615
    %2618 = vrot.lane.b32.xlu0 %v2616, 64
    %v2619 = vpop.permute.xlu0 %2618
    %v2621 = vmul.f32 %v2600, %v2619
    %2623 = vrot.lane.b32.xlu0 %v2621, 32
    %v2624 = vpop.permute.xlu0 %2623
    %v2625 = vsel %vm163, %v2624, 0
    %2627 = vmatprep.subr.mxu0 0.0
    %2628 = vmatpush1.msra.mxu0 %v2099
    %2629 = vmatprep.subr.mxu0 0.0
    %2630 = vmatpush1.msra.mxu0 %v2100
    %2631 = vmatprep.subr.mxu0 0.0
    %2632 = vmatpush1.msra.mxu0 %v2101
    %2633 = vmatprep.subr.mxu0 0.0
    %2634 = vmatpush1.msra.mxu0 %v2102
    %2635 = vmatprep.subr.mxu0 0.0
    %2636 = vmatpush1.msra.mxu0 0.0
    %2637 = vmatprep.subr.mxu0 0.0
    %2638 = vmatpush1.msra.mxu0 0.0
    %2639 = vmatprep.subr.mxu0 0.0
    %2640 = vmatpush1.msra.mxu0 0.0
    %2641 = vmatprep.subr.mxu0 0.0
    %2642 = vmatpush1.msra.mxu0 0.0
    %2643 = vmatprep.subr.mxu0 0.0
    %2644 = vmatpush1.msra.mxu0 0.0
    %2645 = vmatprep.subr.mxu0 0.0
    %2646 = vmatpush1.msra.mxu0 0.0
    %2647 = vmatprep.subr.mxu0 0.0
    %2648 = vmatpush1.msra.mxu0 0.0
    %2649 = vmatprep.subr.mxu0 0.0
    %2650 = vmatpush1.msra.mxu0 0.0
    %2651 = vmatprep.subr.mxu0 0.0
    %2652 = vmatpush1.msra.mxu0 0.0
    %2653 = vmatprep.subr.mxu0 0.0
    %2654 = vmatpush1.msra.mxu0 0.0
    %2655 = vmatprep.subr.mxu0 0.0
    %2656 = vmatpush1.msra.mxu0 0.0
    %2657 = vmatprep.subr.mxu0 0.0
    %2658 = vmatpush1.msra.mxu0 0.0
    %2659 = vmatprep.subr.mxu0 0.0
    %2660 = vmatpush1.msra.mxu0 0.0
    %2661 = vmatprep.subr.mxu0 0.0
    %2662 = vmatpush1.msra.mxu0 0.0
    %2663 = vmatprep.subr.mxu0 0.0
    %2664 = vmatpush1.msra.mxu0 0.0
    %2665 = vmatprep.subr.mxu0 0.0
    %2666 = vmatpush1.msra.mxu0 0.0
    %2667 = vmatprep.subr.mxu0 0.0
    %2668 = vmatpush1.msra.mxu0 0.0
    %2669 = vmatprep.subr.mxu0 0.0
    %2670 = vmatpush1.msra.mxu0 0.0
    %2671 = vmatprep.subr.mxu0 0.0
    %2672 = vmatpush1.msra.mxu0 0.0
    %2673 = vmatprep.subr.mxu0 0.0
    %2674 = vmatpush1.msra.mxu0 0.0
    %2675 = vmatprep.subr.mxu0 0.0
    %2676 = vmatpush1.msra.mxu0 0.0
    %2677 = vmatprep.subr.mxu0 0.0
    %2678 = vmatpush1.msra.mxu0 0.0
    %2679 = vmatprep.subr.mxu0 0.0
    %2680 = vmatpush1.msra.mxu0 0.0
    %2681 = vmatprep.subr.mxu0 0.0
    %2682 = vmatpush1.msra.mxu0 0.0
    %2683 = vmatprep.subr.mxu0 0.0
    %2684 = vmatpush1.msra.mxu0 0.0
    %2685 = vmatprep.subr.mxu0 0.0
    %2686 = vmatpush1.msra.mxu0 0.0
    %2687 = vmatprep.subr.mxu0 0.0
    %2688 = vmatpush1.msra.mxu0 0.0
    %2689 = vmatprep.subr.mxu0 0.0
    %2690 = vmatpush1.msra.mxu0 0.0
    %2691 = vmatprep.mubr.f32.mxu0 0.0
    %2692 = vmatmul.mubr.f32.gmra.mrb[0].mxu0 %v2625
    %v2693 = vpop.f32.mrb[0].mxu0
    %v2694 = vadd.f32 0.0, %v2693
    %v2695 = vpop.f32.mrb[0].mxu0
    %2696 = vdwg.mxu0
    %v2698 = vrot.slane %v2694, 6
    %v2700 = vadd.f32 %v2096, %v2698
    %v2701 = vxor.u32 %v2700, 2147483648
    %v2702 = vmul.f32 %v2701, 1.442695
    %v2703 = vpow.pop %v2702
    %v2704 = vadd.f32 %v2703, 1.0
    %v2705 = vrcp.pop %v2704
    %v2706 = vmul.f32 1.0, %v2705
    %v2707 = vtanh.pop %v2700
    %v2709 = vrot.slane %v2615, 6
    %v2711 = vmul.f32 %v2706, %v2709
    %2713 = vrot.lane.b32.xlu0 %v2707, 64
    %v2714 = vpop.permute.xlu0 %2713
    %v2716 = vmul.f32 %v2706, %v2714
    %2718 = vrot.lane.b32.xlu0 %v2716, 32
    %v2719 = vpop.permute.xlu0 %2718
    %v2721 = vadd.f32 %v2711, %v2719
    %v2722 = vtanh.pop %v2721
    %2724 = vrot.lane.b32.xlu0 %v2722, 64
    %v2725 = vpop.permute.xlu0 %2724
    %v2727 = vmul.f32 %v2706, %v2725
    %v2729 = vrot.slane %v2727, 2
    %2730 = vrot.lane.b32.xlu0 %v2729, 32
    %v2731 = vpop.permute.xlu0 %2730
    %v2732 = vsel %vm163, %v2731, 0
    %2734 = vmatprep.subr.mxu0 0.0
    %2735 = vmatpush1.msra.mxu0 %v2099
    %2736 = vmatprep.subr.mxu0 0.0
    %2737 = vmatpush1.msra.mxu0 %v2100
    %2738 = vmatprep.subr.mxu0 0.0
    %2739 = vmatpush1.msra.mxu0 %v2101
    %2740 = vmatprep.subr.mxu0 0.0
    %2741 = vmatpush1.msra.mxu0 %v2102
    %2742 = vmatprep.subr.mxu0 0.0
    %2743 = vmatpush1.msra.mxu0 0.0
    %2744 = vmatprep.subr.mxu0 0.0
    %2745 = vmatpush1.msra.mxu0 0.0
    %2746 = vmatprep.subr.mxu0 0.0
    %2747 = vmatpush1.msra.mxu0 0.0
    %2748 = vmatprep.subr.mxu0 0.0
    %2749 = vmatpush1.msra.mxu0 0.0
    %2750 = vmatprep.subr.mxu0 0.0
    %2751 = vmatpush1.msra.mxu0 0.0
    %2752 = vmatprep.subr.mxu0 0.0
    %2753 = vmatpush1.msra.mxu0 0.0
    %2754 = vmatprep.subr.mxu0 0.0
    %2755 = vmatpush1.msra.mxu0 0.0
    %2756 = vmatprep.subr.mxu0 0.0
    %2757 = vmatpush1.msra.mxu0 0.0
    %2758 = vmatprep.subr.mxu0 0.0
    %2759 = vmatpush1.msra.mxu0 0.0
    %2760 = vmatprep.subr.mxu0 0.0
    %2761 = vmatpush1.msra.mxu0 0.0
    %2762 = vmatprep.subr.mxu0 0.0
    %2763 = vmatpush1.msra.mxu0 0.0
    %2764 = vmatprep.subr.mxu0 0.0
    %2765 = vmatpush1.msra.mxu0 0.0
    %2766 = vmatprep.subr.mxu0 0.0
    %2767 = vmatpush1.msra.mxu0 0.0
    %2768 = vmatprep.subr.mxu0 0.0
    %2769 = vmatpush1.msra.mxu0 0.0
    %2770 = vmatprep.subr.mxu0 0.0
    %2771 = vmatpush1.msra.mxu0 0.0
    %2772 = vmatprep.subr.mxu0 0.0
    %2773 = vmatpush1.msra.mxu0 0.0
    %2774 = vmatprep.subr.mxu0 0.0
    %2775 = vmatpush1.msra.mxu0 0.0
    %2776 = vmatprep.subr.mxu0 0.0
    %2777 = vmatpush1.msra.mxu0 0.0
    %2778 = vmatprep.subr.mxu0 0.0
    %2779 = vmatpush1.msra.mxu0 0.0
    %2780 = vmatprep.subr.mxu0 0.0
    %2781 = vmatpush1.msra.mxu0 0.0
    %2782 = vmatprep.subr.mxu0 0.0
    %2783 = vmatpush1.msra.mxu0 0.0
    %2784 = vmatprep.subr.mxu0 0.0
    %2785 = vmatpush1.msra.mxu0 0.0
    %2786 = vmatprep.subr.mxu0 0.0
    %2787 = vmatpush1.msra.mxu0 0.0
    %2788 = vmatprep.subr.mxu0 0.0
    %2789 = vmatpush1.msra.mxu0 0.0
    %2790 = vmatprep.subr.mxu0 0.0
    %2791 = vmatpush1.msra.mxu0 0.0
    %2792 = vmatprep.subr.mxu0 0.0
    %2793 = vmatpush1.msra.mxu0 0.0
    %2794 = vmatprep.subr.mxu0 0.0
    %2795 = vmatpush1.msra.mxu0 0.0
    %2796 = vmatprep.subr.mxu0 0.0
    %2797 = vmatpush1.msra.mxu0 0.0
    %2798 = vmatprep.mubr.f32.mxu0 0.0
    %2799 = vmatmul.mubr.f32.gmra.mrb[0].mxu0 %v2732
    %v2800 = vpop.f32.mrb[0].mxu0
    %v2801 = vadd.f32 0.0, %v2800
    %v2802 = vpop.f32.mrb[0].mxu0
    %2803 = vdwg.mxu0
    %v2805 = vrot.slane %v2801, 4
    %v2807 = vadd.f32 %v2096, %v2805
    %v2808 = vxor.u32 %v2807, 2147483648
    %v2809 = vmul.f32 %v2808, 1.442695
    %v2810 = vpow.pop %v2809
    %v2811 = vadd.f32 %v2810, 1.0
    %v2812 = vrcp.pop %v2811
    %v2813 = vmul.f32 1.0, %v2812
    %v2814 = vtanh.pop %v2807
    %v2816 = vrot.slane %v2721, 6
    %v2818 = vmul.f32 %v2813, %v2816
    %2820 = vrot.lane.b32.xlu0 %v2814, 64
    %v2821 = vpop.permute.xlu0 %2820
    %v2823 = vmul.f32 %v2813, %v2821
    %2825 = vrot.lane.b32.xlu0 %v2823, 32
    %v2826 = vpop.permute.xlu0 %2825
    %v2828 = vadd.f32 %v2818, %v2826
    %v2829 = vtanh.pop %v2828
    %2831 = vrot.lane.b32.xlu0 %v2829, 64
    %v2832 = vpop.permute.xlu0 %2831
    %v2834 = vmul.f32 %v2813, %v2832
    %v2836 = vrot.slane %v2834, 4
    %2837 = vrot.lane.b32.xlu0 %v2836, 32
    %v2838 = vpop.permute.xlu0 %2837
    %v2839 = vsel %vm163, %v2838, 0
    %2841 = vmatprep.subr.mxu0 0.0
    %2842 = vmatpush1.msra.mxu0 %v2099
    %2843 = vmatprep.subr.mxu0 0.0
    %2844 = vmatpush1.msra.mxu0 %v2100
    %2845 = vmatprep.subr.mxu0 0.0
    %2846 = vmatpush1.msra.mxu0 %v2101
    %2847 = vmatprep.subr.mxu0 0.0
    %2848 = vmatpush1.msra.mxu0 %v2102
    %2849 = vmatprep.subr.mxu0 0.0
    %2850 = vmatpush1.msra.mxu0 0.0
    %2851 = vmatprep.subr.mxu0 0.0
    %2852 = vmatpush1.msra.mxu0 0.0
    %2853 = vmatprep.subr.mxu0 0.0
    %2854 = vmatpush1.msra.mxu0 0.0
    %2855 = vmatprep.subr.mxu0 0.0
    %2856 = vmatpush1.msra.mxu0 0.0
    %2857 = vmatprep.subr.mxu0 0.0
    %2858 = vmatpush1.msra.mxu0 0.0
    %2859 = vmatprep.subr.mxu0 0.0
    %2860 = vmatpush1.msra.mxu0 0.0
    %2861 = vmatprep.subr.mxu0 0.0
    %2862 = vmatpush1.msra.mxu0 0.0
    %2863 = vmatprep.subr.mxu0 0.0
    %2864 = vmatpush1.msra.mxu0 0.0
    %2865 = vmatprep.subr.mxu0 0.0
    %2866 = vmatpush1.msra.mxu0 0.0
    %2867 = vmatprep.subr.mxu0 0.0
    %2868 = vmatpush1.msra.mxu0 0.0
    %2869 = vmatprep.subr.mxu0 0.0
    %2870 = vmatpush1.msra.mxu0 0.0
    %2871 = vmatprep.subr.mxu0 0.0
    %2872 = vmatpush1.msra.mxu0 0.0
    %2873 = vmatprep.subr.mxu0 0.0
    %2874 = vmatpush1.msra.mxu0 0.0
    %2875 = vmatprep.subr.mxu0 0.0
    %2876 = vmatpush1.msra.mxu0 0.0
    %2877 = vmatprep.subr.mxu0 0.0
    %2878 = vmatpush1.msra.mxu0 0.0
    %2879 = vmatprep.subr.mxu0 0.0
    %2880 = vmatpush1.msra.mxu0 0.0
    %2881 = vmatprep.subr.mxu0 0.0
    %2882 = vmatpush1.msra.mxu0 0.0
    %2883 = vmatprep.subr.mxu0 0.0
    %2884 = vmatpush1.msra.mxu0 0.0
    %2885 = vmatprep.subr.mxu0 0.0
    %2886 = vmatpush1.msra.mxu0 0.0
    %2887 = vmatprep.subr.mxu0 0.0
    %2888 = vmatpush1.msra.mxu0 0.0
    %2889 = vmatprep.subr.mxu0 0.0
    %2890 = vmatpush1.msra.mxu0 0.0
    %2891 = vmatprep.subr.mxu0 0.0
    %2892 = vmatpush1.msra.mxu0 0.0
    %2893 = vmatprep.subr.mxu0 0.0
    %2894 = vmatpush1.msra.mxu0 0.0
    %2895 = vmatprep.subr.mxu0 0.0
    %2896 = vmatpush1.msra.mxu0 0.0
    %2897 = vmatprep.subr.mxu0 0.0
    %2898 = vmatpush1.msra.mxu0 0.0
    %2899 = vmatprep.subr.mxu0 0.0
    %2900 = vmatpush1.msra.mxu0 0.0
    %2901 = vmatprep.subr.mxu0 0.0
    %2902 = vmatpush1.msra.mxu0 0.0
    %2903 = vmatprep.subr.mxu0 0.0
    %2904 = vmatpush1.msra.mxu0 0.0
    %2905 = vmatprep.mubr.f32.mxu0 0.0
    %2906 = vmatmul.mubr.f32.gmra.mrb[0].mxu0 %v2839
    %v2907 = vpop.f32.mrb[0].mxu0
    %v2908 = vadd.f32 0.0, %v2907
    %v2909 = vpop.f32.mrb[0].mxu0
    %2910 = vdwg.mxu0
    %v2912 = vrot.slane %v2908, 2
    %v2914 = vadd.f32 %v2096, %v2912
    %v2915 = vxor.u32 %v2914, 2147483648
    %v2916 = vmul.f32 %v2915, 1.442695
    %v2917 = vpow.pop %v2916
    %v2918 = vadd.f32 %v2917, 1.0
    %v2919 = vrcp.pop %v2918
    %v2920 = vmul.f32 1.0, %v2919
    %v2921 = vtanh.pop %v2914
    %v2923 = vrot.slane %v2828, 6
    %v2925 = vmul.f32 %v2920, %v2923
    %2927 = vrot.lane.b32.xlu0 %v2921, 64
    %v2928 = vpop.permute.xlu0 %2927
    %v2930 = vmul.f32 %v2920, %v2928
    %2932 = vrot.lane.b32.xlu0 %v2930, 32
    %v2933 = vpop.permute.xlu0 %2932
    %v2935 = vadd.f32 %v2925, %v2933
    %v2936 = vtanh.pop %v2935
    %2938 = vrot.lane.b32.xlu0 %v2936, 64
    %v2939 = vpop.permute.xlu0 %2938
    %v2941 = vmul.f32 %v2920, %v2939
    %v2942 = vld [vmem:[%s10] sm:$0xff]
    %v2943 = vld [vmem:[%s10 + $0x8] sm:$0xff]
    %v2944 = vld [vmem:[%s10 + $0x10] sm:$0xff]
    %v2945 = vld [vmem:[%s10 + $0x18] sm:$0xff]
    %v2946 = vld [vmem:[%s11] sm:$0x1]
    %v2948 = vlaneseq
    %v2949 = vshrl.u32 %v2948, 7
    %v2950 = vsub.s32 0, %v2949
    %v2951 = vrot.slane %v2946, %v2950
    %v2954 = vrot.slane %v2941, 6
    %2955 = vrot.lane.b32.xlu0 %v2954, 32
    %v2956 = vpop.permute.xlu0 %2955
    %v2957 = vsel %vm163, %v2956, 0
    %2959 = vmatprep.subr.mxu0 0.0
    %2960 = vmatpush1.msra.mxu0 %v2942
    %2961 = vmatprep.subr.mxu0 0.0
    %2962 = vmatpush1.msra.mxu0 %v2943
    %2963 = vmatprep.subr.mxu0 0.0
    %2964 = vmatpush1.msra.mxu0 %v2944
    %2965 = vmatprep.subr.mxu0 0.0
    %2966 = vmatpush1.msra.mxu0 %v2945
    %2967 = vmatprep.subr.mxu0 0.0
    %2968 = vmatpush1.msra.mxu0 0.0
    %2969 = vmatprep.subr.mxu0 0.0
    %2970 = vmatpush1.msra.mxu0 0.0
    %2971 = vmatprep.subr.mxu0 0.0
    %2972 = vmatpush1.msra.mxu0 0.0
    %2973 = vmatprep.subr.mxu0 0.0
    %2974 = vmatpush1.msra.mxu0 0.0
    %2975 = vmatprep.subr.mxu0 0.0
    %2976 = vmatpush1.msra.mxu0 0.0
    %2977 = vmatprep.subr.mxu0 0.0
    %2978 = vmatpush1.msra.mxu0 0.0
    %2979 = vmatprep.subr.mxu0 0.0
    %2980 = vmatpush1.msra.mxu0 0.0
    %2981 = vmatprep.subr.mxu0 0.0
    %2982 = vmatpush1.msra.mxu0 0.0
    %2983 = vmatprep.subr.mxu0 0.0
    %2984 = vmatpush1.msra.mxu0 0.0
    %2985 = vmatprep.subr.mxu0 0.0
    %2986 = vmatpush1.msra.mxu0 0.0
    %2987 = vmatprep.subr.mxu0 0.0
    %2988 = vmatpush1.msra.mxu0 0.0
    %2989 = vmatprep.subr.mxu0 0.0
    %2990 = vmatpush1.msra.mxu0 0.0
    %2991 = vmatprep.subr.mxu0 0.0
    %2992 = vmatpush1.msra.mxu0 0.0
    %2993 = vmatprep.subr.mxu0 0.0
    %2994 = vmatpush1.msra.mxu0 0.0
    %2995 = vmatprep.subr.mxu0 0.0
    %2996 = vmatpush1.msra.mxu0 0.0
    %2997 = vmatprep.subr.mxu0 0.0
    %2998 = vmatpush1.msra.mxu0 0.0
    %2999 = vmatprep.subr.mxu0 0.0
    %3000 = vmatpush1.msra.mxu0 0.0
    %3001 = vmatprep.subr.mxu0 0.0
    %3002 = vmatpush1.msra.mxu0 0.0
    %3003 = vmatprep.subr.mxu0 0.0
    %3004 = vmatpush1.msra.mxu0 0.0
    %3005 = vmatprep.subr.mxu0 0.0
    %3006 = vmatpush1.msra.mxu0 0.0
    %3007 = vmatprep.subr.mxu0 0.0
    %3008 = vmatpush1.msra.mxu0 0.0
    %3009 = vmatprep.subr.mxu0 0.0
    %3010 = vmatpush1.msra.mxu0 0.0
    %3011 = vmatprep.subr.mxu0 0.0
    %3012 = vmatpush1.msra.mxu0 0.0
    %3013 = vmatprep.subr.mxu0 0.0
    %3014 = vmatpush1.msra.mxu0 0.0
    %3015 = vmatprep.subr.mxu0 0.0
    %3016 = vmatpush1.msra.mxu0 0.0
    %3017 = vmatprep.subr.mxu0 0.0
    %3018 = vmatpush1.msra.mxu0 0.0
    %3019 = vmatprep.subr.mxu0 0.0
    %3020 = vmatpush1.msra.mxu0 0.0
    %3021 = vmatprep.subr.mxu0 0.0
    %3022 = vmatpush1.msra.mxu0 0.0
    %3023 = vmatprep.mubr.f32.mxu0 0.0
    %3024 = vmatmul.mubr.f32.gmra.mrb[0].mxu0 %v2957
    %v3025 = vpop.f32.mrb[0].mxu0
    %v3026 = vadd.f32 %v2951, %v3025
    %v3027 = vpop.f32.mrb[0].mxu0
    %3028 = vdwg.mxu0
    %v3029 = vld [vmem:[%s12] sm:$0xff]
    %v3030 = vld [vmem:[%s12 + $0x8] sm:$0xff]
    %v3031 = vld [vmem:[%s12 + $0x10] sm:$0xff]
    %v3032 = vld [vmem:[%s12 + $0x18] sm:$0xff]
    %v3033 = vld [vmem:[%s13] sm:$0x1]
    %v3035 = vlaneseq
    %v3036 = vshrl.u32 %v3035, 7
    %v3037 = vsub.s32 0, %v3036
    %v3038 = vrot.slane %v3033, %v3037
    %v3041 = vsel %vm163, %v3026, 0
    %3043 = vmatprep.subr.mxu0 0.0
    %3044 = vmatpush1.msra.mxu0 %v3029
    %3045 = vmatprep.subr.mxu0 0.0
    %3046 = vmatpush1.msra.mxu0 %v3030
    %3047 = vmatprep.subr.mxu0 0.0
    %3048 = vmatpush1.msra.mxu0 %v3031
    %3049 = vmatprep.subr.mxu0 0.0
    %3050 = vmatpush1.msra.mxu0 %v3032
    %3051 = vmatprep.subr.mxu0 0.0
    %3052 = vmatpush1.msra.mxu0 0.0
    %3053 = vmatprep.subr.mxu0 0.0
    %3054 = vmatpush1.msra.mxu0 0.0
    %3055 = vmatprep.subr.mxu0 0.0
    %3056 = vmatpush1.msra.mxu0 0.0
    %3057 = vmatprep.subr.mxu0 0.0
    %3058 = vmatpush1.msra.mxu0 0.0
    %3059 = vmatprep.subr.mxu0 0.0
    %3060 = vmatpush1.msra.mxu0 0.0
    %3061 = vmatprep.subr.mxu0 0.0
    %3062 = vmatpush1.msra.mxu0 0.0
    %3063 = vmatprep.subr.mxu0 0.0
    %3064 = vmatpush1.msra.mxu0 0.0
    %3065 = vmatprep.subr.mxu0 0.0
    %3066 = vmatpush1.msra.mxu0 0.0
    %3067 = vmatprep.subr.mxu0 0.0
    %3068 = vmatpush1.msra.mxu0 0.0
    %3069 = vmatprep.subr.mxu0 0.0
    %3070 = vmatpush1.msra.mxu0 0.0
    %3071 = vmatprep.subr.mxu0 0.0
    %3072 = vmatpush1.msra.mxu0 0.0
    %3073 = vmatprep.subr.mxu0 0.0
    %3074 = vmatpush1.msra.mxu0 0.0
    %3075 = vmatprep.subr.mxu0 0.0
    %3076 = vmatpush1.msra.mxu0 0.0
    %3077 = vmatprep.subr.mxu0 0.0
    %3078 = vmatpush1.msra.mxu0 0.0
    %3079 = vmatprep.subr.mxu0 0.0
    %3080 = vmatpush1.msra.mxu0 0.0
    %3081 = vmatprep.subr.mxu0 0.0
    %3082 = vmatpush1.msra.mxu0 0.0
    %3083 = vmatprep.subr.mxu0 0.0
    %3084 = vmatpush1.msra.mxu0 0.0
    %3085 = vmatprep.subr.mxu0 0.0
    %3086 = vmatpush1.msra.mxu0 0.0
    %3087 = vmatprep.subr.mxu0 0.0
    %3088 = vmatpush1.msra.mxu0 0.0
    %3089 = vmatprep.subr.mxu0 0.0
    %3090 = vmatpush1.msra.mxu0 0.0
    %3091 = vmatprep.subr.mxu0 0.0
    %3092 = vmatpush1.msra.mxu0 0.0
    %3093 = vmatprep.subr.mxu0 0.0
    %3094 = vmatpush1.msra.mxu0 0.0
    %3095 = vmatprep.subr.mxu0 0.0
    %3096 = vmatpush1.msra.mxu0 0.0
    %3097 = vmatprep.subr.mxu0 0.0
    %3098 = vmatpush1.msra.mxu0 0.0
    %3099 = vmatprep.subr.mxu0 0.0
    %3100 = vmatpush1.msra.mxu0 0.0
    %3101 = vmatprep.subr.mxu0 0.0
    %3102 = vmatpush1.msra.mxu0 0.0
    %3103 = vmatprep.subr.mxu0 0.0
    %3104 = vmatpush1.msra.mxu0 0.0
    %3105 = vmatprep.subr.mxu0 0.0
    %3106 = vmatpush1.msra.mxu0 0.0
    %3107 = vmatprep.mubr.f32.mxu0 0.0
    %3108 = vmatmul.mubr.f32.gmra.mrb[0].mxu0 %v3041
    %v3109 = vpop.f32.mrb[0].mxu0
    %v3110 = vadd.f32 %v3038, %v3109
    %v3111 = vpop.f32.mrb[0].mxu0
    %3112 = vdwg.mxu0
    %vm3113 = vcmask 17408
    %3114 = vst.msk [vmem:[#allocation6] sm:$0x3] %vm3113, %v3110
    %3116 = vrot.lane.b32.xlu0 %v3110, 125
    %v3117 = vpop.permute.xlu0 %3116
    %vm3119 = vcmask 41984
    %3120 = vst.msk [vmem:[#allocation7] sm:$0x3] %vm3119, %v3117
    // Predicated region
    $region62: #{lstmime_pallas.1} parent=1 // pred_check
      _
    $region63: #{lstmime_pallas.1} parent=1 // pred_check_branch
      %3122 = sbr.rel (0) target = $region65
    $region64: #{lstmime_pallas.1} parent=1 // pred_region
      %s3124 = ssub.s32 32, 32
      %3125 = vsyncadd [#allocation5], %s3124
      %s3127 = sshll.u32 [#allocation6], 4
      %s3128 = int_to_ptr.vmem [resolvable:$true] %s3127
      %3130 = dma.vmem_to_hbm [thread:$0]  %s3128, 32, %s14, [#allocation5]
    $region65: #{lstmime_pallas.1} parent=1 // pred_fallthru
      _
    // Predicated region
    $region66: #{lstmime_pallas.1} parent=1 // pred_check
      _
    $region67: #{lstmime_pallas.1} parent=1 // pred_check_branch
      %3132 = sbr.rel (0) target = $region69
    $region68: #{lstmime_pallas.1} parent=1 // pred_region
      %s3134 = ssub.s32 32, 32
      %3135 = vsyncadd [#allocation8], %s3134
      %s3137 = sshll.u32 [#allocation7], 4
      %s3138 = int_to_ptr.vmem [resolvable:$true] %s3137
      %3140 = dma.vmem_to_hbm [thread:$0]  %s3138, 32, %s15, [#allocation8]
    $region69: #{lstmime_pallas.1} parent=1 // pred_fallthru
      _
    // Predicated region
    $region70: #{lstmime_pallas.1} parent=1 // pred_check
      _
    $region71: #{lstmime_pallas.1} parent=1 // pred_check_branch
      %3142 = sbr.rel (0) target = $region73
    $region72: #{lstmime_pallas.1} parent=1 // pred_region
      %3143 = dma.done [#allocation5], 32
    $region73: #{lstmime_pallas.1} parent=1 // pred_fallthru
      _
    // Predicated region
    $region74: #{lstmime_pallas.1} parent=1 // pred_check
      _
    $region75: #{lstmime_pallas.1} parent=1 // pred_check_branch
      %3145 = sbr.rel (0) target = $region77
    $region76: #{lstmime_pallas.1} parent=1 // pred_region
      %3146 = dma.done [#allocation8], 32
    $region77: #{lstmime_pallas.1} parent=1 // pred_fallthru
      _
    %3147 = vsyncpa [#allocation4], 1
    %3148 = vsyncpa [#allocation5], 1
    %3149 = vsyncpa [#allocation8], 1

</llo_original>
